<compile_context>
chip_gen: v5e
topology: v5e:2x2
jax: 0.10.0
libtpu: 0.0.40
codegen_flags: <defaults>
</compile_context>

<pallas_src>
import jax
import jax.numpy as jnp
from jax.experimental import pallas as pl
from jax.experimental.pallas import tpu as pltpu

# ----------------------------- configuration --------------------------------
B = 2
H = W = 16
DIM = 32                      # channels
N_HEADS = 4
HEAD_CH = DIM // N_HEADS      # 8
SR = 2                        # sr_ratio
HK, WK = H // SR, W // SR     # 8, 8
HW = H * W                    # 256   (Nq)
NK = HK * WK                  # 64    (Nk)
SCALE = HEAD_CH ** (-0.5)
LN_EPS = 1e-5                 # nn.LayerNorm default
PATCH = SR * SR * DIM         # 128   (flattened k=s=2 conv patch)


# ------------------------------ fused Pallas kernel ---------------------------
def _fused_kernel(x_rows_ref, x_patch_ref,
                  wq_ref, bq_ref,
                  wds_ref, bds_ref, lng_ref, lnb_ref,
                  wkv_ref, bkv_ref,
                  woT_ref, bo_ref,
                  y_ref):
    f32 = jnp.float32
    bf16 = jnp.bfloat16

    x_rows = x_rows_ref[0]                     # (HW, C)  channels-last pixel rows
    x_patch = x_patch_ref[0]                   # (NK, SR*SR*C) non-overlapping patches

    # proj_q (1x1 conv) + scale -------------------------------------------------
    q = jnp.dot(x_rows.astype(bf16), wq_ref[...].astype(bf16),
                preferred_element_type=f32) + bq_ref[...]
    q = q * SCALE                              # (HW, C)

    # proj_ds: Conv2d(k=SR, s=SR) as a patch matmul, then LayerNorm over channels
    xds = jnp.dot(x_patch.astype(bf16), wds_ref[...].astype(bf16),
                  preferred_element_type=f32) + bds_ref[...]          # (NK, C)
    mu = jnp.mean(xds, axis=-1, keepdims=True)
    var = jnp.mean((xds - mu) ** 2, axis=-1, keepdims=True)
    xds = (xds - mu) * jax.lax.rsqrt(var + LN_EPS)
    xds = xds * lng_ref[...] + lnb_ref[...]

    # kv projection (1x1 conv; k and v fused into one 32->64 matmul) -------------
    kv = jnp.dot(xds.astype(bf16), wkv_ref[...].astype(bf16),
                 preferred_element_type=f32) + bkv_ref[...]           # (NK, 2C)
    k = kv[:, :DIM]
    v = kv[:, DIM:]

    woT = woT_ref[...].astype(bf16)            # (C_in, C_out), loaded once

    # per-head softmax attention, fused with proj_out (lane-dense accumulator) ---
    acc = jnp.zeros((HW, DIM), f32)
    for h in range(N_HEADS):                   # unrolled at trace time (4 heads)
        sl = slice(h * HEAD_CH, (h + 1) * HEAD_CH)
        qh = q[:, sl].astype(bf16)             # (HW, hd)
        kh = k[:, sl].astype(bf16)             # (NK, hd)
        vh = v[:, sl].astype(bf16)             # (NK, hd)
        logits = jax.lax.dot_general(          # (HW, NK) == qh @ kh.T
            qh, kh, (((1,), (1,)), ((), ())), preferred_element_type=f32)
        m = jnp.max(logits, axis=-1, keepdims=True)
        e = jnp.exp(logits - m)
        p = e * pl.reciprocal(jnp.sum(e, axis=-1, keepdims=True), approx=True)
        # (attn @ v_h) @ woT_h  ==  attn @ (v_h @ woT_h): keeps the big matmul output
        # 32 lanes wide instead of 8.
        vw = jnp.dot(vh, woT[sl, :], preferred_element_type=f32)      # (NK, C)
        acc = acc + jnp.dot(p.astype(bf16), vw.astype(bf16),
                            preferred_element_type=f32)               # (HW, C)

    y_ref[0] = acc + bo_ref[...]               # proj bias; single lane-dense store


# -------------------------------- wrapper -------------------------------------
def pyramid_attention_forward_pallas(x, p):
    Bn, C, Hn, Wn = x.shape
    assert (Bn, C, Hn, Wn) == (B, DIM, H, W)

    # layout plumbing only (XLA): NCHW -> channels-last rows + k=s=2 patches.
    x_nhwc = jnp.transpose(x, (0, 2, 3, 1))                         # (B, H, W, C)
    x_rows = x_nhwc.reshape(Bn, HW, C)
    x_patch = jnp.transpose(
        x_nhwc.reshape(Bn, HK, SR, WK, SR, C), (0, 1, 3, 2, 4, 5)
    ).reshape(Bn, NK, PATCH)

    wq_t = p["wq"].T                                                # (C, C)  in x out
    wds_mat = jnp.transpose(p["wds"], (2, 3, 1, 0)).reshape(PATCH, C)
    wkv_t = p["wkv"].T                                              # (C, 2C)
    wo_t = p["wo"].T                                                # (C, C)

    def row2(a):
        return a.reshape(1, -1)

    def full(shape):
        return pl.BlockSpec(shape, lambda b, _n=len(shape): (0,) * _n)

    y_rows = pl.pallas_call(
        _fused_kernel,
        out_shape=jax.ShapeDtypeStruct((Bn, HW, C), jnp.float32),
        grid_spec=pltpu.PrefetchScalarGridSpec(
            num_scalar_prefetch=0,
            grid=(Bn,),
            in_specs=[
                pl.BlockSpec((1, HW, C), lambda b: (b, 0, 0)),
                pl.BlockSpec((1, NK, PATCH), lambda b: (b, 0, 0)),
                full((C, C)), full((1, C)),
                full((PATCH, C)), full((1, C)), full((1, C)), full((1, C)),
                full((C, 2 * C)), full((1, 2 * C)),
                full((C, C)), full((1, C)),
            ],
            out_specs=pl.BlockSpec((1, HW, C), lambda b: (b, 0, 0)),
        ),
        compiler_params=pltpu.CompilerParams(
            dimension_semantics=("parallel",)),
    )(x_rows, x_patch,
      wq_t, row2(p["bq"]),
      wds_mat, row2(p["bds"]), row2(p["ln_g"]), row2(p["ln_b"]),
      wkv_t, row2(p["bkv"]),
      wo_t, row2(p["bo"]))

    y = jnp.transpose(y_rows.reshape(Bn, Hn, Wn, C), (0, 3, 1, 2))
    # nn.Dropout(p=0.0) on attn / proj is the identity.
    return y, None, None


# --------------------------- pure-JAX f32 reference ----------------------------
def pyramid_attention_forward_ref(x, p):
    Bn, C, Hn, Wn = x.shape
    hp = jax.lax.Precision.HIGHEST

    def conv1x1(t, w, b):
        return jnp.einsum("bchw,oc->bohw", t, w, precision=hp) + b[None, :, None, None]

    q = conv1x1(x, p["wq"], p["bq"])

    x_ds = jax.lax.conv_general_dilated(
        x, p["wds"], window_strides=(SR, SR), padding="VALID",
        dimension_numbers=("NCHW", "OIHW", "NCHW"), precision=hp,
    ) + p["bds"][None, :, None, None]
    o = jnp.transpose(x_ds, (0, 2, 3, 1))
    mu = jnp.mean(o, axis=-1, keepdims=True)
    var = jnp.mean((o - mu) ** 2, axis=-1, keepdims=True)
    o = (o - mu) / jnp.sqrt(var + LN_EPS) * p["ln_g"] + p["ln_b"]
    x_ds = jnp.transpose(o, (0, 3, 1, 2))

    kv = conv1x1(x_ds, p["wkv"], p["bkv"])
    k, v = kv[:, :C], kv[:, C:]

    qr = q.reshape(Bn * N_HEADS, HEAD_CH, HW) * SCALE
    kr = k.reshape(Bn * N_HEADS, HEAD_CH, NK)
    vr = v.reshape(Bn * N_HEADS, HEAD_CH, NK)
    attn = jnp.einsum("bcm,bcn->bmn", qr, kr, precision=hp)
    attn = jax.nn.softmax(attn, axis=2)
    out = jnp.einsum("bmn,bcn->bcm", attn, vr, precision=hp).reshape(Bn, C, Hn, Wn)
    return conv1x1(out, p["wo"], p["bo"])


# ------------------------------------ main --------------------------------------
if __name__ == "__main__":
    key = jax.random.PRNGKey(0)
    ks = jax.random.split(key, 11)
    params = {
        "wq":  jax.random.normal(ks[0], (DIM, DIM), jnp.float32) * 0.1,
        "bq":  jax.random.normal(ks[1], (DIM,), jnp.float32) * 0.02,
        "wkv": jax.random.normal(ks[2], (2 * DIM, DIM), jnp.float32) * 0.1,
        "bkv": jax.random.normal(ks[3], (2 * DIM,), jnp.float32) * 0.02,
        "wo":  jax.random.normal(ks[4], (DIM, DIM), jnp.float32) * 0.1,
        "bo":  jax.random.normal(ks[5], (DIM,), jnp.float32) * 0.02,
        "wds": jax.random.normal(ks[6], (DIM, DIM, SR, SR), jnp.float32) * 0.1,
        "bds": jax.random.normal(ks[7], (DIM,), jnp.float32) * 0.02,
        "ln_g": 1.0 + jax.random.normal(ks[8], (DIM,), jnp.float32) * 0.1,
        "ln_b": jax.random.normal(ks[9], (DIM,), jnp.float32) * 0.02,
    }
    x = jax.random.normal(ks[10], (B, DIM, H, W), jnp.float32)

    y, _, _ = pyramid_attention_forward_pallas(x, params)
    y = jax.block_until_ready(y)
    assert y.shape == (B, DIM, H, W)

    y_ref = jax.block_until_ready(pyramid_attention_forward_ref(x, params))
    max_err = float(jnp.max(jnp.abs(y - y_ref)))
    # bf16 MXU operands (f32 accumulation) in the kernel vs. the HIGHEST-precision
    # f32 reference: allow bf16-level discrepancy.
    assert max_err < 5e-2, f"kernel/reference mismatch: max abs err {max_err}"

    print("KERNEL_OK")
</pallas_src>

<mosaic_0001>
module attributes {stable_mosaic.version = 11 : i64} {
  func.func @_fused_kernel(%arg0: i32, %arg1: memref<1x256x32xf32, #tpu.memory_space<vmem>>, %arg2: memref<1x64x128xf32, #tpu.memory_space<vmem>>, %arg3: memref<32x32xf32, #tpu.memory_space<vmem>>, %arg4: memref<1x32xf32, #tpu.memory_space<vmem>>, %arg5: memref<128x32xf32, #tpu.memory_space<vmem>>, %arg6: memref<1x32xf32, #tpu.memory_space<vmem>>, %arg7: memref<1x32xf32, #tpu.memory_space<vmem>>, %arg8: memref<1x32xf32, #tpu.memory_space<vmem>>, %arg9: memref<32x64xf32, #tpu.memory_space<vmem>>, %arg10: memref<1x64xf32, #tpu.memory_space<vmem>>, %arg11: memref<32x32xf32, #tpu.memory_space<vmem>>, %arg12: memref<1x32xf32, #tpu.memory_space<vmem>>, %arg13: memref<1x256x32xf32, #tpu.memory_space<vmem>>) attributes {dimension_semantics = [#tpu.dimension_semantics<parallel>], iteration_bounds = array<i64: 2>, scalar_prefetch = 0 : i64, scratch_operands = 0 : i64, tpu.core_type = #tpu.core_type<tc>, window_params = [{transform_indices = @transform_0, window_bounds = array<i64: 1, 256, 32>}, {transform_indices = @transform_1, window_bounds = array<i64: 1, 64, 128>}, {pipeline_mode = #tpu.pipeline_mode<synchronous>, transform_indices = @transform_2, window_bounds = array<i64: 32, 32>}, {pipeline_mode = #tpu.pipeline_mode<synchronous>, transform_indices = @transform_3, window_bounds = array<i64: 1, 32>}, {pipeline_mode = #tpu.pipeline_mode<synchronous>, transform_indices = @transform_4, window_bounds = array<i64: 128, 32>}, {pipeline_mode = #tpu.pipeline_mode<synchronous>, transform_indices = @transform_5, window_bounds = array<i64: 1, 32>}, {pipeline_mode = #tpu.pipeline_mode<synchronous>, transform_indices = @transform_6, window_bounds = array<i64: 1, 32>}, {pipeline_mode = #tpu.pipeline_mode<synchronous>, transform_indices = @transform_7, window_bounds = array<i64: 1, 32>}, {pipeline_mode = #tpu.pipeline_mode<synchronous>, transform_indices = @transform_8, window_bounds = array<i64: 32, 64>}, {pipeline_mode = #tpu.pipeline_mode<synchronous>, transform_indices = @transform_9, window_bounds = array<i64: 1, 64>}, {pipeline_mode = #tpu.pipeline_mode<synchronous>, transform_indices = @transform_10, window_bounds = array<i64: 32, 32>}, {pipeline_mode = #tpu.pipeline_mode<synchronous>, transform_indices = @transform_11, window_bounds = array<i64: 1, 32>}, {transform_indices = @transform_12, window_bounds = array<i64: 1, 256, 32>}]} {
    %c0 = arith.constant 0 : index
    %c0_0 = arith.constant 0 : index
    %c0_1 = arith.constant 0 : index
    %0 = vector.load %arg1[%c0, %c0_0, %c0_1] : memref<1x256x32xf32, #tpu.memory_space<vmem>>, vector<1x256x32xf32>
    %1 = vector.shape_cast %0 : vector<1x256x32xf32> to vector<256x32xf32>
    %c0_2 = arith.constant 0 : index
    %c0_3 = arith.constant 0 : index
    %c0_4 = arith.constant 0 : index
    %2 = vector.load %arg2[%c0_2, %c0_3, %c0_4] : memref<1x64x128xf32, #tpu.memory_space<vmem>>, vector<1x64x128xf32>
    %3 = vector.shape_cast %2 : vector<1x64x128xf32> to vector<64x128xf32>
    %4 = arith.truncf %1 : vector<256x32xf32> to vector<256x32xbf16>
    %c0_5 = arith.constant 0 : index
    %c0_6 = arith.constant 0 : index
    %5 = vector.load %arg3[%c0_5, %c0_6] : memref<32x32xf32, #tpu.memory_space<vmem>>, vector<32x32xf32>
    %6 = arith.truncf %5 : vector<32x32xf32> to vector<32x32xbf16>
    %cst = arith.constant dense<0.000000e+00> : vector<256x32xf32>
    %7 = tpu.matmul %4, %6, %cst {dimension_numbers = #tpu.dot_dimension_numbers<[1], [0], [0], [1], [0, 0, 1, 1], [], []>} : vector<256x32xbf16>, vector<32x32xbf16>, vector<256x32xf32> -> vector<256x32xf32>
    %c0_7 = arith.constant 0 : index
    %c0_8 = arith.constant 0 : index
    %8 = vector.load %arg4[%c0_7, %c0_8] : memref<1x32xf32, #tpu.memory_space<vmem>>, vector<1x32xf32>
    %9 = vector.broadcast %8 : vector<1x32xf32> to vector<256x32xf32>
    %10 = arith.addf %7, %9 : vector<256x32xf32>
    %cst_9 = arith.constant 0.353553385 : f32
    %11 = vector.broadcast %cst_9 : f32 to vector<256x32xf32>
    %12 = arith.mulf %10, %11 : vector<256x32xf32>
    %13 = arith.truncf %3 : vector<64x128xf32> to vector<64x128xbf16>
    %c0_10 = arith.constant 0 : index
    %c0_11 = arith.constant 0 : index
    %14 = vector.load %arg5[%c0_10, %c0_11] : memref<128x32xf32, #tpu.memory_space<vmem>>, vector<128x32xf32>
    %15 = arith.truncf %14 : vector<128x32xf32> to vector<128x32xbf16>
    %cst_12 = arith.constant dense<0.000000e+00> : vector<64x32xf32>
    %16 = tpu.matmul %13, %15, %cst_12 {dimension_numbers = #tpu.dot_dimension_numbers<[1], [0], [0], [1], [0, 0, 1, 1], [], []>} : vector<64x128xbf16>, vector<128x32xbf16>, vector<64x32xf32> -> vector<64x32xf32>
    %c0_13 = arith.constant 0 : index
    %c0_14 = arith.constant 0 : index
    %17 = vector.load %arg6[%c0_13, %c0_14] : memref<1x32xf32, #tpu.memory_space<vmem>>, vector<1x32xf32>
    %18 = vector.broadcast %17 : vector<1x32xf32> to vector<64x32xf32>
    %19 = arith.addf %16, %18 : vector<64x32xf32>
    %cst_15 = arith.constant dense<0.000000e+00> : vector<64xf32>
    %20 = vector.multi_reduction <add>, %19, %cst_15 [1] : vector<64x32xf32> to vector<64xf32>
    %21 = vector.shape_cast %20 : vector<64xf32> to vector<64x1xf32>
    %cst_16 = arith.constant 3.200000e+01 : f32
    %22 = vector.broadcast %cst_16 : f32 to vector<64x1xf32>
    %23 = arith.divf %21, %22 : vector<64x1xf32>
    %24 = vector.broadcast %23 : vector<64x1xf32> to vector<64x32xf32>
    %25 = arith.subf %19, %24 : vector<64x32xf32>
    %26 = arith.mulf %25, %25 : vector<64x32xf32>
    %cst_17 = arith.constant dense<0.000000e+00> : vector<64xf32>
    %27 = vector.multi_reduction <add>, %26, %cst_17 [1] : vector<64x32xf32> to vector<64xf32>
    %28 = vector.shape_cast %27 : vector<64xf32> to vector<64x1xf32>
    %cst_18 = arith.constant 3.200000e+01 : f32
    %29 = vector.broadcast %cst_18 : f32 to vector<64x1xf32>
    %30 = arith.divf %28, %29 : vector<64x1xf32>
    %31 = vector.broadcast %23 : vector<64x1xf32> to vector<64x32xf32>
    %32 = arith.subf %19, %31 : vector<64x32xf32>
    %cst_19 = arith.constant 9.99999974E-6 : f32
    %33 = vector.broadcast %cst_19 : f32 to vector<64x1xf32>
    %34 = arith.addf %30, %33 : vector<64x1xf32>
    %35 = math.rsqrt %34 : vector<64x1xf32>
    %36 = vector.broadcast %35 : vector<64x1xf32> to vector<64x32xf32>
    %37 = arith.mulf %32, %36 : vector<64x32xf32>
    %c0_20 = arith.constant 0 : index
    %c0_21 = arith.constant 0 : index
    %38 = vector.load %arg7[%c0_20, %c0_21] : memref<1x32xf32, #tpu.memory_space<vmem>>, vector<1x32xf32>
    %39 = vector.broadcast %38 : vector<1x32xf32> to vector<64x32xf32>
    %40 = arith.mulf %37, %39 : vector<64x32xf32>
    %c0_22 = arith.constant 0 : index
    %c0_23 = arith.constant 0 : index
    %41 = vector.load %arg8[%c0_22, %c0_23] : memref<1x32xf32, #tpu.memory_space<vmem>>, vector<1x32xf32>
    %42 = vector.broadcast %41 : vector<1x32xf32> to vector<64x32xf32>
    %43 = arith.addf %40, %42 : vector<64x32xf32>
    %44 = arith.truncf %43 : vector<64x32xf32> to vector<64x32xbf16>
    %c0_24 = arith.constant 0 : index
    %c0_25 = arith.constant 0 : index
    %45 = vector.load %arg9[%c0_24, %c0_25] : memref<32x64xf32, #tpu.memory_space<vmem>>, vector<32x64xf32>
    %46 = arith.truncf %45 : vector<32x64xf32> to vector<32x64xbf16>
    %cst_26 = arith.constant dense<0.000000e+00> : vector<64x64xf32>
    %47 = tpu.matmul %44, %46, %cst_26 {dimension_numbers = #tpu.dot_dimension_numbers<[1], [0], [0], [1], [0, 0, 1, 1], [], []>} : vector<64x32xbf16>, vector<32x64xbf16>, vector<64x64xf32> -> vector<64x64xf32>
    %c0_27 = arith.constant 0 : index
    %c0_28 = arith.constant 0 : index
    %48 = vector.load %arg10[%c0_27, %c0_28] : memref<1x64xf32, #tpu.memory_space<vmem>>, vector<1x64xf32>
    %49 = vector.broadcast %48 : vector<1x64xf32> to vector<64x64xf32>
    %50 = arith.addf %47, %49 : vector<64x64xf32>
    %51 = vector.extract_strided_slice %50 {offsets = [0, 0], sizes = [64, 32], strides = [1, 1]} : vector<64x64xf32> to vector<64x32xf32>
    %52 = vector.extract_strided_slice %50 {offsets = [0, 32], sizes = [64, 32], strides = [1, 1]} : vector<64x64xf32> to vector<64x32xf32>
    %c0_29 = arith.constant 0 : index
    %c0_30 = arith.constant 0 : index
    %53 = vector.load %arg11[%c0_29, %c0_30] : memref<32x32xf32, #tpu.memory_space<vmem>>, vector<32x32xf32>
    %54 = arith.truncf %53 : vector<32x32xf32> to vector<32x32xbf16>
    %cst_31 = arith.constant 0.000000e+00 : f32
    %55 = vector.broadcast %cst_31 : f32 to vector<256x32xf32>
    %56 = vector.extract_strided_slice %12 {offsets = [0, 0], sizes = [256, 8], strides = [1, 1]} : vector<256x32xf32> to vector<256x8xf32>
    %57 = arith.truncf %56 : vector<256x8xf32> to vector<256x8xbf16>
    %58 = vector.extract_strided_slice %51 {offsets = [0, 0], sizes = [64, 8], strides = [1, 1]} : vector<64x32xf32> to vector<64x8xf32>
    %59 = arith.truncf %58 : vector<64x8xf32> to vector<64x8xbf16>
    %60 = vector.extract_strided_slice %52 {offsets = [0, 0], sizes = [64, 8], strides = [1, 1]} : vector<64x32xf32> to vector<64x8xf32>
    %61 = arith.truncf %60 : vector<64x8xf32> to vector<64x8xbf16>
    %cst_32 = arith.constant dense<0.000000e+00> : vector<256x64xf32>
    %62 = tpu.matmul %57, %59, %cst_32 {dimension_numbers = #tpu.dot_dimension_numbers<[1], [1], [0], [0], [0, 0, 1, 0], [], []>} : vector<256x8xbf16>, vector<64x8xbf16>, vector<256x64xf32> -> vector<256x64xf32>
    %cst_33 = arith.constant dense<0xFF800000> : vector<256xf32>
    %63 = vector.multi_reduction <maximumf>, %62, %cst_33 [1] : vector<256x64xf32> to vector<256xf32>
    %64 = vector.shape_cast %63 : vector<256xf32> to vector<256x1xf32>
    %65 = vector.broadcast %64 : vector<256x1xf32> to vector<256x64xf32>
    %66 = arith.subf %62, %65 : vector<256x64xf32>
    %67 = math.exp %66 : vector<256x64xf32>
    %cst_34 = arith.constant dense<0.000000e+00> : vector<256xf32>
    %68 = vector.multi_reduction <add>, %67, %cst_34 [1] : vector<256x64xf32> to vector<256xf32>
    %69 = vector.shape_cast %68 : vector<256xf32> to vector<256x1xf32>
    %70 = tpu.reciprocal %69 {approx = true} : vector<256x1xf32> -> vector<256x1xf32>
    %71 = vector.broadcast %70 : vector<256x1xf32> to vector<256x64xf32>
    %72 = arith.mulf %67, %71 : vector<256x64xf32>
    %73 = vector.extract_strided_slice %54 {offsets = [0, 0], sizes = [8, 32], strides = [1, 1]} : vector<32x32xbf16> to vector<8x32xbf16>
    %cst_35 = arith.constant dense<0.000000e+00> : vector<64x32xf32>
    %74 = tpu.matmul %61, %73, %cst_35 {dimension_numbers = #tpu.dot_dimension_numbers<[1], [0], [0], [1], [0, 0, 1, 1], [], []>} : vector<64x8xbf16>, vector<8x32xbf16>, vector<64x32xf32> -> vector<64x32xf32>
    %75 = arith.truncf %72 : vector<256x64xf32> to vector<256x64xbf16>
    %76 = arith.truncf %74 : vector<64x32xf32> to vector<64x32xbf16>
    %cst_36 = arith.constant dense<0.000000e+00> : vector<256x32xf32>
    %77 = tpu.matmul %75, %76, %cst_36 {dimension_numbers = #tpu.dot_dimension_numbers<[1], [0], [0], [1], [0, 0, 1, 1], [], []>} : vector<256x64xbf16>, vector<64x32xbf16>, vector<256x32xf32> -> vector<256x32xf32>
    %78 = arith.addf %55, %77 : vector<256x32xf32>
    %79 = vector.extract_strided_slice %12 {offsets = [0, 8], sizes = [256, 8], strides = [1, 1]} : vector<256x32xf32> to vector<256x8xf32>
    %80 = arith.truncf %79 : vector<256x8xf32> to vector<256x8xbf16>
    %81 = vector.extract_strided_slice %51 {offsets = [0, 8], sizes = [64, 8], strides = [1, 1]} : vector<64x32xf32> to vector<64x8xf32>
    %82 = arith.truncf %81 : vector<64x8xf32> to vector<64x8xbf16>
    %83 = vector.extract_strided_slice %52 {offsets = [0, 8], sizes = [64, 8], strides = [1, 1]} : vector<64x32xf32> to vector<64x8xf32>
    %84 = arith.truncf %83 : vector<64x8xf32> to vector<64x8xbf16>
    %cst_37 = arith.constant dense<0.000000e+00> : vector<256x64xf32>
    %85 = tpu.matmul %80, %82, %cst_37 {dimension_numbers = #tpu.dot_dimension_numbers<[1], [1], [0], [0], [0, 0, 1, 0], [], []>} : vector<256x8xbf16>, vector<64x8xbf16>, vector<256x64xf32> -> vector<256x64xf32>
    %cst_38 = arith.constant dense<0xFF800000> : vector<256xf32>
    %86 = vector.multi_reduction <maximumf>, %85, %cst_38 [1] : vector<256x64xf32> to vector<256xf32>
    %87 = vector.shape_cast %86 : vector<256xf32> to vector<256x1xf32>
    %88 = vector.broadcast %87 : vector<256x1xf32> to vector<256x64xf32>
    %89 = arith.subf %85, %88 : vector<256x64xf32>
    %90 = math.exp %89 : vector<256x64xf32>
    %cst_39 = arith.constant dense<0.000000e+00> : vector<256xf32>
    %91 = vector.multi_reduction <add>, %90, %cst_39 [1] : vector<256x64xf32> to vector<256xf32>
    %92 = vector.shape_cast %91 : vector<256xf32> to vector<256x1xf32>
    %93 = tpu.reciprocal %92 {approx = true} : vector<256x1xf32> -> vector<256x1xf32>
    %94 = vector.broadcast %93 : vector<256x1xf32> to vector<256x64xf32>
    %95 = arith.mulf %90, %94 : vector<256x64xf32>
    %96 = vector.extract_strided_slice %54 {offsets = [8, 0], sizes = [8, 32], strides = [1, 1]} : vector<32x32xbf16> to vector<8x32xbf16>
    %cst_40 = arith.constant dense<0.000000e+00> : vector<64x32xf32>
    %97 = tpu.matmul %84, %96, %cst_40 {dimension_numbers = #tpu.dot_dimension_numbers<[1], [0], [0], [1], [0, 0, 1, 1], [], []>} : vector<64x8xbf16>, vector<8x32xbf16>, vector<64x32xf32> -> vector<64x32xf32>
    %98 = arith.truncf %95 : vector<256x64xf32> to vector<256x64xbf16>
    %99 = arith.truncf %97 : vector<64x32xf32> to vector<64x32xbf16>
    %cst_41 = arith.constant dense<0.000000e+00> : vector<256x32xf32>
    %100 = tpu.matmul %98, %99, %cst_41 {dimension_numbers = #tpu.dot_dimension_numbers<[1], [0], [0], [1], [0, 0, 1, 1], [], []>} : vector<256x64xbf16>, vector<64x32xbf16>, vector<256x32xf32> -> vector<256x32xf32>
    %101 = arith.addf %78, %100 : vector<256x32xf32>
    %102 = vector.extract_strided_slice %12 {offsets = [0, 16], sizes = [256, 8], strides = [1, 1]} : vector<256x32xf32> to vector<256x8xf32>
    %103 = arith.truncf %102 : vector<256x8xf32> to vector<256x8xbf16>
    %104 = vector.extract_strided_slice %51 {offsets = [0, 16], sizes = [64, 8], strides = [1, 1]} : vector<64x32xf32> to vector<64x8xf32>
    %105 = arith.truncf %104 : vector<64x8xf32> to vector<64x8xbf16>
    %106 = vector.extract_strided_slice %52 {offsets = [0, 16], sizes = [64, 8], strides = [1, 1]} : vector<64x32xf32> to vector<64x8xf32>
    %107 = arith.truncf %106 : vector<64x8xf32> to vector<64x8xbf16>
    %cst_42 = arith.constant dense<0.000000e+00> : vector<256x64xf32>
    %108 = tpu.matmul %103, %105, %cst_42 {dimension_numbers = #tpu.dot_dimension_numbers<[1], [1], [0], [0], [0, 0, 1, 0], [], []>} : vector<256x8xbf16>, vector<64x8xbf16>, vector<256x64xf32> -> vector<256x64xf32>
    %cst_43 = arith.constant dense<0xFF800000> : vector<256xf32>
    %109 = vector.multi_reduction <maximumf>, %108, %cst_43 [1] : vector<256x64xf32> to vector<256xf32>
    %110 = vector.shape_cast %109 : vector<256xf32> to vector<256x1xf32>
    %111 = vector.broadcast %110 : vector<256x1xf32> to vector<256x64xf32>
    %112 = arith.subf %108, %111 : vector<256x64xf32>
    %113 = math.exp %112 : vector<256x64xf32>
    %cst_44 = arith.constant dense<0.000000e+00> : vector<256xf32>
    %114 = vector.multi_reduction <add>, %113, %cst_44 [1] : vector<256x64xf32> to vector<256xf32>
    %115 = vector.shape_cast %114 : vector<256xf32> to vector<256x1xf32>
    %116 = tpu.reciprocal %115 {approx = true} : vector<256x1xf32> -> vector<256x1xf32>
    %117 = vector.broadcast %116 : vector<256x1xf32> to vector<256x64xf32>
    %118 = arith.mulf %113, %117 : vector<256x64xf32>
    %119 = vector.extract_strided_slice %54 {offsets = [16, 0], sizes = [8, 32], strides = [1, 1]} : vector<32x32xbf16> to vector<8x32xbf16>
    %cst_45 = arith.constant dense<0.000000e+00> : vector<64x32xf32>
    %120 = tpu.matmul %107, %119, %cst_45 {dimension_numbers = #tpu.dot_dimension_numbers<[1], [0], [0], [1], [0, 0, 1, 1], [], []>} : vector<64x8xbf16>, vector<8x32xbf16>, vector<64x32xf32> -> vector<64x32xf32>
    %121 = arith.truncf %118 : vector<256x64xf32> to vector<256x64xbf16>
    %122 = arith.truncf %120 : vector<64x32xf32> to vector<64x32xbf16>
    %cst_46 = arith.constant dense<0.000000e+00> : vector<256x32xf32>
    %123 = tpu.matmul %121, %122, %cst_46 {dimension_numbers = #tpu.dot_dimension_numbers<[1], [0], [0], [1], [0, 0, 1, 1], [], []>} : vector<256x64xbf16>, vector<64x32xbf16>, vector<256x32xf32> -> vector<256x32xf32>
    %124 = arith.addf %101, %123 : vector<256x32xf32>
    %125 = vector.extract_strided_slice %12 {offsets = [0, 24], sizes = [256, 8], strides = [1, 1]} : vector<256x32xf32> to vector<256x8xf32>
    %126 = arith.truncf %125 : vector<256x8xf32> to vector<256x8xbf16>
    %127 = vector.extract_strided_slice %51 {offsets = [0, 24], sizes = [64, 8], strides = [1, 1]} : vector<64x32xf32> to vector<64x8xf32>
    %128 = arith.truncf %127 : vector<64x8xf32> to vector<64x8xbf16>
    %129 = vector.extract_strided_slice %52 {offsets = [0, 24], sizes = [64, 8], strides = [1, 1]} : vector<64x32xf32> to vector<64x8xf32>
    %130 = arith.truncf %129 : vector<64x8xf32> to vector<64x8xbf16>
    %cst_47 = arith.constant dense<0.000000e+00> : vector<256x64xf32>
    %131 = tpu.matmul %126, %128, %cst_47 {dimension_numbers = #tpu.dot_dimension_numbers<[1], [1], [0], [0], [0, 0, 1, 0], [], []>} : vector<256x8xbf16>, vector<64x8xbf16>, vector<256x64xf32> -> vector<256x64xf32>
    %cst_48 = arith.constant dense<0xFF800000> : vector<256xf32>
    %132 = vector.multi_reduction <maximumf>, %131, %cst_48 [1] : vector<256x64xf32> to vector<256xf32>
    %133 = vector.shape_cast %132 : vector<256xf32> to vector<256x1xf32>
    %134 = vector.broadcast %133 : vector<256x1xf32> to vector<256x64xf32>
    %135 = arith.subf %131, %134 : vector<256x64xf32>
    %136 = math.exp %135 : vector<256x64xf32>
    %cst_49 = arith.constant dense<0.000000e+00> : vector<256xf32>
    %137 = vector.multi_reduction <add>, %136, %cst_49 [1] : vector<256x64xf32> to vector<256xf32>
    %138 = vector.shape_cast %137 : vector<256xf32> to vector<256x1xf32>
    %139 = tpu.reciprocal %138 {approx = true} : vector<256x1xf32> -> vector<256x1xf32>
    %140 = vector.broadcast %139 : vector<256x1xf32> to vector<256x64xf32>
    %141 = arith.mulf %136, %140 : vector<256x64xf32>
    %142 = vector.extract_strided_slice %54 {offsets = [24, 0], sizes = [8, 32], strides = [1, 1]} : vector<32x32xbf16> to vector<8x32xbf16>
    %cst_50 = arith.constant dense<0.000000e+00> : vector<64x32xf32>
    %143 = tpu.matmul %130, %142, %cst_50 {dimension_numbers = #tpu.dot_dimension_numbers<[1], [0], [0], [1], [0, 0, 1, 1], [], []>} : vector<64x8xbf16>, vector<8x32xbf16>, vector<64x32xf32> -> vector<64x32xf32>
    %144 = arith.truncf %141 : vector<256x64xf32> to vector<256x64xbf16>
    %145 = arith.truncf %143 : vector<64x32xf32> to vector<64x32xbf16>
    %cst_51 = arith.constant dense<0.000000e+00> : vector<256x32xf32>
    %146 = tpu.matmul %144, %145, %cst_51 {dimension_numbers = #tpu.dot_dimension_numbers<[1], [0], [0], [1], [0, 0, 1, 1], [], []>} : vector<256x64xbf16>, vector<64x32xbf16>, vector<256x32xf32> -> vector<256x32xf32>
    %147 = arith.addf %124, %146 : vector<256x32xf32>
    %c0_52 = arith.constant 0 : index
    %c0_53 = arith.constant 0 : index
    %148 = vector.load %arg12[%c0_52, %c0_53] : memref<1x32xf32, #tpu.memory_space<vmem>>, vector<1x32xf32>
    %149 = vector.broadcast %148 : vector<1x32xf32> to vector<256x32xf32>
    %150 = arith.addf %147, %149 : vector<256x32xf32>
    %c0_54 = arith.constant 0 : index
    %c0_55 = arith.constant 0 : index
    %c0_56 = arith.constant 0 : index
    %151 = vector.load %arg13[%c0_54, %c0_55, %c0_56] : memref<1x256x32xf32, #tpu.memory_space<vmem>>, vector<1x256x32xf32>
    %152 = vector.shape_cast %151 : vector<1x256x32xf32> to vector<256x32xf32>
    %153 = vector.shape_cast %150 : vector<256x32xf32> to vector<1x256x32xf32>
    tpu.vector_store %arg13[%c0_54, %c0_55, %c0_56], %153 {strides = array<i32>} : memref<1x256x32xf32, #tpu.memory_space<vmem>>, vector<1x256x32xf32>,
    return
  }
  func.func @transform_0(%arg0: i32) -> (i32, i32, i32) {
    %c0_i32 = arith.constant 0 : i32
    %c0_i32_0 = arith.constant 0 : i32
    %c0_i32_1 = arith.constant 0 : i32
    return %arg0, %c0_i32, %c0_i32_0 : i32, i32, i32
  }
  func.func @transform_1(%arg0: i32) -> (i32, i32, i32) {
    %c0_i32 = arith.constant 0 : i32
    %c0_i32_0 = arith.constant 0 : i32
    %c0_i32_1 = arith.constant 0 : i32
    return %arg0, %c0_i32, %c0_i32_0 : i32, i32, i32
  }
  func.func @transform_2(%arg0: i32) -> (i32, i32) {
    %c0_i32 = arith.constant 0 : i32
    %c0_i32_0 = arith.constant 0 : i32
    %c0_i32_1 = arith.constant 0 : i32
    return %c0_i32, %c0_i32_0 : i32, i32
  }
  func.func @transform_3(%arg0: i32) -> (i32, i32) {
    %c0_i32 = arith.constant 0 : i32
    %c0_i32_0 = arith.constant 0 : i32
    %c0_i32_1 = arith.constant 0 : i32
    return %c0_i32, %c0_i32_0 : i32, i32
  }
  func.func @transform_4(%arg0: i32) -> (i32, i32) {
    %c0_i32 = arith.constant 0 : i32
    %c0_i32_0 = arith.constant 0 : i32
    %c0_i32_1 = arith.constant 0 : i32
    return %c0_i32, %c0_i32_0 : i32, i32
  }
  func.func @transform_5(%arg0: i32) -> (i32, i32) {
    %c0_i32 = arith.constant 0 : i32
    %c0_i32_0 = arith.constant 0 : i32
    %c0_i32_1 = arith.constant 0 : i32
    return %c0_i32, %c0_i32_0 : i32, i32
  }
  func.func @transform_6(%arg0: i32) -> (i32, i32) {
    %c0_i32 = arith.constant 0 : i32
    %c0_i32_0 = arith.constant 0 : i32
    %c0_i32_1 = arith.constant 0 : i32
    return %c0_i32, %c0_i32_0 : i32, i32
  }
  func.func @transform_7(%arg0: i32) -> (i32, i32) {
    %c0_i32 = arith.constant 0 : i32
    %c0_i32_0 = arith.constant 0 : i32
    %c0_i32_1 = arith.constant 0 : i32
    return %c0_i32, %c0_i32_0 : i32, i32
  }
  func.func @transform_8(%arg0: i32) -> (i32, i32) {
    %c0_i32 = arith.constant 0 : i32
    %c0_i32_0 = arith.constant 0 : i32
    %c0_i32_1 = arith.constant 0 : i32
    return %c0_i32, %c0_i32_0 : i32, i32
  }
  func.func @transform_9(%arg0: i32) -> (i32, i32) {
    %c0_i32 = arith.constant 0 : i32
    %c0_i32_0 = arith.constant 0 : i32
    %c0_i32_1 = arith.constant 0 : i32
    return %c0_i32, %c0_i32_0 : i32, i32
  }
  func.func @transform_10(%arg0: i32) -> (i32, i32) {
    %c0_i32 = arith.constant 0 : i32
    %c0_i32_0 = arith.constant 0 : i32
    %c0_i32_1 = arith.constant 0 : i32
    return %c0_i32, %c0_i32_0 : i32, i32
  }
  func.func @transform_11(%arg0: i32) -> (i32, i32) {
    %c0_i32 = arith.constant 0 : i32
    %c0_i32_0 = arith.constant 0 : i32
    %c0_i32_1 = arith.constant 0 : i32
    return %c0_i32, %c0_i32_0 : i32, i32
  }
  func.func @transform_12(%arg0: i32) -> (i32, i32, i32) {
    %c0_i32 = arith.constant 0 : i32
    %c0_i32_0 = arith.constant 0 : i32
    %c0_i32_1 = arith.constant 0 : i32
    return %arg0, %c0_i32, %c0_i32_0 : i32, i32, i32
  }
}

</mosaic_0001>

<llo_original>
// kernel: tpu_custom_call.1
$region0: #{tpu_custom_call.1}
  #allocation0 [shape = 'u32[]', space=smem, size = 0x4, offset = 0x4, fixed_abs, tag = 'smem constant byte address 0x4 - core index']
  #allocation1 [shape = 'u32[72,128]{1,0:T(1,128)}', space=vmem, size = 0x9000, scoped, tag = 'internal scratch']
  %s0 = inlined_call_operand.vmem [shape: f32[2,256,32], index: 0, kind: input, shape index: {}]
  %s1 = inlined_call_operand.vmem [shape: f32[2,64,128], index: 1, kind: input, shape index: {}]
  %s2 = inlined_call_operand.vmem [shape: f32[32,32], index: 2, kind: input, shape index: {}]
  %s3 = inlined_call_operand.vmem [shape: f32[1,32], index: 3, kind: input, shape index: {}]
  %s4 = inlined_call_operand.vmem [shape: f32[128,32], index: 4, kind: input, shape index: {}]
  %s5 = inlined_call_operand.vmem [shape: f32[1,32], index: 5, kind: input, shape index: {}]
  %s6 = inlined_call_operand.vmem [shape: f32[1,32], index: 6, kind: input, shape index: {}]
  %s7 = inlined_call_operand.vmem [shape: f32[1,32], index: 7, kind: input, shape index: {}]
  %s8 = inlined_call_operand.vmem [shape: f32[32,64], index: 8, kind: input, shape index: {}]
  %s9 = inlined_call_operand.vmem [shape: f32[1,64], index: 9, kind: input, shape index: {}]
  %s10 = inlined_call_operand.vmem [shape: f32[32,32], index: 10, kind: input, shape index: {}]
  %s11 = inlined_call_operand.vmem [shape: f32[1,32], index: 11, kind: input, shape index: {}]
  %s12 = inlined_call_operand.vmem [shape: f32[2,256,32], index: 12, kind: output, shape index: {}]
  %s13 = sld [smem:[#allocation0]]
  $region81: #{tpu_custom_call.1} parent=0
    _
  %s15 = ssub.s32 1, %s13
  %s16 = scalar_select 0, %s15, %s13
  loop: start=0, step=1, limit=4
  $region2: #{tpu_custom_call.1} parent=0 // loop_pre_header
    _
  $region3: #{tpu_custom_call.1} parent=0 // loop_header
    %s18 = sphi 0, %s22
    %p19 = scmp.ge.s32.totalorder %s18, 4
    %s28 = sphi 0, %s30
    %s31 = sphi 0, %s28
    %s32 = sphi 0, %s31
    %s48 = sphi 0, %s32
    %s54 = sphi 0, %s56
    %s57 = sphi 0, %s54
    %s58 = sphi 0, %s57
    %s74 = sphi 0, %s58
    %s78 = sphi 0, %s78
    %s80 = sphi 0, %s78
    %s81 = sphi 0, %s80
    %s95 = sphi 0, %s81
    %s99 = sphi 0, %s99
    %s101 = sphi 0, %s99
    %s102 = sphi 0, %s101
    %s116 = sphi 0, %s102
    %s120 = sphi 0, %s120
    %s122 = sphi 0, %s120
    %s123 = sphi 0, %s122
    %s137 = sphi 0, %s123
    %s141 = sphi 0, %s141
    %s143 = sphi 0, %s141
    %s144 = sphi 0, %s143
    %s158 = sphi 0, %s144
    %s162 = sphi 0, %s162
    %s164 = sphi 0, %s162
    %s165 = sphi 0, %s164
    %s179 = sphi 0, %s165
    %s183 = sphi 0, %s183
    %s185 = sphi 0, %s183
    %s186 = sphi 0, %s185
    %s200 = sphi 0, %s186
    %s204 = sphi 0, %s204
    %s206 = sphi 0, %s204
    %s207 = sphi 0, %s206
    %s221 = sphi 0, %s207
    %s225 = sphi 0, %s225
    %s227 = sphi 0, %s225
    %s228 = sphi 0, %s227
    %s242 = sphi 0, %s228
    %s246 = sphi 0, %s246
    %s248 = sphi 0, %s246
    %s249 = sphi 0, %s248
    %s263 = sphi 0, %s249
    %s267 = sphi 0, %s267
    %s269 = sphi 0, %s267
    %s270 = sphi 0, %s269
    %s284 = sphi 0, %s270
    %s290 = sphi 0, %s292
    %s293 = sphi 0, %s290
    %s294 = sphi 0, %s293
    %s310 = sphi 0, %s294
  $region4: #{tpu_custom_call.1} parent=0 // loop_header_branch
    %21 = sbr.rel (%p19) target = $region8
  $region5: #{tpu_custom_call.1} parent=0 // loop_body
    %s23 = ssub.s32 %s18, 1
    %s24 = ssub.s32 %s18, 2
    %s25 = sadd.s32 %s18, 1
    %s26 = ssub.s32 %s18, %s25
    %p27 = scmp.eq.s32.totalorder %s26, 0
    %s29 = sadd.s32 %s28, 1
    %s30 = scalar_select %p27, %s28, %s29
    %p33 = pneg %p27
    %p34 = scmp.eq.s32.totalorder %s18, 1
    %p35 = por %p33, %p34
    %p36 = scmp.ne.s32.totalorder %s28, %s31
    %p37 = scmp.eq.s32.totalorder %s18, 0
    %p38 = por %p36, %p37
    %p39 = scmp.ne.s32.totalorder %s28, %s31
    %p40 = scmp.eq.s32.totalorder %s23, 1
    %p41 = por %p39, %p40
    %p42 = scmp.ne.s32.totalorder %s31, %s32
    %p43 = scmp.eq.s32.totalorder %s23, 0
    %p44 = por %p42, %p43
    %p45 = scmp.ne.s32.totalorder %s31, %s32
    %p46 = scmp.eq.s32.totalorder %s24, 1
    %p47 = por %p45, %p46
    %p49 = scmp.ne.s32.totalorder %s32, %s48
    %p50 = scmp.eq.s32.totalorder %s24, 0
    %p51 = por %p49, %p50
    %s52 = ssub.s32 %s18, %s25
    %p53 = scmp.eq.s32.totalorder %s52, 0
    %s55 = sadd.s32 %s54, 1
    %s56 = scalar_select %p53, %s54, %s55
    %p59 = pneg %p53
    %p60 = scmp.eq.s32.totalorder %s18, 1
    %p61 = por %p59, %p60
    %p62 = scmp.ne.s32.totalorder %s54, %s57
    %p63 = scmp.eq.s32.totalorder %s18, 0
    %p64 = por %p62, %p63
    %p65 = scmp.ne.s32.totalorder %s54, %s57
    %p66 = scmp.eq.s32.totalorder %s23, 1
    %p67 = por %p65, %p66
    %p68 = scmp.ne.s32.totalorder %s57, %s58
    %p69 = scmp.eq.s32.totalorder %s23, 0
    %p70 = por %p68, %p69
    %p71 = scmp.ne.s32.totalorder %s57, %s58
    %p72 = scmp.eq.s32.totalorder %s24, 1
    %p73 = por %p71, %p72
    %p75 = scmp.ne.s32.totalorder %s58, %s74
    %p76 = scmp.eq.s32.totalorder %s24, 0
    %p77 = por %p75, %p76
    %s79 = sadd.s32 %s78, 1
    %p82 = scmp.eq.s32.totalorder %s18, 1
    %p83 = scmp.ne.s32.totalorder %s78, %s80
    %p84 = scmp.eq.s32.totalorder %s18, 0
    %p85 = por %p83, %p84
    %p86 = scmp.ne.s32.totalorder %s78, %s80
    %p87 = scmp.eq.s32.totalorder %s23, 1
    %p88 = por %p86, %p87
    %p89 = scmp.ne.s32.totalorder %s80, %s81
    %p90 = scmp.eq.s32.totalorder %s23, 0
    %p91 = por %p89, %p90
    %p92 = scmp.ne.s32.totalorder %s80, %s81
    %p93 = scmp.eq.s32.totalorder %s24, 1
    %p94 = por %p92, %p93
    %p96 = scmp.ne.s32.totalorder %s81, %s95
    %p97 = scmp.eq.s32.totalorder %s24, 0
    %p98 = por %p96, %p97
    %s100 = sadd.s32 %s99, 1
    %p103 = scmp.eq.s32.totalorder %s18, 1
    %p104 = scmp.ne.s32.totalorder %s99, %s101
    %p105 = scmp.eq.s32.totalorder %s18, 0
    %p106 = por %p104, %p105
    %p107 = scmp.ne.s32.totalorder %s99, %s101
    %p108 = scmp.eq.s32.totalorder %s23, 1
    %p109 = por %p107, %p108
    %p110 = scmp.ne.s32.totalorder %s101, %s102
    %p111 = scmp.eq.s32.totalorder %s23, 0
    %p112 = por %p110, %p111
    %p113 = scmp.ne.s32.totalorder %s101, %s102
    %p114 = scmp.eq.s32.totalorder %s24, 1
    %p115 = por %p113, %p114
    %p117 = scmp.ne.s32.totalorder %s102, %s116
    %p118 = scmp.eq.s32.totalorder %s24, 0
    %p119 = por %p117, %p118
    %s121 = sadd.s32 %s120, 1
    %p124 = scmp.eq.s32.totalorder %s18, 1
    %p125 = scmp.ne.s32.totalorder %s120, %s122
    %p126 = scmp.eq.s32.totalorder %s18, 0
    %p127 = por %p125, %p126
    %p128 = scmp.ne.s32.totalorder %s120, %s122
    %p129 = scmp.eq.s32.totalorder %s23, 1
    %p130 = por %p128, %p129
    %p131 = scmp.ne.s32.totalorder %s122, %s123
    %p132 = scmp.eq.s32.totalorder %s23, 0
    %p133 = por %p131, %p132
    %p134 = scmp.ne.s32.totalorder %s122, %s123
    %p135 = scmp.eq.s32.totalorder %s24, 1
    %p136 = por %p134, %p135
    %p138 = scmp.ne.s32.totalorder %s123, %s137
    %p139 = scmp.eq.s32.totalorder %s24, 0
    %p140 = por %p138, %p139
    %s142 = sadd.s32 %s141, 1
    %p145 = scmp.eq.s32.totalorder %s18, 1
    %p146 = scmp.ne.s32.totalorder %s141, %s143
    %p147 = scmp.eq.s32.totalorder %s18, 0
    %p148 = por %p146, %p147
    %p149 = scmp.ne.s32.totalorder %s141, %s143
    %p150 = scmp.eq.s32.totalorder %s23, 1
    %p151 = por %p149, %p150
    %p152 = scmp.ne.s32.totalorder %s143, %s144
    %p153 = scmp.eq.s32.totalorder %s23, 0
    %p154 = por %p152, %p153
    %p155 = scmp.ne.s32.totalorder %s143, %s144
    %p156 = scmp.eq.s32.totalorder %s24, 1
    %p157 = por %p155, %p156
    %p159 = scmp.ne.s32.totalorder %s144, %s158
    %p160 = scmp.eq.s32.totalorder %s24, 0
    %p161 = por %p159, %p160
    %s163 = sadd.s32 %s162, 1
    %p166 = scmp.eq.s32.totalorder %s18, 1
    %p167 = scmp.ne.s32.totalorder %s162, %s164
    %p168 = scmp.eq.s32.totalorder %s18, 0
    %p169 = por %p167, %p168
    %p170 = scmp.ne.s32.totalorder %s162, %s164
    %p171 = scmp.eq.s32.totalorder %s23, 1
    %p172 = por %p170, %p171
    %p173 = scmp.ne.s32.totalorder %s164, %s165
    %p174 = scmp.eq.s32.totalorder %s23, 0
    %p175 = por %p173, %p174
    %p176 = scmp.ne.s32.totalorder %s164, %s165
    %p177 = scmp.eq.s32.totalorder %s24, 1
    %p178 = por %p176, %p177
    %p180 = scmp.ne.s32.totalorder %s165, %s179
    %p181 = scmp.eq.s32.totalorder %s24, 0
    %p182 = por %p180, %p181
    %s184 = sadd.s32 %s183, 1
    %p187 = scmp.eq.s32.totalorder %s18, 1
    %p188 = scmp.ne.s32.totalorder %s183, %s185
    %p189 = scmp.eq.s32.totalorder %s18, 0
    %p190 = por %p188, %p189
    %p191 = scmp.ne.s32.totalorder %s183, %s185
    %p192 = scmp.eq.s32.totalorder %s23, 1
    %p193 = por %p191, %p192
    %p194 = scmp.ne.s32.totalorder %s185, %s186
    %p195 = scmp.eq.s32.totalorder %s23, 0
    %p196 = por %p194, %p195
    %p197 = scmp.ne.s32.totalorder %s185, %s186
    %p198 = scmp.eq.s32.totalorder %s24, 1
    %p199 = por %p197, %p198
    %p201 = scmp.ne.s32.totalorder %s186, %s200
    %p202 = scmp.eq.s32.totalorder %s24, 0
    %p203 = por %p201, %p202
    %s205 = sadd.s32 %s204, 1
    %p208 = scmp.eq.s32.totalorder %s18, 1
    %p209 = scmp.ne.s32.totalorder %s204, %s206
    %p210 = scmp.eq.s32.totalorder %s18, 0
    %p211 = por %p209, %p210
    %p212 = scmp.ne.s32.totalorder %s204, %s206
    %p213 = scmp.eq.s32.totalorder %s23, 1
    %p214 = por %p212, %p213
    %p215 = scmp.ne.s32.totalorder %s206, %s207
    %p216 = scmp.eq.s32.totalorder %s23, 0
    %p217 = por %p215, %p216
    %p218 = scmp.ne.s32.totalorder %s206, %s207
    %p219 = scmp.eq.s32.totalorder %s24, 1
    %p220 = por %p218, %p219
    %p222 = scmp.ne.s32.totalorder %s207, %s221
    %p223 = scmp.eq.s32.totalorder %s24, 0
    %p224 = por %p222, %p223
    %s226 = sadd.s32 %s225, 1
    %p229 = scmp.eq.s32.totalorder %s18, 1
    %p230 = scmp.ne.s32.totalorder %s225, %s227
    %p231 = scmp.eq.s32.totalorder %s18, 0
    %p232 = por %p230, %p231
    %p233 = scmp.ne.s32.totalorder %s225, %s227
    %p234 = scmp.eq.s32.totalorder %s23, 1
    %p235 = por %p233, %p234
    %p236 = scmp.ne.s32.totalorder %s227, %s228
    %p237 = scmp.eq.s32.totalorder %s23, 0
    %p238 = por %p236, %p237
    %p239 = scmp.ne.s32.totalorder %s227, %s228
    %p240 = scmp.eq.s32.totalorder %s24, 1
    %p241 = por %p239, %p240
    %p243 = scmp.ne.s32.totalorder %s228, %s242
    %p244 = scmp.eq.s32.totalorder %s24, 0
    %p245 = por %p243, %p244
    %s247 = sadd.s32 %s246, 1
    %p250 = scmp.eq.s32.totalorder %s18, 1
    %p251 = scmp.ne.s32.totalorder %s246, %s248
    %p252 = scmp.eq.s32.totalorder %s18, 0
    %p253 = por %p251, %p252
    %p254 = scmp.ne.s32.totalorder %s246, %s248
    %p255 = scmp.eq.s32.totalorder %s23, 1
    %p256 = por %p254, %p255
    %p257 = scmp.ne.s32.totalorder %s248, %s249
    %p258 = scmp.eq.s32.totalorder %s23, 0
    %p259 = por %p257, %p258
    %p260 = scmp.ne.s32.totalorder %s248, %s249
    %p261 = scmp.eq.s32.totalorder %s24, 1
    %p262 = por %p260, %p261
    %p264 = scmp.ne.s32.totalorder %s249, %s263
    %p265 = scmp.eq.s32.totalorder %s24, 0
    %p266 = por %p264, %p265
    %s268 = sadd.s32 %s267, 1
    %p271 = scmp.eq.s32.totalorder %s18, 1
    %p272 = scmp.ne.s32.totalorder %s267, %s269
    %p273 = scmp.eq.s32.totalorder %s18, 0
    %p274 = por %p272, %p273
    %p275 = scmp.ne.s32.totalorder %s267, %s269
    %p276 = scmp.eq.s32.totalorder %s23, 1
    %p277 = por %p275, %p276
    %p278 = scmp.ne.s32.totalorder %s269, %s270
    %p279 = scmp.eq.s32.totalorder %s23, 0
    %p280 = por %p278, %p279
    %p281 = scmp.ne.s32.totalorder %s269, %s270
    %p282 = scmp.eq.s32.totalorder %s24, 1
    %p283 = por %p281, %p282
    %p285 = scmp.ne.s32.totalorder %s270, %s284
    %p286 = scmp.eq.s32.totalorder %s24, 0
    %p287 = por %p285, %p286
    %s288 = ssub.s32 %s18, %s25
    %p289 = scmp.eq.s32.totalorder %s288, 0
    %s291 = sadd.s32 %s290, 1
    %s292 = scalar_select %p289, %s290, %s291
    %p295 = pneg %p289
    %p296 = scmp.eq.s32.totalorder %s18, 1
    %p297 = por %p295, %p296
    %p298 = scmp.ne.s32.totalorder %s290, %s293
    %p299 = scmp.eq.s32.totalorder %s18, 0
    %p300 = por %p298, %p299
    %p301 = scmp.ne.s32.totalorder %s290, %s293
    %p302 = scmp.eq.s32.totalorder %s23, 1
    %p303 = por %p301, %p302
    %p304 = scmp.ne.s32.totalorder %s293, %s294
    %p305 = scmp.eq.s32.totalorder %s23, 0
    %p306 = por %p304, %p305
    %p307 = scmp.ne.s32.totalorder %s293, %s294
    %p308 = scmp.eq.s32.totalorder %s24, 1
    %p309 = por %p307, %p308
    %p311 = scmp.ne.s32.totalorder %s294, %s310
    %p312 = scmp.eq.s32.totalorder %s24, 0
    %p313 = por %p311, %p312
    %p314 = scmp.le.s32.totalorder 1, %s18
    %p315 = scmp.lt.s32.totalorder %s18, 3
    %p316 = pnand %p314, %p315
    %p317 = pneg %p316
    // Predicated region
    $region9: #{tpu_custom_call.1} parent=5 // pred_check
      _
    $region10: #{tpu_custom_call.1} parent=5 // pred_check_branch
      %319 = sbr.rel (%p316) target = $region12
    $region11: #{tpu_custom_call.1} parent=5 // pred_region
      %s320 = ssub.s32 %s18, 1
      // Predicated region
      $region13: #{tpu_custom_call.1} parent=11 // pred_check
        %p321 = pneg %p91
      $region14: #{tpu_custom_call.1} parent=11 // pred_check_branch
        %323 = sbr.rel (%p321) target = $region16
      $region15: #{tpu_custom_call.1} parent=11 // pred_region
        _
      $region16: #{tpu_custom_call.1} parent=11 // pred_fallthru
        _
      // Predicated region
      $region17: #{tpu_custom_call.1} parent=11 // pred_check
        %p324 = pneg %p112
      $region18: #{tpu_custom_call.1} parent=11 // pred_check_branch
        %326 = sbr.rel (%p324) target = $region20
      $region19: #{tpu_custom_call.1} parent=11 // pred_region
        _
      $region20: #{tpu_custom_call.1} parent=11 // pred_fallthru
        _
      // Predicated region
      $region21: #{tpu_custom_call.1} parent=11 // pred_check
        %p327 = pneg %p133
      $region22: #{tpu_custom_call.1} parent=11 // pred_check_branch
        %329 = sbr.rel (%p327) target = $region24
      $region23: #{tpu_custom_call.1} parent=11 // pred_region
        _
      $region24: #{tpu_custom_call.1} parent=11 // pred_fallthru
        _
      // Predicated region
      $region25: #{tpu_custom_call.1} parent=11 // pred_check
        %p330 = pneg %p154
      $region26: #{tpu_custom_call.1} parent=11 // pred_check_branch
        %332 = sbr.rel (%p330) target = $region28
      $region27: #{tpu_custom_call.1} parent=11 // pred_region
        _
      $region28: #{tpu_custom_call.1} parent=11 // pred_fallthru
        _
      // Predicated region
      $region29: #{tpu_custom_call.1} parent=11 // pred_check
        %p333 = pneg %p175
      $region30: #{tpu_custom_call.1} parent=11 // pred_check_branch
        %335 = sbr.rel (%p333) target = $region32
      $region31: #{tpu_custom_call.1} parent=11 // pred_region
        _
      $region32: #{tpu_custom_call.1} parent=11 // pred_fallthru
        _
      // Predicated region
      $region33: #{tpu_custom_call.1} parent=11 // pred_check
        %p336 = pneg %p196
      $region34: #{tpu_custom_call.1} parent=11 // pred_check_branch
        %338 = sbr.rel (%p336) target = $region36
      $region35: #{tpu_custom_call.1} parent=11 // pred_region
        _
      $region36: #{tpu_custom_call.1} parent=11 // pred_fallthru
        _
      // Predicated region
      $region37: #{tpu_custom_call.1} parent=11 // pred_check
        %p339 = pneg %p217
      $region38: #{tpu_custom_call.1} parent=11 // pred_check_branch
        %341 = sbr.rel (%p339) target = $region40
      $region39: #{tpu_custom_call.1} parent=11 // pred_region
        _
      $region40: #{tpu_custom_call.1} parent=11 // pred_fallthru
        _
      // Predicated region
      $region41: #{tpu_custom_call.1} parent=11 // pred_check
        %p342 = pneg %p238
      $region42: #{tpu_custom_call.1} parent=11 // pred_check_branch
        %344 = sbr.rel (%p342) target = $region44
      $region43: #{tpu_custom_call.1} parent=11 // pred_region
        _
      $region44: #{tpu_custom_call.1} parent=11 // pred_fallthru
        _
      // Predicated region
      $region45: #{tpu_custom_call.1} parent=11 // pred_check
        %p345 = pneg %p259
      $region46: #{tpu_custom_call.1} parent=11 // pred_check_branch
        %347 = sbr.rel (%p345) target = $region48
      $region47: #{tpu_custom_call.1} parent=11 // pred_region
        _
      $region48: #{tpu_custom_call.1} parent=11 // pred_fallthru
        _
      // Predicated region
      $region49: #{tpu_custom_call.1} parent=11 // pred_check
        %p348 = pneg %p280
      $region50: #{tpu_custom_call.1} parent=11 // pred_check_branch
        %350 = sbr.rel (%p348) target = $region52
      $region51: #{tpu_custom_call.1} parent=11 // pred_region
        _
      $region52: #{tpu_custom_call.1} parent=11 // pred_fallthru
        _
    $region12: #{tpu_custom_call.1} parent=5 // pred_fallthru
      _
    %p351 = scmp.lt.s32.totalorder %s18, 2
    // Predicated region
    $region53: #{tpu_custom_call.1} parent=5 // pred_check
      %p352 = pneg %p351
    $region54: #{tpu_custom_call.1} parent=5 // pred_check_branch
      %354 = sbr.rel (%p352) target = $region56
    $region55: #{tpu_custom_call.1} parent=5 // pred_region
      // Predicated region
      $region57: #{tpu_custom_call.1} parent=55 // pred_check
        %p355 = pneg %p38
      $region58: #{tpu_custom_call.1} parent=55 // pred_check_branch
        %357 = sbr.rel (%p355) target = $region60
      $region59: #{tpu_custom_call.1} parent=55 // pred_region
        %p358 = scmp.lt.s32.totalorder %s18, 1
        %s359 = scalar_select %p358, %s18, 1
        %s360 = smul.addr %s359, 32
        %s361 = smul.addr %s360, 8
        %s362 = scalar_lea.vmem %s0, %s361
      $region60: #{tpu_custom_call.1} parent=55 // pred_fallthru
        _
      // Predicated region
      $region61: #{tpu_custom_call.1} parent=55 // pred_check
        %p363 = pneg %p64
      $region62: #{tpu_custom_call.1} parent=55 // pred_check_branch
        %365 = sbr.rel (%p363) target = $region64
      $region63: #{tpu_custom_call.1} parent=55 // pred_region
        %p366 = scmp.lt.s32.totalorder %s18, 1
        %s367 = scalar_select %p366, %s18, 1
        %s368 = smul.addr %s367, 8
        %s369 = smul.addr %s368, 8
        %s370 = scalar_lea.vmem %s1, %s369
      $region64: #{tpu_custom_call.1} parent=55 // pred_fallthru
        _
    $region56: #{tpu_custom_call.1} parent=5 // pred_fallthru
      _
    %p371 = scmp.le.s32.totalorder 1, %s18
    %p372 = scmp.lt.s32.totalorder %s18, 3
    %p373 = pnand %p371, %p372
    %p374 = pneg %p373
    // Predicated region
    $region65: #{tpu_custom_call.1} parent=5 // pred_check
      _
    $region66: #{tpu_custom_call.1} parent=5 // pred_check_branch
      %376 = sbr.rel (%p373) target = $region68
    $region67: #{tpu_custom_call.1} parent=5 // pred_region
      %s377 = ssub.s32 %s18, 1
      %p378 = scmp.lt.s32.totalorder %s23, 1
      %s379 = scalar_select %p378, %s23, 1
      %s380 = smul.addr %s379, 32
      %s381 = smul.addr %s380, 8
      %s382 = scalar_lea.vmem %s0, %s381
      %p383 = pneg %p44
      %p384 = pneg %p41
      %p385 = scmp.lt.s32.totalorder %s23, 1
      %s386 = scalar_select %p385, %s23, 1
      %s387 = smul.addr %s386, 8
      %s388 = smul.addr %s387, 8
      %s389 = scalar_lea.vmem %s1, %s388
      %p390 = pneg %p70
      %p391 = pneg %p67
      %p392 = pneg %p91
      %p393 = pneg %p88
      %p394 = pneg %p112
      %p395 = pneg %p109
      %p396 = pneg %p133
      %p397 = pneg %p130
      %p398 = pneg %p154
      %p399 = pneg %p151
      %p400 = pneg %p175
      %p401 = pneg %p172
      %p402 = pneg %p196
      %p403 = pneg %p193
      %p404 = pneg %p217
      %p405 = pneg %p214
      %p406 = pneg %p238
      %p407 = pneg %p235
      %p408 = pneg %p259
      %p409 = pneg %p256
      %p410 = pneg %p280
      %p411 = pneg %p277
      %p412 = pneg %p306
      %p413 = pneg %p303
      %p414 = scmp.lt.s32.totalorder %s23, 1
      %s415 = scalar_select %p414, %s23, 1
      %s416 = smul.addr %s415, 32
      %s417 = smul.addr %s416, 8
      %s418 = scalar_lea.vmem %s12, %s417
      %p419 = scmp.lt.s32.totalorder %s23, 1
      %s420 = scalar_select %p419, %s23, 1
      %s421 = smul.addr %s420, 32
      %s422 = smul.addr %s421, 8
      %s423 = scalar_lea.vmem %s0, %s422
      %p424 = scmp.lt.s32.totalorder %s23, 1
      %s425 = scalar_select %p424, %s23, 1
      %s426 = smul.addr %s425, 8
      %s427 = smul.addr %s426, 8
      %s428 = scalar_lea.vmem %s1, %s427
      %p429 = scmp.lt.s32.totalorder %s23, 1
      %s430 = scalar_select %p429, %s23, 1
      %s431 = smul.addr %s430, 32
      %s432 = smul.addr %s431, 8
      %s433 = scalar_lea.vmem %s12, %s432
      %v435 = vld [vmem:[%s423] sm:$0xff]
      %v436 = vld [vmem:[%s423 + $0x8] sm:$0xff]
      %v437 = vld [vmem:[%s423 + $0x10] sm:$0xff]
      %v438 = vld [vmem:[%s423 + $0x18] sm:$0xff]
      %v439 = vld [vmem:[%s423 + $0x20] sm:$0xff]
      %v440 = vld [vmem:[%s423 + $0x28] sm:$0xff]
      %v441 = vld [vmem:[%s423 + $0x30] sm:$0xff]
      %v442 = vld [vmem:[%s423 + $0x38] sm:$0xff]
      %v443 = vld [vmem:[%s423 + $0x40] sm:$0xff]
      %v444 = vld [vmem:[%s423 + $0x48] sm:$0xff]
      %v445 = vld [vmem:[%s423 + $0x50] sm:$0xff]
      %v446 = vld [vmem:[%s423 + $0x58] sm:$0xff]
      %v447 = vld [vmem:[%s423 + $0x60] sm:$0xff]
      %v448 = vld [vmem:[%s423 + $0x68] sm:$0xff]
      %v449 = vld [vmem:[%s423 + $0x70] sm:$0xff]
      %v450 = vld [vmem:[%s423 + $0x78] sm:$0xff]
      %v451 = vld [vmem:[%s423 + $0x80] sm:$0xff]
      %v452 = vld [vmem:[%s423 + $0x88] sm:$0xff]
      %v453 = vld [vmem:[%s423 + $0x90] sm:$0xff]
      %v454 = vld [vmem:[%s423 + $0x98] sm:$0xff]
      %v455 = vld [vmem:[%s423 + $0xa0] sm:$0xff]
      %v456 = vld [vmem:[%s423 + $0xa8] sm:$0xff]
      %v457 = vld [vmem:[%s423 + $0xb0] sm:$0xff]
      %v458 = vld [vmem:[%s423 + $0xb8] sm:$0xff]
      %v459 = vld [vmem:[%s423 + $0xc0] sm:$0xff]
      %v460 = vld [vmem:[%s423 + $0xc8] sm:$0xff]
      %v461 = vld [vmem:[%s423 + $0xd0] sm:$0xff]
      %v462 = vld [vmem:[%s423 + $0xd8] sm:$0xff]
      %v463 = vld [vmem:[%s423 + $0xe0] sm:$0xff]
      %v464 = vld [vmem:[%s423 + $0xe8] sm:$0xff]
      %v465 = vld [vmem:[%s423 + $0xf0] sm:$0xff]
      %v466 = vld [vmem:[%s423 + $0xf8] sm:$0xff]
      %v467 = vld [vmem:[%s428] sm:$0xff]
      %v468 = vld [vmem:[%s428 + $0x8] sm:$0xff]
      %v469 = vld [vmem:[%s428 + $0x10] sm:$0xff]
      %v470 = vld [vmem:[%s428 + $0x18] sm:$0xff]
      %v471 = vld [vmem:[%s428 + $0x20] sm:$0xff]
      %v472 = vld [vmem:[%s428 + $0x28] sm:$0xff]
      %v473 = vld [vmem:[%s428 + $0x30] sm:$0xff]
      %v474 = vld [vmem:[%s428 + $0x38] sm:$0xff]
      %v475 = vpack.c.bf16 %v436, %v435
      %v476 = vpack.c.bf16 %v438, %v437
      %v477 = vpack.c.bf16 %v440, %v439
      %v478 = vpack.c.bf16 %v442, %v441
      %v479 = vpack.c.bf16 %v444, %v443
      %v480 = vpack.c.bf16 %v446, %v445
      %v481 = vpack.c.bf16 %v448, %v447
      %v482 = vpack.c.bf16 %v450, %v449
      %v483 = vpack.c.bf16 %v452, %v451
      %v484 = vpack.c.bf16 %v454, %v453
      %v485 = vpack.c.bf16 %v456, %v455
      %v486 = vpack.c.bf16 %v458, %v457
      %v487 = vpack.c.bf16 %v460, %v459
      %v488 = vpack.c.bf16 %v462, %v461
      %v489 = vpack.c.bf16 %v464, %v463
      %v490 = vpack.c.bf16 %v466, %v465
      %v491 = vld [vmem:[%s2] sm:$0xff]
      %v492 = vld [vmem:[%s2 + $0x8] sm:$0xff]
      %v493 = vld [vmem:[%s2 + $0x10] sm:$0xff]
      %v494 = vld [vmem:[%s2 + $0x18] sm:$0xff]
      %v495 = vpack.c.bf16 %v492, %v491
      %v496 = vpack.c.bf16 %v494, %v493
      %v497 = vld [vmem:[%s3] sm:$0x1]
      %v499 = vperm.slane %v497, 0
      %vm501 = vcmask 261120
      %v503 = vsel %vm501, %v475, 0
      %v506 = vsel %vm501, %v476, 0
      %v509 = vsel %vm501, %v477, 0
      %v512 = vsel %vm501, %v478, 0
      %v515 = vsel %vm501, %v479, 0
      %v518 = vsel %vm501, %v480, 0
      %v521 = vsel %vm501, %v481, 0
      %v524 = vsel %vm501, %v482, 0
      %v527 = vsel %vm501, %v483, 0
      %v530 = vsel %vm501, %v484, 0
      %v533 = vsel %vm501, %v485, 0
      %v536 = vsel %vm501, %v486, 0
      %v539 = vsel %vm501, %v487, 0
      %v542 = vsel %vm501, %v488, 0
      %v545 = vsel %vm501, %v489, 0
      %v548 = vsel %vm501, %v490, 0
      %550 = vmatpush.bf16.msra.mxu0 0
      %551 = vmatpush.bf16.msra.mxu0 0
      %552 = vmatpush.bf16.msra.mxu0 0
      %553 = vmatpush.bf16.msra.mxu0 0
      %554 = vmatpush.bf16.msra.mxu0 0
      %555 = vmatpush.bf16.msra.mxu0 0
      %556 = vmatpush.bf16.msra.mxu0 %v496
      %557 = vmatpush.bf16.msra.mxu0 %v495
      %558 = vmatmul.bf16.gmra.mxu0 %v503
      %v559 = vpop.f32.mrf.mxu0
      %v560 = vadd.f32 %v499, %v559
      %v561 = vpop.f32.mrf.mxu0
      %v562 = vadd.f32 %v499, %v561
      %563 = vmatmul.bf16.gmra.mxu0 %v506
      %v564 = vpop.f32.mrf.mxu0
      %v565 = vadd.f32 %v499, %v564
      %v566 = vpop.f32.mrf.mxu0
      %v567 = vadd.f32 %v499, %v566
      %568 = vmatmul.bf16.gmra.mxu0 %v509
      %v569 = vpop.f32.mrf.mxu0
      %v570 = vadd.f32 %v499, %v569
      %v571 = vpop.f32.mrf.mxu0
      %v572 = vadd.f32 %v499, %v571
      %573 = vmatmul.bf16.gmra.mxu0 %v512
      %v574 = vpop.f32.mrf.mxu0
      %v575 = vadd.f32 %v499, %v574
      %v576 = vpop.f32.mrf.mxu0
      %v577 = vadd.f32 %v499, %v576
      %578 = vmatmul.bf16.gmra.mxu0 %v515
      %v579 = vpop.f32.mrf.mxu0
      %v580 = vadd.f32 %v499, %v579
      %v581 = vpop.f32.mrf.mxu0
      %v582 = vadd.f32 %v499, %v581
      %583 = vmatmul.bf16.gmra.mxu0 %v518
      %v584 = vpop.f32.mrf.mxu0
      %v585 = vadd.f32 %v499, %v584
      %v586 = vpop.f32.mrf.mxu0
      %v587 = vadd.f32 %v499, %v586
      %588 = vmatmul.bf16.gmra.mxu0 %v521
      %v589 = vpop.f32.mrf.mxu0
      %v590 = vadd.f32 %v499, %v589
      %v591 = vpop.f32.mrf.mxu0
      %v592 = vadd.f32 %v499, %v591
      %593 = vmatmul.bf16.gmra.mxu0 %v524
      %v594 = vpop.f32.mrf.mxu0
      %v595 = vadd.f32 %v499, %v594
      %v596 = vpop.f32.mrf.mxu0
      %v597 = vadd.f32 %v499, %v596
      %598 = vmatmul.bf16.gmra.mxu0 %v527
      %v599 = vpop.f32.mrf.mxu0
      %v600 = vadd.f32 %v499, %v599
      %v601 = vpop.f32.mrf.mxu0
      %v602 = vadd.f32 %v499, %v601
      %603 = vmatmul.bf16.gmra.mxu0 %v530
      %v604 = vpop.f32.mrf.mxu0
      %v605 = vadd.f32 %v499, %v604
      %v606 = vpop.f32.mrf.mxu0
      %v607 = vadd.f32 %v499, %v606
      %608 = vmatmul.bf16.gmra.mxu0 %v533
      %v609 = vpop.f32.mrf.mxu0
      %v610 = vadd.f32 %v499, %v609
      %v611 = vpop.f32.mrf.mxu0
      %v612 = vadd.f32 %v499, %v611
      %613 = vmatmul.bf16.gmra.mxu0 %v536
      %v614 = vpop.f32.mrf.mxu0
      %v615 = vadd.f32 %v499, %v614
      %v616 = vpop.f32.mrf.mxu0
      %v617 = vadd.f32 %v499, %v616
      %618 = vmatmul.bf16.gmra.mxu0 %v539
      %v619 = vpop.f32.mrf.mxu0
      %v620 = vadd.f32 %v499, %v619
      %v621 = vpop.f32.mrf.mxu0
      %v622 = vadd.f32 %v499, %v621
      %623 = vmatmul.bf16.gmra.mxu0 %v542
      %v624 = vpop.f32.mrf.mxu0
      %v625 = vadd.f32 %v499, %v624
      %v626 = vpop.f32.mrf.mxu0
      %v627 = vadd.f32 %v499, %v626
      %628 = vmatmul.bf16.gmra.mxu0 %v545
      %v629 = vpop.f32.mrf.mxu0
      %v630 = vadd.f32 %v499, %v629
      %v631 = vpop.f32.mrf.mxu0
      %v632 = vadd.f32 %v499, %v631
      %633 = vmatmul.bf16.gmra.mxu0 %v548
      %v634 = vpop.f32.mrf.mxu0
      %v635 = vadd.f32 %v499, %v634
      %v636 = vpop.f32.mrf.mxu0
      %v637 = vadd.f32 %v499, %v636
      %638 = vdwg.mxu0
      %v639 = vmul.f32 %v560, 0.35355338
      %v640 = vmul.f32 %v562, 0.35355338
      %v641 = vmul.f32 %v565, 0.35355338
      %v642 = vmul.f32 %v567, 0.35355338
      %v643 = vmul.f32 %v570, 0.35355338
      %v644 = vmul.f32 %v572, 0.35355338
      %v645 = vmul.f32 %v575, 0.35355338
      %v646 = vmul.f32 %v577, 0.35355338
      %v647 = vmul.f32 %v580, 0.35355338
      %v648 = vmul.f32 %v582, 0.35355338
      %v649 = vmul.f32 %v585, 0.35355338
      %v650 = vmul.f32 %v587, 0.35355338
      %v651 = vmul.f32 %v590, 0.35355338
      %v652 = vmul.f32 %v592, 0.35355338
      %v653 = vmul.f32 %v595, 0.35355338
      %v654 = vmul.f32 %v597, 0.35355338
      %v655 = vmul.f32 %v600, 0.35355338
      %v656 = vmul.f32 %v602, 0.35355338
      %v657 = vmul.f32 %v605, 0.35355338
      %v658 = vmul.f32 %v607, 0.35355338
      %v659 = vmul.f32 %v610, 0.35355338
      %v660 = vmul.f32 %v612, 0.35355338
      %v661 = vmul.f32 %v615, 0.35355338
      %v662 = vmul.f32 %v617, 0.35355338
      %v663 = vmul.f32 %v620, 0.35355338
      %v664 = vmul.f32 %v622, 0.35355338
      %v665 = vmul.f32 %v625, 0.35355338
      %v666 = vmul.f32 %v627, 0.35355338
      %v667 = vmul.f32 %v630, 0.35355338
      %v668 = vmul.f32 %v632, 0.35355338
      %v669 = vmul.f32 %v635, 0.35355338
      %v670 = vmul.f32 %v637, 0.35355338
      %v671 = vpack.c.bf16 %v468, %v467
      %v672 = vpack.c.bf16 %v470, %v469
      %v673 = vpack.c.bf16 %v472, %v471
      %v674 = vpack.c.bf16 %v474, %v473
      %v675 = vld [vmem:[%s4] sm:$0xff]
      %v676 = vld [vmem:[%s4 + $0x8] sm:$0xff]
      %v677 = vld [vmem:[%s4 + $0x10] sm:$0xff]
      %v678 = vld [vmem:[%s4 + $0x18] sm:$0xff]
      %v679 = vld [vmem:[%s4 + $0x20] sm:$0xff]
      %v680 = vld [vmem:[%s4 + $0x28] sm:$0xff]
      %v681 = vld [vmem:[%s4 + $0x30] sm:$0xff]
      %v682 = vld [vmem:[%s4 + $0x38] sm:$0xff]
      %v683 = vld [vmem:[%s4 + $0x40] sm:$0xff]
      %v684 = vld [vmem:[%s4 + $0x48] sm:$0xff]
      %v685 = vld [vmem:[%s4 + $0x50] sm:$0xff]
      %v686 = vld [vmem:[%s4 + $0x58] sm:$0xff]
      %v687 = vld [vmem:[%s4 + $0x60] sm:$0xff]
      %v688 = vld [vmem:[%s4 + $0x68] sm:$0xff]
      %v689 = vld [vmem:[%s4 + $0x70] sm:$0xff]
      %v690 = vld [vmem:[%s4 + $0x78] sm:$0xff]
      %v691 = vpack.c.bf16 %v676, %v675
      %v692 = vpack.c.bf16 %v678, %v677
      %v693 = vpack.c.bf16 %v680, %v679
      %v694 = vpack.c.bf16 %v682, %v681
      %v695 = vpack.c.bf16 %v684, %v683
      %v696 = vpack.c.bf16 %v686, %v685
      %v697 = vpack.c.bf16 %v688, %v687
      %v698 = vpack.c.bf16 %v690, %v689
      %v699 = vld [vmem:[%s5] sm:$0x1]
      %v701 = vperm.slane %v699, 0
      %703 = vmatpush.bf16.msra.mxu0 %v698
      %704 = vmatpush.bf16.msra.mxu0 %v697
      %705 = vmatpush.bf16.msra.mxu0 %v696
      %706 = vmatpush.bf16.msra.mxu0 %v695
      %707 = vmatpush.bf16.msra.mxu0 %v694
      %708 = vmatpush.bf16.msra.mxu0 %v693
      %709 = vmatpush.bf16.msra.mxu0 %v692
      %710 = vmatpush.bf16.msra.mxu0 %v691
      %711 = vmatmul.bf16.gmra.mxu0 %v671
      %v712 = vpop.f32.mrf.mxu0
      %v713 = vadd.f32 %v701, %v712
      %v714 = vpop.f32.mrf.mxu0
      %v715 = vadd.f32 %v701, %v714
      %716 = vmatmul.bf16.gmra.mxu0 %v672
      %v717 = vpop.f32.mrf.mxu0
      %v718 = vadd.f32 %v701, %v717
      %v719 = vpop.f32.mrf.mxu0
      %v720 = vadd.f32 %v701, %v719
      %721 = vmatmul.bf16.gmra.mxu0 %v673
      %v722 = vpop.f32.mrf.mxu0
      %v723 = vadd.f32 %v701, %v722
      %v724 = vpop.f32.mrf.mxu0
      %v725 = vadd.f32 %v701, %v724
      %726 = vmatmul.bf16.gmra.mxu0 %v674
      %v727 = vpop.f32.mrf.mxu0
      %v728 = vadd.f32 %v701, %v727
      %v729 = vpop.f32.mrf.mxu0
      %v730 = vadd.f32 %v701, %v729
      %731 = vdwg.mxu0
      %v732 = vsel %vm501, %v713, 0.0
      %733 = vadd.xlane.f32.xlu0 %v732
      %v734 = vpop.xlane.xlu0 %733
      %v735 = vsel %vm501, %v715, 0.0
      %736 = vadd.xlane.f32.xlu0 %v735
      %v737 = vpop.xlane.xlu0 %736
      %v738 = vsel %vm501, %v718, 0.0
      %739 = vadd.xlane.f32.xlu0 %v738
      %v740 = vpop.xlane.xlu0 %739
      %v741 = vsel %vm501, %v720, 0.0
      %742 = vadd.xlane.f32.xlu0 %v741
      %v743 = vpop.xlane.xlu0 %742
      %v744 = vsel %vm501, %v723, 0.0
      %745 = vadd.xlane.f32.xlu0 %v744
      %v746 = vpop.xlane.xlu0 %745
      %v747 = vsel %vm501, %v725, 0.0
      %748 = vadd.xlane.f32.xlu0 %v747
      %v749 = vpop.xlane.xlu0 %748
      %v750 = vsel %vm501, %v728, 0.0
      %751 = vadd.xlane.f32.xlu0 %v750
      %v752 = vpop.xlane.xlu0 %751
      %v753 = vsel %vm501, %v730, 0.0
      %754 = vadd.xlane.f32.xlu0 %v753
      %v755 = vpop.xlane.xlu0 %754
      %v756 = vrcp.pop 32.0
      %v757 = vmul.f32 32.0, %v756
      %v758 = vsub.f32 1.0, %v757
      %v759 = vmul.f32 %v756, %v758
      %v760 = vadd.f32 %v756, %v759
      %vm761 = vweird.f32 %v756
      %v762 = vsel %vm761, %v756, %v760
      %v763 = vmul.f32 %v734, %v762
      %v764 = vmul.f32 %v737, %v762
      %v765 = vmul.f32 %v740, %v762
      %v766 = vmul.f32 %v743, %v762
      %v767 = vmul.f32 %v746, %v762
      %v768 = vmul.f32 %v749, %v762
      %v769 = vmul.f32 %v752, %v762
      %v770 = vmul.f32 %v755, %v762
      %v771 = vsub.f32 %v713, %v763
      %v772 = vsub.f32 %v715, %v764
      %v773 = vsub.f32 %v718, %v765
      %v774 = vsub.f32 %v720, %v766
      %v775 = vsub.f32 %v723, %v767
      %v776 = vsub.f32 %v725, %v768
      %v777 = vsub.f32 %v728, %v769
      %v778 = vsub.f32 %v730, %v770
      %v779 = vmul.f32 %v771, %v771
      %v780 = vmul.f32 %v772, %v772
      %v781 = vmul.f32 %v773, %v773
      %v782 = vmul.f32 %v774, %v774
      %v783 = vmul.f32 %v775, %v775
      %v784 = vmul.f32 %v776, %v776
      %v785 = vmul.f32 %v777, %v777
      %v786 = vmul.f32 %v778, %v778
      %v787 = vsel %vm501, %v779, 0.0
      %788 = vadd.xlane.f32.xlu0 %v787
      %v789 = vpop.xlane.xlu0 %788
      %v790 = vsel %vm501, %v780, 0.0
      %791 = vadd.xlane.f32.xlu0 %v790
      %v792 = vpop.xlane.xlu0 %791
      %v793 = vsel %vm501, %v781, 0.0
      %794 = vadd.xlane.f32.xlu0 %v793
      %v795 = vpop.xlane.xlu0 %794
      %v796 = vsel %vm501, %v782, 0.0
      %797 = vadd.xlane.f32.xlu0 %v796
      %v798 = vpop.xlane.xlu0 %797
      %v799 = vsel %vm501, %v783, 0.0
      %800 = vadd.xlane.f32.xlu0 %v799
      %v801 = vpop.xlane.xlu0 %800
      %v802 = vsel %vm501, %v784, 0.0
      %803 = vadd.xlane.f32.xlu0 %v802
      %v804 = vpop.xlane.xlu0 %803
      %v805 = vsel %vm501, %v785, 0.0
      %806 = vadd.xlane.f32.xlu0 %v805
      %v807 = vpop.xlane.xlu0 %806
      %v808 = vsel %vm501, %v786, 0.0
      %809 = vadd.xlane.f32.xlu0 %v808
      %v810 = vpop.xlane.xlu0 %809
      %v811 = vmul.f32 %v789, %v762
      %v812 = vmul.f32 %v792, %v762
      %v813 = vmul.f32 %v795, %v762
      %v814 = vmul.f32 %v798, %v762
      %v815 = vmul.f32 %v801, %v762
      %v816 = vmul.f32 %v804, %v762
      %v817 = vmul.f32 %v807, %v762
      %v818 = vmul.f32 %v810, %v762
      %v819 = vadd.f32 %v811, 1e-05
      %v820 = vadd.f32 %v812, 1e-05
      %v821 = vadd.f32 %v813, 1e-05
      %v822 = vadd.f32 %v814, 1e-05
      %v823 = vadd.f32 %v815, 1e-05
      %v824 = vadd.f32 %v816, 1e-05
      %v825 = vadd.f32 %v817, 1e-05
      %v826 = vadd.f32 %v818, 1e-05
      %v827 = vrsqrt.pop %v819
      %v828 = vmul.f32 %v827, %v819
      %v829 = vmul.f32 %v828, %v827
      %v830 = vmul.f32 0.5, %v829
      %v831 = vsub.f32 1.5, %v830
      %v832 = vmul.f32 %v827, %v831
      %vm833 = vweird.f32 %v819
      %vm834 = vweird.f32 %v827
      %vm835 = vmor %vm833, %vm834
      %v836 = vsel %vm835, %v827, %v832
      %v837 = vrsqrt.pop %v820
      %v838 = vmul.f32 %v837, %v820
      %v839 = vmul.f32 %v838, %v837
      %v840 = vmul.f32 0.5, %v839
      %v841 = vsub.f32 1.5, %v840
      %v842 = vmul.f32 %v837, %v841
      %vm843 = vweird.f32 %v820
      %vm844 = vweird.f32 %v837
      %vm845 = vmor %vm843, %vm844
      %v846 = vsel %vm845, %v837, %v842
      %v847 = vrsqrt.pop %v821
      %v848 = vmul.f32 %v847, %v821
      %v849 = vmul.f32 %v848, %v847
      %v850 = vmul.f32 0.5, %v849
      %v851 = vsub.f32 1.5, %v850
      %v852 = vmul.f32 %v847, %v851
      %vm853 = vweird.f32 %v821
      %vm854 = vweird.f32 %v847
      %vm855 = vmor %vm853, %vm854
      %v856 = vsel %vm855, %v847, %v852
      %v857 = vrsqrt.pop %v822
      %v858 = vmul.f32 %v857, %v822
      %v859 = vmul.f32 %v858, %v857
      %v860 = vmul.f32 0.5, %v859
      %v861 = vsub.f32 1.5, %v860
      %v862 = vmul.f32 %v857, %v861
      %vm863 = vweird.f32 %v822
      %vm864 = vweird.f32 %v857
      %vm865 = vmor %vm863, %vm864
      %v866 = vsel %vm865, %v857, %v862
      %v867 = vrsqrt.pop %v823
      %v868 = vmul.f32 %v867, %v823
      %v869 = vmul.f32 %v868, %v867
      %v870 = vmul.f32 0.5, %v869
      %v871 = vsub.f32 1.5, %v870
      %v872 = vmul.f32 %v867, %v871
      %vm873 = vweird.f32 %v823
      %vm874 = vweird.f32 %v867
      %vm875 = vmor %vm873, %vm874
      %v876 = vsel %vm875, %v867, %v872
      %v877 = vrsqrt.pop %v824
      %v878 = vmul.f32 %v877, %v824
      %v879 = vmul.f32 %v878, %v877
      %v880 = vmul.f32 0.5, %v879
      %v881 = vsub.f32 1.5, %v880
      %v882 = vmul.f32 %v877, %v881
      %vm883 = vweird.f32 %v824
      %vm884 = vweird.f32 %v877
      %vm885 = vmor %vm883, %vm884
      %v886 = vsel %vm885, %v877, %v882
      %v887 = vrsqrt.pop %v825
      %v888 = vmul.f32 %v887, %v825
      %v889 = vmul.f32 %v888, %v887
      %v890 = vmul.f32 0.5, %v889
      %v891 = vsub.f32 1.5, %v890
      %v892 = vmul.f32 %v887, %v891
      %vm893 = vweird.f32 %v825
      %vm894 = vweird.f32 %v887
      %vm895 = vmor %vm893, %vm894
      %v896 = vsel %vm895, %v887, %v892
      %v897 = vrsqrt.pop %v826
      %v898 = vmul.f32 %v897, %v826
      %v899 = vmul.f32 %v898, %v897
      %v900 = vmul.f32 0.5, %v899
      %v901 = vsub.f32 1.5, %v900
      %v902 = vmul.f32 %v897, %v901
      %vm903 = vweird.f32 %v826
      %vm904 = vweird.f32 %v897
      %vm905 = vmor %vm903, %vm904
      %v906 = vsel %vm905, %v897, %v902
      %v907 = vmul.f32 %v771, %v836
      %v908 = vmul.f32 %v772, %v846
      %v909 = vmul.f32 %v773, %v856
      %v910 = vmul.f32 %v774, %v866
      %v911 = vmul.f32 %v775, %v876
      %v912 = vmul.f32 %v776, %v886
      %v913 = vmul.f32 %v777, %v896
      %v914 = vmul.f32 %v778, %v906
      %v915 = vld [vmem:[%s6] sm:$0x1]
      %v917 = vperm.slane %v915, 0
      %v919 = vmul.f32 %v907, %v917
      %v920 = vmul.f32 %v908, %v917
      %v921 = vmul.f32 %v909, %v917
      %v922 = vmul.f32 %v910, %v917
      %v923 = vmul.f32 %v911, %v917
      %v924 = vmul.f32 %v912, %v917
      %v925 = vmul.f32 %v913, %v917
      %v926 = vmul.f32 %v914, %v917
      %v927 = vld [vmem:[%s7] sm:$0x1]
      %v929 = vperm.slane %v927, 0
      %v931 = vadd.f32 %v919, %v929
      %v932 = vadd.f32 %v920, %v929
      %v933 = vadd.f32 %v921, %v929
      %v934 = vadd.f32 %v922, %v929
      %v935 = vadd.f32 %v923, %v929
      %v936 = vadd.f32 %v924, %v929
      %v937 = vadd.f32 %v925, %v929
      %v938 = vadd.f32 %v926, %v929
      %v939 = vpack.c.bf16 %v932, %v931
      %v940 = vpack.c.bf16 %v934, %v933
      %v941 = vpack.c.bf16 %v936, %v935
      %v942 = vpack.c.bf16 %v938, %v937
      %v943 = vld [vmem:[%s8] sm:$0xff]
      %v944 = vld [vmem:[%s8 + $0x8] sm:$0xff]
      %v945 = vld [vmem:[%s8 + $0x10] sm:$0xff]
      %v946 = vld [vmem:[%s8 + $0x18] sm:$0xff]
      %v947 = vpack.c.bf16 %v944, %v943
      %v948 = vpack.c.bf16 %v946, %v945
      %v949 = vld [vmem:[%s9] sm:$0x1]
      %v951 = vperm.slane %v949, 0
      %v954 = vsel %vm501, %v939, 0
      %v957 = vsel %vm501, %v940, 0
      %v960 = vsel %vm501, %v941, 0
      %v963 = vsel %vm501, %v942, 0
      %965 = vmatpush.bf16.msra.mxu0 0
      %966 = vmatpush.bf16.msra.mxu0 0
      %967 = vmatpush.bf16.msra.mxu0 0
      %968 = vmatpush.bf16.msra.mxu0 0
      %969 = vmatpush.bf16.msra.mxu0 0
      %970 = vmatpush.bf16.msra.mxu0 0
      %971 = vmatpush.bf16.msra.mxu0 %v948
      %972 = vmatpush.bf16.msra.mxu0 %v947
      %973 = vmatmul.bf16.gmra.mxu0 %v954
      %v974 = vpop.f32.mrf.mxu0
      %v975 = vadd.f32 %v951, %v974
      %v976 = vpop.f32.mrf.mxu0
      %v977 = vadd.f32 %v951, %v976
      %978 = vmatmul.bf16.gmra.mxu0 %v957
      %v979 = vpop.f32.mrf.mxu0
      %v980 = vadd.f32 %v951, %v979
      %v981 = vpop.f32.mrf.mxu0
      %v982 = vadd.f32 %v951, %v981
      %983 = vmatmul.bf16.gmra.mxu0 %v960
      %v984 = vpop.f32.mrf.mxu0
      %v985 = vadd.f32 %v951, %v984
      %v986 = vpop.f32.mrf.mxu0
      %v987 = vadd.f32 %v951, %v986
      %988 = vmatmul.bf16.gmra.mxu0 %v963
      %v989 = vpop.f32.mrf.mxu0
      %v990 = vadd.f32 %v951, %v989
      %v991 = vpop.f32.mrf.mxu0
      %v992 = vadd.f32 %v951, %v991
      %993 = vdwg.mxu0
      %v994 = vld [vmem:[%s10] sm:$0xff]
      %v995 = vld [vmem:[%s10 + $0x8] sm:$0xff]
      %v996 = vld [vmem:[%s10 + $0x10] sm:$0xff]
      %v997 = vld [vmem:[%s10 + $0x18] sm:$0xff]
      %v998 = vpack.c.bf16 %v994, %v994
      %v999 = vpack.c.bf16 %v995, %v995
      %v1000 = vpack.c.bf16 %v996, %v996
      %v1001 = vpack.c.bf16 %v997, %v997
      %v1002 = vpack.c.bf16 %v640, %v639
      %v1003 = vpack.c.bf16 %v642, %v641
      %v1004 = vpack.c.bf16 %v644, %v643
      %v1005 = vpack.c.bf16 %v646, %v645
      %v1006 = vpack.c.bf16 %v648, %v647
      %v1007 = vpack.c.bf16 %v650, %v649
      %v1008 = vpack.c.bf16 %v652, %v651
      %v1009 = vpack.c.bf16 %v654, %v653
      %v1010 = vpack.c.bf16 %v656, %v655
      %v1011 = vpack.c.bf16 %v658, %v657
      %v1012 = vpack.c.bf16 %v660, %v659
      %v1013 = vpack.c.bf16 %v662, %v661
      %v1014 = vpack.c.bf16 %v664, %v663
      %v1015 = vpack.c.bf16 %v666, %v665
      %v1016 = vpack.c.bf16 %v668, %v667
      %v1017 = vpack.c.bf16 %v670, %v669
      %v1018 = vpack.c.bf16 %v977, %v975
      %v1019 = vpack.c.bf16 %v982, %v980
      %v1020 = vpack.c.bf16 %v987, %v985
      %v1021 = vpack.c.bf16 %v992, %v990
      %vm1022 = vcmask 64512
      %v1024 = vsel %vm1022, %v1002, 0
      %v1027 = vsel %vm1022, %v1003, 0
      %v1030 = vsel %vm1022, %v1004, 0
      %v1033 = vsel %vm1022, %v1005, 0
      %v1036 = vsel %vm1022, %v1006, 0
      %v1039 = vsel %vm1022, %v1007, 0
      %v1042 = vsel %vm1022, %v1008, 0
      %v1045 = vsel %vm1022, %v1009, 0
      %v1048 = vsel %vm1022, %v1010, 0
      %v1051 = vsel %vm1022, %v1011, 0
      %v1054 = vsel %vm1022, %v1012, 0
      %v1057 = vsel %vm1022, %v1013, 0
      %v1060 = vsel %vm1022, %v1014, 0
      %v1063 = vsel %vm1022, %v1015, 0
      %v1066 = vsel %vm1022, %v1016, 0
      %v1069 = vsel %vm1022, %v1017, 0
      %v1072 = vsel %vm1022, %v1018, 0
      %v1075 = vsel %vm1022, %v1019, 0
      %v1078 = vsel %vm1022, %v1020, 0
      %v1081 = vsel %vm1022, %v1021, 0
      %1083 = vmatpush.bf16.xpose.msra.mxu0 0
      %1084 = vmatpush.bf16.xpose.msra.mxu0 0
      %1085 = vmatpush.bf16.xpose.msra.mxu0 0
      %1086 = vmatpush.bf16.xpose.msra.mxu0 0
      %1087 = vmatpush.bf16.xpose.msra.mxu0 %v1081
      %1088 = vmatpush.bf16.xpose.msra.mxu0 %v1078
      %1089 = vmatpush.bf16.xpose.msra.mxu0 %v1075
      %1090 = vmatpush.bf16.xpose.msra.mxu0 %v1072
      %1091 = vmatmul.bf16.gmra.mxu0 %v1024
      %v1092 = vpop.f32.mrf.mxu0
      %v1093 = vadd.f32 0.0, %v1092
      %v1094 = vpop.f32.mrf.mxu0
      %v1095 = vadd.f32 0.0, %v1094
      %1096 = vmatmul.bf16.gmra.mxu0 %v1027
      %v1097 = vpop.f32.mrf.mxu0
      %v1098 = vadd.f32 0.0, %v1097
      %v1099 = vpop.f32.mrf.mxu0
      %v1100 = vadd.f32 0.0, %v1099
      %1101 = vmatmul.bf16.gmra.mxu0 %v1030
      %v1102 = vpop.f32.mrf.mxu0
      %v1103 = vadd.f32 0.0, %v1102
      %v1104 = vpop.f32.mrf.mxu0
      %v1105 = vadd.f32 0.0, %v1104
      %1106 = vmatmul.bf16.gmra.mxu0 %v1033
      %v1107 = vpop.f32.mrf.mxu0
      %v1108 = vadd.f32 0.0, %v1107
      %v1109 = vpop.f32.mrf.mxu0
      %v1110 = vadd.f32 0.0, %v1109
      %1111 = vmatmul.bf16.gmra.mxu0 %v1036
      %v1112 = vpop.f32.mrf.mxu0
      %v1113 = vadd.f32 0.0, %v1112
      %v1114 = vpop.f32.mrf.mxu0
      %v1115 = vadd.f32 0.0, %v1114
      %1116 = vmatmul.bf16.gmra.mxu0 %v1039
      %v1117 = vpop.f32.mrf.mxu0
      %v1118 = vadd.f32 0.0, %v1117
      %v1119 = vpop.f32.mrf.mxu0
      %v1120 = vadd.f32 0.0, %v1119
      %1121 = vmatmul.bf16.gmra.mxu0 %v1042
      %v1122 = vpop.f32.mrf.mxu0
      %v1123 = vadd.f32 0.0, %v1122
      %v1124 = vpop.f32.mrf.mxu0
      %v1125 = vadd.f32 0.0, %v1124
      %1126 = vmatmul.bf16.gmra.mxu0 %v1045
      %v1127 = vpop.f32.mrf.mxu0
      %v1128 = vadd.f32 0.0, %v1127
      %v1129 = vpop.f32.mrf.mxu0
      %v1130 = vadd.f32 0.0, %v1129
      %1131 = vmatmul.bf16.gmra.mxu0 %v1048
      %v1132 = vpop.f32.mrf.mxu0
      %v1133 = vadd.f32 0.0, %v1132
      %v1134 = vpop.f32.mrf.mxu0
      %v1135 = vadd.f32 0.0, %v1134
      %1136 = vmatmul.bf16.gmra.mxu0 %v1051
      %v1137 = vpop.f32.mrf.mxu0
      %v1138 = vadd.f32 0.0, %v1137
      %v1139 = vpop.f32.mrf.mxu0
      %v1140 = vadd.f32 0.0, %v1139
      %1141 = vmatmul.bf16.gmra.mxu0 %v1054
      %v1142 = vpop.f32.mrf.mxu0
      %v1143 = vadd.f32 0.0, %v1142
      %v1144 = vpop.f32.mrf.mxu0
      %v1145 = vadd.f32 0.0, %v1144
      %1146 = vmatmul.bf16.gmra.mxu0 %v1057
      %v1147 = vpop.f32.mrf.mxu0
      %v1148 = vadd.f32 0.0, %v1147
      %v1149 = vpop.f32.mrf.mxu0
      %v1150 = vadd.f32 0.0, %v1149
      %1151 = vmatmul.bf16.gmra.mxu0 %v1060
      %v1152 = vpop.f32.mrf.mxu0
      %v1153 = vadd.f32 0.0, %v1152
      %v1154 = vpop.f32.mrf.mxu0
      %v1155 = vadd.f32 0.0, %v1154
      %1156 = vmatmul.bf16.gmra.mxu0 %v1063
      %v1157 = vpop.f32.mrf.mxu0
      %v1158 = vadd.f32 0.0, %v1157
      %v1159 = vpop.f32.mrf.mxu0
      %v1160 = vadd.f32 0.0, %v1159
      %1161 = vmatmul.bf16.gmra.mxu0 %v1066
      %v1162 = vpop.f32.mrf.mxu0
      %v1163 = vadd.f32 0.0, %v1162
      %v1164 = vpop.f32.mrf.mxu0
      %v1165 = vadd.f32 0.0, %v1164
      %1166 = vmatmul.bf16.gmra.mxu0 %v1069
      %v1167 = vpop.f32.mrf.mxu0
      %v1168 = vadd.f32 0.0, %v1167
      %v1169 = vpop.f32.mrf.mxu0
      %v1170 = vadd.f32 0.0, %v1169
      %1171 = vdwg.mxu0
      %vm1172 = vcmask 523264
      %v1173 = vsel %vm1172, %v1093, -inf
      %1174 = vmax.xlane.f32.xlu0 %v1173
      %v1175 = vpop.xlane.xlu0 %1174
      %v1176 = vsel %vm1172, %v1095, -inf
      %1177 = vmax.xlane.f32.xlu0 %v1176
      %v1178 = vpop.xlane.xlu0 %1177
      %v1179 = vsel %vm1172, %v1098, -inf
      %1180 = vmax.xlane.f32.xlu0 %v1179
      %v1181 = vpop.xlane.xlu0 %1180
      %v1182 = vsel %vm1172, %v1100, -inf
      %1183 = vmax.xlane.f32.xlu0 %v1182
      %v1184 = vpop.xlane.xlu0 %1183
      %v1185 = vsel %vm1172, %v1103, -inf
      %1186 = vmax.xlane.f32.xlu0 %v1185
      %v1187 = vpop.xlane.xlu0 %1186
      %v1188 = vsel %vm1172, %v1105, -inf
      %1189 = vmax.xlane.f32.xlu0 %v1188
      %v1190 = vpop.xlane.xlu0 %1189
      %v1191 = vsel %vm1172, %v1108, -inf
      %1192 = vmax.xlane.f32.xlu0 %v1191
      %v1193 = vpop.xlane.xlu0 %1192
      %v1194 = vsel %vm1172, %v1110, -inf
      %1195 = vmax.xlane.f32.xlu0 %v1194
      %v1196 = vpop.xlane.xlu0 %1195
      %v1197 = vsel %vm1172, %v1113, -inf
      %1198 = vmax.xlane.f32.xlu0 %v1197
      %v1199 = vpop.xlane.xlu0 %1198
      %v1200 = vsel %vm1172, %v1115, -inf
      %1201 = vmax.xlane.f32.xlu0 %v1200
      %v1202 = vpop.xlane.xlu0 %1201
      %v1203 = vsel %vm1172, %v1118, -inf
      %1204 = vmax.xlane.f32.xlu0 %v1203
      %v1205 = vpop.xlane.xlu0 %1204
      %v1206 = vsel %vm1172, %v1120, -inf
      %1207 = vmax.xlane.f32.xlu0 %v1206
      %v1208 = vpop.xlane.xlu0 %1207
      %v1209 = vsel %vm1172, %v1123, -inf
      %1210 = vmax.xlane.f32.xlu0 %v1209
      %v1211 = vpop.xlane.xlu0 %1210
      %v1212 = vsel %vm1172, %v1125, -inf
      %1213 = vmax.xlane.f32.xlu0 %v1212
      %v1214 = vpop.xlane.xlu0 %1213
      %v1215 = vsel %vm1172, %v1128, -inf
      %1216 = vmax.xlane.f32.xlu0 %v1215
      %v1217 = vpop.xlane.xlu0 %1216
      %v1218 = vsel %vm1172, %v1130, -inf
      %1219 = vmax.xlane.f32.xlu0 %v1218
      %v1220 = vpop.xlane.xlu0 %1219
      %v1221 = vsel %vm1172, %v1133, -inf
      %1222 = vmax.xlane.f32.xlu0 %v1221
      %v1223 = vpop.xlane.xlu0 %1222
      %v1224 = vsel %vm1172, %v1135, -inf
      %1225 = vmax.xlane.f32.xlu0 %v1224
      %v1226 = vpop.xlane.xlu0 %1225
      %v1227 = vsel %vm1172, %v1138, -inf
      %1228 = vmax.xlane.f32.xlu0 %v1227
      %v1229 = vpop.xlane.xlu0 %1228
      %v1230 = vsel %vm1172, %v1140, -inf
      %1231 = vmax.xlane.f32.xlu0 %v1230
      %v1232 = vpop.xlane.xlu0 %1231
      %v1233 = vsel %vm1172, %v1143, -inf
      %1234 = vmax.xlane.f32.xlu0 %v1233
      %v1235 = vpop.xlane.xlu0 %1234
      %v1236 = vsel %vm1172, %v1145, -inf
      %1237 = vmax.xlane.f32.xlu0 %v1236
      %v1238 = vpop.xlane.xlu0 %1237
      %v1239 = vsel %vm1172, %v1148, -inf
      %1240 = vmax.xlane.f32.xlu0 %v1239
      %v1241 = vpop.xlane.xlu0 %1240
      %v1242 = vsel %vm1172, %v1150, -inf
      %1243 = vmax.xlane.f32.xlu0 %v1242
      %v1244 = vpop.xlane.xlu0 %1243
      %v1245 = vsel %vm1172, %v1153, -inf
      %1246 = vmax.xlane.f32.xlu0 %v1245
      %v1247 = vpop.xlane.xlu0 %1246
      %v1248 = vsel %vm1172, %v1155, -inf
      %1249 = vmax.xlane.f32.xlu0 %v1248
      %v1250 = vpop.xlane.xlu0 %1249
      %v1251 = vsel %vm1172, %v1158, -inf
      %1252 = vmax.xlane.f32.xlu0 %v1251
      %v1253 = vpop.xlane.xlu0 %1252
      %v1254 = vsel %vm1172, %v1160, -inf
      %1255 = vmax.xlane.f32.xlu0 %v1254
      %v1256 = vpop.xlane.xlu0 %1255
      %v1257 = vsel %vm1172, %v1163, -inf
      %1258 = vmax.xlane.f32.xlu0 %v1257
      %v1259 = vpop.xlane.xlu0 %1258
      %v1260 = vsel %vm1172, %v1165, -inf
      %1261 = vmax.xlane.f32.xlu0 %v1260
      %v1262 = vpop.xlane.xlu0 %1261
      %v1263 = vsel %vm1172, %v1168, -inf
      %1264 = vmax.xlane.f32.xlu0 %v1263
      %v1265 = vpop.xlane.xlu0 %1264
      %v1266 = vsel %vm1172, %v1170, -inf
      %1267 = vmax.xlane.f32.xlu0 %v1266
      %v1268 = vpop.xlane.xlu0 %1267
      %v1269 = vsub.f32 %v1093, %v1175
      %v1270 = vsub.f32 %v1095, %v1178
      %v1271 = vsub.f32 %v1098, %v1181
      %v1272 = vsub.f32 %v1100, %v1184
      %v1273 = vsub.f32 %v1103, %v1187
      %v1274 = vsub.f32 %v1105, %v1190
      %v1275 = vsub.f32 %v1108, %v1193
      %v1276 = vsub.f32 %v1110, %v1196
      %v1277 = vsub.f32 %v1113, %v1199
      %v1278 = vsub.f32 %v1115, %v1202
      %v1279 = vsub.f32 %v1118, %v1205
      %v1280 = vsub.f32 %v1120, %v1208
      %v1281 = vsub.f32 %v1123, %v1211
      %v1282 = vsub.f32 %v1125, %v1214
      %v1283 = vsub.f32 %v1128, %v1217
      %v1284 = vsub.f32 %v1130, %v1220
      %v1285 = vsub.f32 %v1133, %v1223
      %v1286 = vsub.f32 %v1135, %v1226
      %v1287 = vsub.f32 %v1138, %v1229
      %v1288 = vsub.f32 %v1140, %v1232
      %v1289 = vsub.f32 %v1143, %v1235
      %v1290 = vsub.f32 %v1145, %v1238
      %v1291 = vsub.f32 %v1148, %v1241
      %v1292 = vsub.f32 %v1150, %v1244
      %v1293 = vsub.f32 %v1153, %v1247
      %v1294 = vsub.f32 %v1155, %v1250
      %v1295 = vsub.f32 %v1158, %v1253
      %v1296 = vsub.f32 %v1160, %v1256
      %v1297 = vsub.f32 %v1163, %v1259
      %v1298 = vsub.f32 %v1165, %v1262
      %v1299 = vsub.f32 %v1168, %v1265
      %v1300 = vsub.f32 %v1170, %v1268
      %v1301 = vmul.f32 %v1269, 1.442695
      %v1302 = vpow.pop %v1301
      %v1303 = vmul.f32 %v1270, 1.442695
      %v1304 = vpow.pop %v1303
      %v1305 = vmul.f32 %v1271, 1.442695
      %v1306 = vpow.pop %v1305
      %v1307 = vmul.f32 %v1272, 1.442695
      %v1308 = vpow.pop %v1307
      %v1309 = vmul.f32 %v1273, 1.442695
      %v1310 = vpow.pop %v1309
      %v1311 = vmul.f32 %v1274, 1.442695
      %v1312 = vpow.pop %v1311
      %v1313 = vmul.f32 %v1275, 1.442695
      %v1314 = vpow.pop %v1313
      %v1315 = vmul.f32 %v1276, 1.442695
      %v1316 = vpow.pop %v1315
      %v1317 = vmul.f32 %v1277, 1.442695
      %v1318 = vpow.pop %v1317
      %v1319 = vmul.f32 %v1278, 1.442695
      %v1320 = vpow.pop %v1319
      %v1321 = vmul.f32 %v1279, 1.442695
      %v1322 = vpow.pop %v1321
      %v1323 = vmul.f32 %v1280, 1.442695
      %v1324 = vpow.pop %v1323
      %v1325 = vmul.f32 %v1281, 1.442695
      %v1326 = vpow.pop %v1325
      %v1327 = vmul.f32 %v1282, 1.442695
      %v1328 = vpow.pop %v1327
      %v1329 = vmul.f32 %v1283, 1.442695
      %v1330 = vpow.pop %v1329
      %v1331 = vmul.f32 %v1284, 1.442695
      %v1332 = vpow.pop %v1331
      %v1333 = vmul.f32 %v1285, 1.442695
      %v1334 = vpow.pop %v1333
      %v1335 = vmul.f32 %v1286, 1.442695
      %v1336 = vpow.pop %v1335
      %v1337 = vmul.f32 %v1287, 1.442695
      %v1338 = vpow.pop %v1337
      %v1339 = vmul.f32 %v1288, 1.442695
      %v1340 = vpow.pop %v1339
      %v1341 = vmul.f32 %v1289, 1.442695
      %v1342 = vpow.pop %v1341
      %v1343 = vmul.f32 %v1290, 1.442695
      %v1344 = vpow.pop %v1343
      %v1345 = vmul.f32 %v1291, 1.442695
      %v1346 = vpow.pop %v1345
      %v1347 = vmul.f32 %v1292, 1.442695
      %v1348 = vpow.pop %v1347
      %v1349 = vmul.f32 %v1293, 1.442695
      %v1350 = vpow.pop %v1349
      %v1351 = vmul.f32 %v1294, 1.442695
      %v1352 = vpow.pop %v1351
      %v1353 = vmul.f32 %v1295, 1.442695
      %v1354 = vpow.pop %v1353
      %v1355 = vmul.f32 %v1296, 1.442695
      %v1356 = vpow.pop %v1355
      %v1357 = vmul.f32 %v1297, 1.442695
      %v1358 = vpow.pop %v1357
      %v1359 = vmul.f32 %v1298, 1.442695
      %v1360 = vpow.pop %v1359
      %v1361 = vmul.f32 %v1299, 1.442695
      %v1362 = vpow.pop %v1361
      %v1363 = vmul.f32 %v1300, 1.442695
      %v1364 = vpow.pop %v1363
      %v1365 = vsel %vm1172, %v1302, 0.0
      %1366 = vadd.xlane.f32.xlu0 %v1365
      %v1367 = vpop.xlane.xlu0 %1366
      %v1368 = vsel %vm1172, %v1304, 0.0
      %1369 = vadd.xlane.f32.xlu0 %v1368
      %v1370 = vpop.xlane.xlu0 %1369
      %v1371 = vsel %vm1172, %v1306, 0.0
      %1372 = vadd.xlane.f32.xlu0 %v1371
      %v1373 = vpop.xlane.xlu0 %1372
      %v1374 = vsel %vm1172, %v1308, 0.0
      %1375 = vadd.xlane.f32.xlu0 %v1374
      %v1376 = vpop.xlane.xlu0 %1375
      %v1377 = vsel %vm1172, %v1310, 0.0
      %1378 = vadd.xlane.f32.xlu0 %v1377
      %v1379 = vpop.xlane.xlu0 %1378
      %v1380 = vsel %vm1172, %v1312, 0.0
      %1381 = vadd.xlane.f32.xlu0 %v1380
      %v1382 = vpop.xlane.xlu0 %1381
      %v1383 = vsel %vm1172, %v1314, 0.0
      %1384 = vadd.xlane.f32.xlu0 %v1383
      %v1385 = vpop.xlane.xlu0 %1384
      %v1386 = vsel %vm1172, %v1316, 0.0
      %1387 = vadd.xlane.f32.xlu0 %v1386
      %v1388 = vpop.xlane.xlu0 %1387
      %v1389 = vsel %vm1172, %v1318, 0.0
      %1390 = vadd.xlane.f32.xlu0 %v1389
      %v1391 = vpop.xlane.xlu0 %1390
      %v1392 = vsel %vm1172, %v1320, 0.0
      %1393 = vadd.xlane.f32.xlu0 %v1392
      %v1394 = vpop.xlane.xlu0 %1393
      %v1395 = vsel %vm1172, %v1322, 0.0
      %1396 = vadd.xlane.f32.xlu0 %v1395
      %v1397 = vpop.xlane.xlu0 %1396
      %v1398 = vsel %vm1172, %v1324, 0.0
      %1399 = vadd.xlane.f32.xlu0 %v1398
      %v1400 = vpop.xlane.xlu0 %1399
      %v1401 = vsel %vm1172, %v1326, 0.0
      %1402 = vadd.xlane.f32.xlu0 %v1401
      %v1403 = vpop.xlane.xlu0 %1402
      %v1404 = vsel %vm1172, %v1328, 0.0
      %1405 = vadd.xlane.f32.xlu0 %v1404
      %v1406 = vpop.xlane.xlu0 %1405
      %v1407 = vsel %vm1172, %v1330, 0.0
      %1408 = vadd.xlane.f32.xlu0 %v1407
      %v1409 = vpop.xlane.xlu0 %1408
      %v1410 = vsel %vm1172, %v1332, 0.0
      %1411 = vadd.xlane.f32.xlu0 %v1410
      %v1412 = vpop.xlane.xlu0 %1411
      %v1413 = vsel %vm1172, %v1334, 0.0
      %1414 = vadd.xlane.f32.xlu0 %v1413
      %v1415 = vpop.xlane.xlu0 %1414
      %v1416 = vsel %vm1172, %v1336, 0.0
      %1417 = vadd.xlane.f32.xlu0 %v1416
      %v1418 = vpop.xlane.xlu0 %1417
      %v1419 = vsel %vm1172, %v1338, 0.0
      %1420 = vadd.xlane.f32.xlu0 %v1419
      %v1421 = vpop.xlane.xlu0 %1420
      %v1422 = vsel %vm1172, %v1340, 0.0
      %1423 = vadd.xlane.f32.xlu0 %v1422
      %v1424 = vpop.xlane.xlu0 %1423
      %v1425 = vsel %vm1172, %v1342, 0.0
      %1426 = vadd.xlane.f32.xlu0 %v1425
      %v1427 = vpop.xlane.xlu0 %1426
      %v1428 = vsel %vm1172, %v1344, 0.0
      %1429 = vadd.xlane.f32.xlu0 %v1428
      %v1430 = vpop.xlane.xlu0 %1429
      %v1431 = vsel %vm1172, %v1346, 0.0
      %1432 = vadd.xlane.f32.xlu0 %v1431
      %v1433 = vpop.xlane.xlu0 %1432
      %v1434 = vsel %vm1172, %v1348, 0.0
      %1435 = vadd.xlane.f32.xlu0 %v1434
      %v1436 = vpop.xlane.xlu0 %1435
      %v1437 = vsel %vm1172, %v1350, 0.0
      %1438 = vadd.xlane.f32.xlu0 %v1437
      %v1439 = vpop.xlane.xlu0 %1438
      %v1440 = vsel %vm1172, %v1352, 0.0
      %1441 = vadd.xlane.f32.xlu0 %v1440
      %v1442 = vpop.xlane.xlu0 %1441
      %v1443 = vsel %vm1172, %v1354, 0.0
      %1444 = vadd.xlane.f32.xlu0 %v1443
      %v1445 = vpop.xlane.xlu0 %1444
      %v1446 = vsel %vm1172, %v1356, 0.0
      %1447 = vadd.xlane.f32.xlu0 %v1446
      %v1448 = vpop.xlane.xlu0 %1447
      %v1449 = vsel %vm1172, %v1358, 0.0
      %1450 = vadd.xlane.f32.xlu0 %v1449
      %v1451 = vpop.xlane.xlu0 %1450
      %v1452 = vsel %vm1172, %v1360, 0.0
      %1453 = vadd.xlane.f32.xlu0 %v1452
      %v1454 = vpop.xlane.xlu0 %1453
      %v1455 = vsel %vm1172, %v1362, 0.0
      %1456 = vadd.xlane.f32.xlu0 %v1455
      %v1457 = vpop.xlane.xlu0 %1456
      %v1458 = vsel %vm1172, %v1364, 0.0
      %1459 = vadd.xlane.f32.xlu0 %v1458
      %v1460 = vpop.xlane.xlu0 %1459
      %v1461 = vrcp.pop %v1367
      %v1462 = vrcp.pop %v1370
      %v1463 = vrcp.pop %v1373
      %v1464 = vrcp.pop %v1376
      %v1465 = vrcp.pop %v1379
      %v1466 = vrcp.pop %v1382
      %v1467 = vrcp.pop %v1385
      %v1468 = vrcp.pop %v1388
      %v1469 = vrcp.pop %v1391
      %v1470 = vrcp.pop %v1394
      %v1471 = vrcp.pop %v1397
      %v1472 = vrcp.pop %v1400
      %v1473 = vrcp.pop %v1403
      %v1474 = vrcp.pop %v1406
      %v1475 = vrcp.pop %v1409
      %v1476 = vrcp.pop %v1412
      %v1477 = vrcp.pop %v1415
      %v1478 = vrcp.pop %v1418
      %v1479 = vrcp.pop %v1421
      %v1480 = vrcp.pop %v1424
      %v1481 = vrcp.pop %v1427
      %v1482 = vrcp.pop %v1430
      %v1483 = vrcp.pop %v1433
      %v1484 = vrcp.pop %v1436
      %v1485 = vrcp.pop %v1439
      %v1486 = vrcp.pop %v1442
      %v1487 = vrcp.pop %v1445
      %v1488 = vrcp.pop %v1448
      %v1489 = vrcp.pop %v1451
      %v1490 = vrcp.pop %v1454
      %v1491 = vrcp.pop %v1457
      %v1492 = vrcp.pop %v1460
      %v1493 = vmul.f32 %v1302, %v1461
      %v1494 = vmul.f32 %v1304, %v1462
      %v1495 = vmul.f32 %v1306, %v1463
      %v1496 = vmul.f32 %v1308, %v1464
      %v1497 = vmul.f32 %v1310, %v1465
      %v1498 = vmul.f32 %v1312, %v1466
      %v1499 = vmul.f32 %v1314, %v1467
      %v1500 = vmul.f32 %v1316, %v1468
      %v1501 = vmul.f32 %v1318, %v1469
      %v1502 = vmul.f32 %v1320, %v1470
      %v1503 = vmul.f32 %v1322, %v1471
      %v1504 = vmul.f32 %v1324, %v1472
      %v1505 = vmul.f32 %v1326, %v1473
      %v1506 = vmul.f32 %v1328, %v1474
      %v1507 = vmul.f32 %v1330, %v1475
      %v1508 = vmul.f32 %v1332, %v1476
      %v1509 = vmul.f32 %v1334, %v1477
      %v1510 = vmul.f32 %v1336, %v1478
      %v1511 = vmul.f32 %v1338, %v1479
      %v1512 = vmul.f32 %v1340, %v1480
      %v1513 = vmul.f32 %v1342, %v1481
      %v1514 = vmul.f32 %v1344, %v1482
      %v1515 = vmul.f32 %v1346, %v1483
      %v1516 = vmul.f32 %v1348, %v1484
      %v1517 = vmul.f32 %v1350, %v1485
      %v1518 = vmul.f32 %v1352, %v1486
      %v1519 = vmul.f32 %v1354, %v1487
      %v1520 = vmul.f32 %v1356, %v1488
      %v1521 = vmul.f32 %v1358, %v1489
      %v1522 = vmul.f32 %v1360, %v1490
      %v1523 = vmul.f32 %v1362, %v1491
      %v1524 = vmul.f32 %v1364, %v1492
      %1529 = vrot.lane.b32.xlu0 %v1018, 96
      %v1530 = vpop.permute.xlu0 %1529
      %1531 = vrot.lane.b32.xlu0 %v1019, 96
      %v1532 = vpop.permute.xlu0 %1531
      %1533 = vrot.lane.b32.xlu0 %v1020, 96
      %v1534 = vpop.permute.xlu0 %1533
      %1535 = vrot.lane.b32.xlu0 %v1021, 96
      %v1536 = vpop.permute.xlu0 %1535
      %v1538 = vsel %vm1022, %v1530, 0
      %v1541 = vsel %vm1022, %v1532, 0
      %v1544 = vsel %vm1022, %v1534, 0
      %v1547 = vsel %vm1022, %v1536, 0
      %vm1549 = vcmask 1043456
      %v1551 = vsel %vm1549, %v998, 0
      %1553 = vmatpush.bf16.msra.mxu0 0
      %1554 = vmatpush.bf16.msra.mxu0 0
      %1555 = vmatpush.bf16.msra.mxu0 0
      %1556 = vmatpush.bf16.msra.mxu0 0
      %1557 = vmatpush.bf16.msra.mxu0 0
      %1558 = vmatpush.bf16.msra.mxu0 0
      %1559 = vmatpush.bf16.msra.mxu0 0
      %1560 = vmatpush.bf16.msra.mxu0 %v1551
      %1561 = vmatmul.bf16.gmra.mxu0 %v1538
      %v1562 = vpop.f32.mrf.mxu0
      %v1563 = vadd.f32 0.0, %v1562
      %v1564 = vpop.f32.mrf.mxu0
      %v1565 = vadd.f32 0.0, %v1564
      %1566 = vmatmul.bf16.gmra.mxu0 %v1541
      %v1567 = vpop.f32.mrf.mxu0
      %v1568 = vadd.f32 0.0, %v1567
      %v1569 = vpop.f32.mrf.mxu0
      %v1570 = vadd.f32 0.0, %v1569
      %1571 = vmatmul.bf16.gmra.mxu0 %v1544
      %v1572 = vpop.f32.mrf.mxu0
      %v1573 = vadd.f32 0.0, %v1572
      %v1574 = vpop.f32.mrf.mxu0
      %v1575 = vadd.f32 0.0, %v1574
      %1576 = vmatmul.bf16.gmra.mxu0 %v1547
      %v1577 = vpop.f32.mrf.mxu0
      %v1578 = vadd.f32 0.0, %v1577
      %v1579 = vpop.f32.mrf.mxu0
      %v1580 = vadd.f32 0.0, %v1579
      %1581 = vdwg.mxu0
      %v1582 = vpack.c.bf16 %v1494, %v1493
      %v1583 = vpack.c.bf16 %v1496, %v1495
      %v1584 = vpack.c.bf16 %v1498, %v1497
      %v1585 = vpack.c.bf16 %v1500, %v1499
      %v1586 = vpack.c.bf16 %v1502, %v1501
      %v1587 = vpack.c.bf16 %v1504, %v1503
      %v1588 = vpack.c.bf16 %v1506, %v1505
      %v1589 = vpack.c.bf16 %v1508, %v1507
      %v1590 = vpack.c.bf16 %v1510, %v1509
      %v1591 = vpack.c.bf16 %v1512, %v1511
      %v1592 = vpack.c.bf16 %v1514, %v1513
      %v1593 = vpack.c.bf16 %v1516, %v1515
      %v1594 = vpack.c.bf16 %v1518, %v1517
      %v1595 = vpack.c.bf16 %v1520, %v1519
      %v1596 = vpack.c.bf16 %v1522, %v1521
      %v1597 = vpack.c.bf16 %v1524, %v1523
      %v1598 = vpack.c.bf16 %v1565, %v1563
      %v1599 = vpack.c.bf16 %v1570, %v1568
      %v1600 = vpack.c.bf16 %v1575, %v1573
      %v1601 = vpack.c.bf16 %v1580, %v1578
      %1618 = vrot.lane.b32.xlu0 %v1002, 120
      %v1619 = vpop.permute.xlu0 %1618
      %1620 = vrot.lane.b32.xlu0 %v1003, 120
      %v1621 = vpop.permute.xlu0 %1620
      %1622 = vrot.lane.b32.xlu0 %v1004, 120
      %v1623 = vpop.permute.xlu0 %1622
      %1624 = vrot.lane.b32.xlu0 %v1005, 120
      %v1625 = vpop.permute.xlu0 %1624
      %1626 = vrot.lane.b32.xlu0 %v1006, 120
      %v1627 = vpop.permute.xlu0 %1626
      %1628 = vrot.lane.b32.xlu0 %v1007, 120
      %v1629 = vpop.permute.xlu0 %1628
      %1630 = vrot.lane.b32.xlu0 %v1008, 120
      %v1631 = vpop.permute.xlu0 %1630
      %1632 = vrot.lane.b32.xlu0 %v1009, 120
      %v1633 = vpop.permute.xlu0 %1632
      %1634 = vrot.lane.b32.xlu0 %v1010, 120
      %v1635 = vpop.permute.xlu0 %1634
      %1636 = vrot.lane.b32.xlu0 %v1011, 120
      %v1637 = vpop.permute.xlu0 %1636
      %1638 = vrot.lane.b32.xlu0 %v1012, 120
      %v1639 = vpop.permute.xlu0 %1638
      %1640 = vrot.lane.b32.xlu0 %v1013, 120
      %v1641 = vpop.permute.xlu0 %1640
      %1642 = vrot.lane.b32.xlu0 %v1014, 120
      %v1643 = vpop.permute.xlu0 %1642
      %1644 = vrot.lane.b32.xlu0 %v1015, 120
      %v1645 = vpop.permute.xlu0 %1644
      %1646 = vrot.lane.b32.xlu0 %v1016, 120
      %v1647 = vpop.permute.xlu0 %1646
      %1648 = vrot.lane.b32.xlu0 %v1017, 120
      %v1649 = vpop.permute.xlu0 %1648
      %1650 = vrot.lane.b32.xlu0 %v1018, 120
      %v1651 = vpop.permute.xlu0 %1650
      %1652 = vrot.lane.b32.xlu0 %v1019, 120
      %v1653 = vpop.permute.xlu0 %1652
      %1654 = vrot.lane.b32.xlu0 %v1020, 120
      %v1655 = vpop.permute.xlu0 %1654
      %1656 = vrot.lane.b32.xlu0 %v1021, 120
      %v1657 = vpop.permute.xlu0 %1656
      %v1659 = vsel %vm1022, %v1619, 0
      %v1662 = vsel %vm1022, %v1621, 0
      %v1665 = vsel %vm1022, %v1623, 0
      %v1668 = vsel %vm1022, %v1625, 0
      %v1671 = vsel %vm1022, %v1627, 0
      %v1674 = vsel %vm1022, %v1629, 0
      %v1677 = vsel %vm1022, %v1631, 0
      %v1680 = vsel %vm1022, %v1633, 0
      %v1683 = vsel %vm1022, %v1635, 0
      %v1686 = vsel %vm1022, %v1637, 0
      %v1689 = vsel %vm1022, %v1639, 0
      %v1692 = vsel %vm1022, %v1641, 0
      %v1695 = vsel %vm1022, %v1643, 0
      %v1698 = vsel %vm1022, %v1645, 0
      %v1701 = vsel %vm1022, %v1647, 0
      %v1704 = vsel %vm1022, %v1649, 0
      %v1707 = vsel %vm1022, %v1651, 0
      %v1710 = vsel %vm1022, %v1653, 0
      %v1713 = vsel %vm1022, %v1655, 0
      %v1716 = vsel %vm1022, %v1657, 0
      %1718 = vmatpush.bf16.xpose.msra.mxu0 0
      %1719 = vmatpush.bf16.xpose.msra.mxu0 0
      %1720 = vmatpush.bf16.xpose.msra.mxu0 0
      %1721 = vmatpush.bf16.xpose.msra.mxu0 0
      %1722 = vmatpush.bf16.xpose.msra.mxu0 %v1716
      %1723 = vmatpush.bf16.xpose.msra.mxu0 %v1713
      %1724 = vmatpush.bf16.xpose.msra.mxu0 %v1710
      %1725 = vmatpush.bf16.xpose.msra.mxu0 %v1707
      %1726 = vmatmul.bf16.gmra.mxu0 %v1659
      %v1727 = vpop.f32.mrf.mxu0
      %v1728 = vadd.f32 0.0, %v1727
      %v1729 = vpop.f32.mrf.mxu0
      %v1730 = vadd.f32 0.0, %v1729
      %1731 = vmatmul.bf16.gmra.mxu0 %v1662
      %v1732 = vpop.f32.mrf.mxu0
      %v1733 = vadd.f32 0.0, %v1732
      %v1734 = vpop.f32.mrf.mxu0
      %v1735 = vadd.f32 0.0, %v1734
      %1736 = vmatmul.bf16.gmra.mxu0 %v1665
      %v1737 = vpop.f32.mrf.mxu0
      %v1738 = vadd.f32 0.0, %v1737
      %v1739 = vpop.f32.mrf.mxu0
      %v1740 = vadd.f32 0.0, %v1739
      %1741 = vmatmul.bf16.gmra.mxu0 %v1668
      %v1742 = vpop.f32.mrf.mxu0
      %v1743 = vadd.f32 0.0, %v1742
      %v1744 = vpop.f32.mrf.mxu0
      %v1745 = vadd.f32 0.0, %v1744
      %1746 = vmatmul.bf16.gmra.mxu0 %v1671
      %v1747 = vpop.f32.mrf.mxu0
      %v1748 = vadd.f32 0.0, %v1747
      %v1749 = vpop.f32.mrf.mxu0
      %v1750 = vadd.f32 0.0, %v1749
      %1751 = vmatmul.bf16.gmra.mxu0 %v1674
      %v1752 = vpop.f32.mrf.mxu0
      %v1753 = vadd.f32 0.0, %v1752
      %v1754 = vpop.f32.mrf.mxu0
      %v1755 = vadd.f32 0.0, %v1754
      %1756 = vmatmul.bf16.gmra.mxu0 %v1677
      %v1757 = vpop.f32.mrf.mxu0
      %v1758 = vadd.f32 0.0, %v1757
      %v1759 = vpop.f32.mrf.mxu0
      %v1760 = vadd.f32 0.0, %v1759
      %1761 = vmatmul.bf16.gmra.mxu0 %v1680
      %v1762 = vpop.f32.mrf.mxu0
      %v1763 = vadd.f32 0.0, %v1762
      %v1764 = vpop.f32.mrf.mxu0
      %v1765 = vadd.f32 0.0, %v1764
      %1766 = vmatmul.bf16.gmra.mxu0 %v1683
      %v1767 = vpop.f32.mrf.mxu0
      %v1768 = vadd.f32 0.0, %v1767
      %v1769 = vpop.f32.mrf.mxu0
      %v1770 = vadd.f32 0.0, %v1769
      %1771 = vmatmul.bf16.gmra.mxu0 %v1686
      %v1772 = vpop.f32.mrf.mxu0
      %v1773 = vadd.f32 0.0, %v1772
      %v1774 = vpop.f32.mrf.mxu0
      %v1775 = vadd.f32 0.0, %v1774
      %1776 = vmatmul.bf16.gmra.mxu0 %v1689
      %v1777 = vpop.f32.mrf.mxu0
      %v1778 = vadd.f32 0.0, %v1777
      %v1779 = vpop.f32.mrf.mxu0
      %v1780 = vadd.f32 0.0, %v1779
      %1781 = vmatmul.bf16.gmra.mxu0 %v1692
      %v1782 = vpop.f32.mrf.mxu0
      %v1783 = vadd.f32 0.0, %v1782
      %v1784 = vpop.f32.mrf.mxu0
      %v1785 = vadd.f32 0.0, %v1784
      %1786 = vmatmul.bf16.gmra.mxu0 %v1695
      %v1787 = vpop.f32.mrf.mxu0
      %v1788 = vadd.f32 0.0, %v1787
      %v1789 = vpop.f32.mrf.mxu0
      %v1790 = vadd.f32 0.0, %v1789
      %1791 = vmatmul.bf16.gmra.mxu0 %v1698
      %v1792 = vpop.f32.mrf.mxu0
      %v1793 = vadd.f32 0.0, %v1792
      %v1794 = vpop.f32.mrf.mxu0
      %v1795 = vadd.f32 0.0, %v1794
      %1796 = vmatmul.bf16.gmra.mxu0 %v1701
      %v1797 = vpop.f32.mrf.mxu0
      %v1798 = vadd.f32 0.0, %v1797
      %v1799 = vpop.f32.mrf.mxu0
      %v1800 = vadd.f32 0.0, %v1799
      %1801 = vmatmul.bf16.gmra.mxu0 %v1704
      %v1802 = vpop.f32.mrf.mxu0
      %v1803 = vadd.f32 0.0, %v1802
      %v1804 = vpop.f32.mrf.mxu0
      %v1805 = vadd.f32 0.0, %v1804
      %1806 = vdwg.mxu0
      %v1807 = vsel %vm1172, %v1728, -inf
      %1808 = vmax.xlane.f32.xlu0 %v1807
      %v1809 = vpop.xlane.xlu0 %1808
      %v1810 = vsel %vm1172, %v1730, -inf
      %1811 = vmax.xlane.f32.xlu0 %v1810
      %v1812 = vpop.xlane.xlu0 %1811
      %v1813 = vsel %vm1172, %v1733, -inf
      %1814 = vmax.xlane.f32.xlu0 %v1813
      %v1815 = vpop.xlane.xlu0 %1814
      %v1816 = vsel %vm1172, %v1735, -inf
      %1817 = vmax.xlane.f32.xlu0 %v1816
      %v1818 = vpop.xlane.xlu0 %1817
      %v1819 = vsel %vm1172, %v1738, -inf
      %1820 = vmax.xlane.f32.xlu0 %v1819
      %v1821 = vpop.xlane.xlu0 %1820
      %v1822 = vsel %vm1172, %v1740, -inf
      %1823 = vmax.xlane.f32.xlu0 %v1822
      %v1824 = vpop.xlane.xlu0 %1823
      %v1825 = vsel %vm1172, %v1743, -inf
      %1826 = vmax.xlane.f32.xlu0 %v1825
      %v1827 = vpop.xlane.xlu0 %1826
      %v1828 = vsel %vm1172, %v1745, -inf
      %1829 = vmax.xlane.f32.xlu0 %v1828
      %v1830 = vpop.xlane.xlu0 %1829
      %v1831 = vsel %vm1172, %v1748, -inf
      %1832 = vmax.xlane.f32.xlu0 %v1831
      %v1833 = vpop.xlane.xlu0 %1832
      %v1834 = vsel %vm1172, %v1750, -inf
      %1835 = vmax.xlane.f32.xlu0 %v1834
      %v1836 = vpop.xlane.xlu0 %1835
      %v1837 = vsel %vm1172, %v1753, -inf
      %1838 = vmax.xlane.f32.xlu0 %v1837
      %v1839 = vpop.xlane.xlu0 %1838
      %v1840 = vsel %vm1172, %v1755, -inf
      %1841 = vmax.xlane.f32.xlu0 %v1840
      %v1842 = vpop.xlane.xlu0 %1841
      %v1843 = vsel %vm1172, %v1758, -inf
      %1844 = vmax.xlane.f32.xlu0 %v1843
      %v1845 = vpop.xlane.xlu0 %1844
      %v1846 = vsel %vm1172, %v1760, -inf
      %1847 = vmax.xlane.f32.xlu0 %v1846
      %v1848 = vpop.xlane.xlu0 %1847
      %v1849 = vsel %vm1172, %v1763, -inf
      %1850 = vmax.xlane.f32.xlu0 %v1849
      %v1851 = vpop.xlane.xlu0 %1850
      %v1852 = vsel %vm1172, %v1765, -inf
      %1853 = vmax.xlane.f32.xlu0 %v1852
      %v1854 = vpop.xlane.xlu0 %1853
      %v1855 = vsel %vm1172, %v1768, -inf
      %1856 = vmax.xlane.f32.xlu0 %v1855
      %v1857 = vpop.xlane.xlu0 %1856
      %v1858 = vsel %vm1172, %v1770, -inf
      %1859 = vmax.xlane.f32.xlu0 %v1858
      %v1860 = vpop.xlane.xlu0 %1859
      %v1861 = vsel %vm1172, %v1773, -inf
      %1862 = vmax.xlane.f32.xlu0 %v1861
      %v1863 = vpop.xlane.xlu0 %1862
      %v1864 = vsel %vm1172, %v1775, -inf
      %1865 = vmax.xlane.f32.xlu0 %v1864
      %v1866 = vpop.xlane.xlu0 %1865
      %v1867 = vsel %vm1172, %v1778, -inf
      %1868 = vmax.xlane.f32.xlu0 %v1867
      %v1869 = vpop.xlane.xlu0 %1868
      %v1870 = vsel %vm1172, %v1780, -inf
      %1871 = vmax.xlane.f32.xlu0 %v1870
      %v1872 = vpop.xlane.xlu0 %1871
      %v1873 = vsel %vm1172, %v1783, -inf
      %1874 = vmax.xlane.f32.xlu0 %v1873
      %v1875 = vpop.xlane.xlu0 %1874
      %v1876 = vsel %vm1172, %v1785, -inf
      %1877 = vmax.xlane.f32.xlu0 %v1876
      %v1878 = vpop.xlane.xlu0 %1877
      %v1879 = vsel %vm1172, %v1788, -inf
      %1880 = vmax.xlane.f32.xlu0 %v1879
      %v1881 = vpop.xlane.xlu0 %1880
      %v1882 = vsel %vm1172, %v1790, -inf
      %1883 = vmax.xlane.f32.xlu0 %v1882
      %v1884 = vpop.xlane.xlu0 %1883
      %v1885 = vsel %vm1172, %v1793, -inf
      %1886 = vmax.xlane.f32.xlu0 %v1885
      %v1887 = vpop.xlane.xlu0 %1886
      %v1888 = vsel %vm1172, %v1795, -inf
      %1889 = vmax.xlane.f32.xlu0 %v1888
      %v1890 = vpop.xlane.xlu0 %1889
      %v1891 = vsel %vm1172, %v1798, -inf
      %1892 = vmax.xlane.f32.xlu0 %v1891
      %v1893 = vpop.xlane.xlu0 %1892
      %v1894 = vsel %vm1172, %v1800, -inf
      %1895 = vmax.xlane.f32.xlu0 %v1894
      %v1896 = vpop.xlane.xlu0 %1895
      %v1897 = vsel %vm1172, %v1803, -inf
      %1898 = vmax.xlane.f32.xlu0 %v1897
      %v1899 = vpop.xlane.xlu0 %1898
      %v1900 = vsel %vm1172, %v1805, -inf
      %1901 = vmax.xlane.f32.xlu0 %v1900
      %v1902 = vpop.xlane.xlu0 %1901
      %v1903 = vsub.f32 %v1728, %v1809
      %v1904 = vsub.f32 %v1730, %v1812
      %v1905 = vsub.f32 %v1733, %v1815
      %v1906 = vsub.f32 %v1735, %v1818
      %v1907 = vsub.f32 %v1738, %v1821
      %v1908 = vsub.f32 %v1740, %v1824
      %v1909 = vsub.f32 %v1743, %v1827
      %v1910 = vsub.f32 %v1745, %v1830
      %v1911 = vsub.f32 %v1748, %v1833
      %v1912 = vsub.f32 %v1750, %v1836
      %v1913 = vsub.f32 %v1753, %v1839
      %v1914 = vsub.f32 %v1755, %v1842
      %v1915 = vsub.f32 %v1758, %v1845
      %v1916 = vsub.f32 %v1760, %v1848
      %v1917 = vsub.f32 %v1763, %v1851
      %v1918 = vsub.f32 %v1765, %v1854
      %v1919 = vsub.f32 %v1768, %v1857
      %v1920 = vsub.f32 %v1770, %v1860
      %v1921 = vsub.f32 %v1773, %v1863
      %v1922 = vsub.f32 %v1775, %v1866
      %v1923 = vsub.f32 %v1778, %v1869
      %v1924 = vsub.f32 %v1780, %v1872
      %v1925 = vsub.f32 %v1783, %v1875
      %v1926 = vsub.f32 %v1785, %v1878
      %v1927 = vsub.f32 %v1788, %v1881
      %v1928 = vsub.f32 %v1790, %v1884
      %v1929 = vsub.f32 %v1793, %v1887
      %v1930 = vsub.f32 %v1795, %v1890
      %v1931 = vsub.f32 %v1798, %v1893
      %v1932 = vsub.f32 %v1800, %v1896
      %v1933 = vsub.f32 %v1803, %v1899
      %v1934 = vsub.f32 %v1805, %v1902
      %v1935 = vmul.f32 %v1903, 1.442695
      %v1936 = vpow.pop %v1935
      %v1937 = vmul.f32 %v1904, 1.442695
      %v1938 = vpow.pop %v1937
      %v1939 = vmul.f32 %v1905, 1.442695
      %v1940 = vpow.pop %v1939
      %v1941 = vmul.f32 %v1906, 1.442695
      %v1942 = vpow.pop %v1941
      %v1943 = vmul.f32 %v1907, 1.442695
      %v1944 = vpow.pop %v1943
      %v1945 = vmul.f32 %v1908, 1.442695
      %v1946 = vpow.pop %v1945
      %v1947 = vmul.f32 %v1909, 1.442695
      %v1948 = vpow.pop %v1947
      %v1949 = vmul.f32 %v1910, 1.442695
      %v1950 = vpow.pop %v1949
      %v1951 = vmul.f32 %v1911, 1.442695
      %v1952 = vpow.pop %v1951
      %v1953 = vmul.f32 %v1912, 1.442695
      %v1954 = vpow.pop %v1953
      %v1955 = vmul.f32 %v1913, 1.442695
      %v1956 = vpow.pop %v1955
      %v1957 = vmul.f32 %v1914, 1.442695
      %v1958 = vpow.pop %v1957
      %v1959 = vmul.f32 %v1915, 1.442695
      %v1960 = vpow.pop %v1959
      %v1961 = vmul.f32 %v1916, 1.442695
      %v1962 = vpow.pop %v1961
      %v1963 = vmul.f32 %v1917, 1.442695
      %v1964 = vpow.pop %v1963
      %v1965 = vmul.f32 %v1918, 1.442695
      %v1966 = vpow.pop %v1965
      %v1967 = vmul.f32 %v1919, 1.442695
      %v1968 = vpow.pop %v1967
      %v1969 = vmul.f32 %v1920, 1.442695
      %v1970 = vpow.pop %v1969
      %v1971 = vmul.f32 %v1921, 1.442695
      %v1972 = vpow.pop %v1971
      %v1973 = vmul.f32 %v1922, 1.442695
      %v1974 = vpow.pop %v1973
      %v1975 = vmul.f32 %v1923, 1.442695
      %v1976 = vpow.pop %v1975
      %v1977 = vmul.f32 %v1924, 1.442695
      %v1978 = vpow.pop %v1977
      %v1979 = vmul.f32 %v1925, 1.442695
      %v1980 = vpow.pop %v1979
      %v1981 = vmul.f32 %v1926, 1.442695
      %v1982 = vpow.pop %v1981
      %v1983 = vmul.f32 %v1927, 1.442695
      %v1984 = vpow.pop %v1983
      %v1985 = vmul.f32 %v1928, 1.442695
      %v1986 = vpow.pop %v1985
      %v1987 = vmul.f32 %v1929, 1.442695
      %v1988 = vpow.pop %v1987
      %v1989 = vmul.f32 %v1930, 1.442695
      %v1990 = vpow.pop %v1989
      %v1991 = vmul.f32 %v1931, 1.442695
      %v1992 = vpow.pop %v1991
      %v1993 = vmul.f32 %v1932, 1.442695
      %v1994 = vpow.pop %v1993
      %v1995 = vmul.f32 %v1933, 1.442695
      %v1996 = vpow.pop %v1995
      %v1997 = vmul.f32 %v1934, 1.442695
      %v1998 = vpow.pop %v1997
      %v1999 = vsel %vm1172, %v1936, 0.0
      %2000 = vadd.xlane.f32.xlu0 %v1999
      %v2001 = vpop.xlane.xlu0 %2000
      %v2002 = vsel %vm1172, %v1938, 0.0
      %2003 = vadd.xlane.f32.xlu0 %v2002
      %v2004 = vpop.xlane.xlu0 %2003
      %v2005 = vsel %vm1172, %v1940, 0.0
      %2006 = vadd.xlane.f32.xlu0 %v2005
      %v2007 = vpop.xlane.xlu0 %2006
      %v2008 = vsel %vm1172, %v1942, 0.0
      %2009 = vadd.xlane.f32.xlu0 %v2008
      %v2010 = vpop.xlane.xlu0 %2009
      %v2011 = vsel %vm1172, %v1944, 0.0
      %2012 = vadd.xlane.f32.xlu0 %v2011
      %v2013 = vpop.xlane.xlu0 %2012
      %v2014 = vsel %vm1172, %v1946, 0.0
      %2015 = vadd.xlane.f32.xlu0 %v2014
      %v2016 = vpop.xlane.xlu0 %2015
      %v2017 = vsel %vm1172, %v1948, 0.0
      %2018 = vadd.xlane.f32.xlu0 %v2017
      %v2019 = vpop.xlane.xlu0 %2018
      %v2020 = vsel %vm1172, %v1950, 0.0
      %2021 = vadd.xlane.f32.xlu0 %v2020
      %v2022 = vpop.xlane.xlu0 %2021
      %v2023 = vsel %vm1172, %v1952, 0.0
      %2024 = vadd.xlane.f32.xlu0 %v2023
      %v2025 = vpop.xlane.xlu0 %2024
      %v2026 = vsel %vm1172, %v1954, 0.0
      %2027 = vadd.xlane.f32.xlu0 %v2026
      %v2028 = vpop.xlane.xlu0 %2027
      %v2029 = vsel %vm1172, %v1956, 0.0
      %2030 = vadd.xlane.f32.xlu0 %v2029
      %v2031 = vpop.xlane.xlu0 %2030
      %v2032 = vsel %vm1172, %v1958, 0.0
      %2033 = vadd.xlane.f32.xlu0 %v2032
      %v2034 = vpop.xlane.xlu0 %2033
      %v2035 = vsel %vm1172, %v1960, 0.0
      %2036 = vadd.xlane.f32.xlu0 %v2035
      %v2037 = vpop.xlane.xlu0 %2036
      %v2038 = vsel %vm1172, %v1962, 0.0
      %2039 = vadd.xlane.f32.xlu0 %v2038
      %v2040 = vpop.xlane.xlu0 %2039
      %v2041 = vsel %vm1172, %v1964, 0.0
      %2042 = vadd.xlane.f32.xlu0 %v2041
      %v2043 = vpop.xlane.xlu0 %2042
      %v2044 = vsel %vm1172, %v1966, 0.0
      %2045 = vadd.xlane.f32.xlu0 %v2044
      %v2046 = vpop.xlane.xlu0 %2045
      %v2047 = vsel %vm1172, %v1968, 0.0
      %2048 = vadd.xlane.f32.xlu0 %v2047
      %v2049 = vpop.xlane.xlu0 %2048
      %v2050 = vsel %vm1172, %v1970, 0.0
      %2051 = vadd.xlane.f32.xlu0 %v2050
      %v2052 = vpop.xlane.xlu0 %2051
      %v2053 = vsel %vm1172, %v1972, 0.0
      %2054 = vadd.xlane.f32.xlu0 %v2053
      %v2055 = vpop.xlane.xlu0 %2054
      %v2056 = vsel %vm1172, %v1974, 0.0
      %2057 = vadd.xlane.f32.xlu0 %v2056
      %v2058 = vpop.xlane.xlu0 %2057
      %v2059 = vsel %vm1172, %v1976, 0.0
      %2060 = vadd.xlane.f32.xlu0 %v2059
      %v2061 = vpop.xlane.xlu0 %2060
      %v2062 = vsel %vm1172, %v1978, 0.0
      %2063 = vadd.xlane.f32.xlu0 %v2062
      %v2064 = vpop.xlane.xlu0 %2063
      %v2065 = vsel %vm1172, %v1980, 0.0
      %2066 = vadd.xlane.f32.xlu0 %v2065
      %v2067 = vpop.xlane.xlu0 %2066
      %v2068 = vsel %vm1172, %v1982, 0.0
      %2069 = vadd.xlane.f32.xlu0 %v2068
      %v2070 = vpop.xlane.xlu0 %2069
      %v2071 = vsel %vm1172, %v1984, 0.0
      %2072 = vadd.xlane.f32.xlu0 %v2071
      %v2073 = vpop.xlane.xlu0 %2072
      %v2074 = vsel %vm1172, %v1986, 0.0
      %2075 = vadd.xlane.f32.xlu0 %v2074
      %v2076 = vpop.xlane.xlu0 %2075
      %v2077 = vsel %vm1172, %v1988, 0.0
      %2078 = vadd.xlane.f32.xlu0 %v2077
      %v2079 = vpop.xlane.xlu0 %2078
      %v2080 = vsel %vm1172, %v1990, 0.0
      %2081 = vadd.xlane.f32.xlu0 %v2080
      %v2082 = vpop.xlane.xlu0 %2081
      %v2083 = vsel %vm1172, %v1992, 0.0
      %2084 = vadd.xlane.f32.xlu0 %v2083
      %v2085 = vpop.xlane.xlu0 %2084
      %v2086 = vsel %vm1172, %v1994, 0.0
      %2087 = vadd.xlane.f32.xlu0 %v2086
      %v2088 = vpop.xlane.xlu0 %2087
      %v2089 = vsel %vm1172, %v1996, 0.0
      %2090 = vadd.xlane.f32.xlu0 %v2089
      %v2091 = vpop.xlane.xlu0 %2090
      %v2092 = vsel %vm1172, %v1998, 0.0
      %2093 = vadd.xlane.f32.xlu0 %v2092
      %v2094 = vpop.xlane.xlu0 %2093
      %v2095 = vrcp.pop %v2001
      %v2096 = vrcp.pop %v2004
      %v2097 = vrcp.pop %v2007
      %v2098 = vrcp.pop %v2010
      %v2099 = vrcp.pop %v2013
      %v2100 = vrcp.pop %v2016
      %v2101 = vrcp.pop %v2019
      %v2102 = vrcp.pop %v2022
      %v2103 = vrcp.pop %v2025
      %v2104 = vrcp.pop %v2028
      %v2105 = vrcp.pop %v2031
      %v2106 = vrcp.pop %v2034
      %v2107 = vrcp.pop %v2037
      %v2108 = vrcp.pop %v2040
      %v2109 = vrcp.pop %v2043
      %v2110 = vrcp.pop %v2046
      %v2111 = vrcp.pop %v2049
      %v2112 = vrcp.pop %v2052
      %v2113 = vrcp.pop %v2055
      %v2114 = vrcp.pop %v2058
      %v2115 = vrcp.pop %v2061
      %v2116 = vrcp.pop %v2064
      %v2117 = vrcp.pop %v2067
      %v2118 = vrcp.pop %v2070
      %v2119 = vrcp.pop %v2073
      %v2120 = vrcp.pop %v2076
      %v2121 = vrcp.pop %v2079
      %v2122 = vrcp.pop %v2082
      %v2123 = vrcp.pop %v2085
      %v2124 = vrcp.pop %v2088
      %v2125 = vrcp.pop %v2091
      %v2126 = vrcp.pop %v2094
      %v2127 = vmul.f32 %v1936, %v2095
      %v2128 = vmul.f32 %v1938, %v2096
      %v2129 = vmul.f32 %v1940, %v2097
      %v2130 = vmul.f32 %v1942, %v2098
      %v2131 = vmul.f32 %v1944, %v2099
      %v2132 = vmul.f32 %v1946, %v2100
      %v2133 = vmul.f32 %v1948, %v2101
      %v2134 = vmul.f32 %v1950, %v2102
      %v2135 = vmul.f32 %v1952, %v2103
      %v2136 = vmul.f32 %v1954, %v2104
      %v2137 = vmul.f32 %v1956, %v2105
      %v2138 = vmul.f32 %v1958, %v2106
      %v2139 = vmul.f32 %v1960, %v2107
      %v2140 = vmul.f32 %v1962, %v2108
      %v2141 = vmul.f32 %v1964, %v2109
      %v2142 = vmul.f32 %v1966, %v2110
      %v2143 = vmul.f32 %v1968, %v2111
      %v2144 = vmul.f32 %v1970, %v2112
      %v2145 = vmul.f32 %v1972, %v2113
      %v2146 = vmul.f32 %v1974, %v2114
      %v2147 = vmul.f32 %v1976, %v2115
      %v2148 = vmul.f32 %v1978, %v2116
      %v2149 = vmul.f32 %v1980, %v2117
      %v2150 = vmul.f32 %v1982, %v2118
      %v2151 = vmul.f32 %v1984, %v2119
      %v2152 = vmul.f32 %v1986, %v2120
      %v2153 = vmul.f32 %v1988, %v2121
      %v2154 = vmul.f32 %v1990, %v2122
      %v2155 = vmul.f32 %v1992, %v2123
      %v2156 = vmul.f32 %v1994, %v2124
      %v2157 = vmul.f32 %v1996, %v2125
      %v2158 = vmul.f32 %v1998, %v2126
      %2159 = vrot.lane.b32.xlu0 %v1018, 88
      %v2160 = vpop.permute.xlu0 %2159
      %2161 = vrot.lane.b32.xlu0 %v1019, 88
      %v2162 = vpop.permute.xlu0 %2161
      %2163 = vrot.lane.b32.xlu0 %v1020, 88
      %v2164 = vpop.permute.xlu0 %2163
      %2165 = vrot.lane.b32.xlu0 %v1021, 88
      %v2166 = vpop.permute.xlu0 %2165
      %v2168 = vsel %vm1022, %v2160, 0
      %v2171 = vsel %vm1022, %v2162, 0
      %v2174 = vsel %vm1022, %v2164, 0
      %v2177 = vsel %vm1022, %v2166, 0
      %v2180 = vsel %vm1549, %v999, 0
      %2182 = vmatpush.bf16.msra.mxu0 0
      %2183 = vmatpush.bf16.msra.mxu0 0
      %2184 = vmatpush.bf16.msra.mxu0 0
      %2185 = vmatpush.bf16.msra.mxu0 0
      %2186 = vmatpush.bf16.msra.mxu0 0
      %2187 = vmatpush.bf16.msra.mxu0 0
      %2188 = vmatpush.bf16.msra.mxu0 0
      %2189 = vmatpush.bf16.msra.mxu0 %v2180
      %2190 = vmatmul.bf16.gmra.mxu0 %v2168
      %v2191 = vpop.f32.mrf.mxu0
      %v2192 = vadd.f32 0.0, %v2191
      %v2193 = vpop.f32.mrf.mxu0
      %v2194 = vadd.f32 0.0, %v2193
      %2195 = vmatmul.bf16.gmra.mxu0 %v2171
      %v2196 = vpop.f32.mrf.mxu0
      %v2197 = vadd.f32 0.0, %v2196
      %v2198 = vpop.f32.mrf.mxu0
      %v2199 = vadd.f32 0.0, %v2198
      %2200 = vmatmul.bf16.gmra.mxu0 %v2174
      %v2201 = vpop.f32.mrf.mxu0
      %v2202 = vadd.f32 0.0, %v2201
      %v2203 = vpop.f32.mrf.mxu0
      %v2204 = vadd.f32 0.0, %v2203
      %2205 = vmatmul.bf16.gmra.mxu0 %v2177
      %v2206 = vpop.f32.mrf.mxu0
      %v2207 = vadd.f32 0.0, %v2206
      %v2208 = vpop.f32.mrf.mxu0
      %v2209 = vadd.f32 0.0, %v2208
      %2210 = vdwg.mxu0
      %v2211 = vpack.c.bf16 %v2128, %v2127
      %v2212 = vpack.c.bf16 %v2130, %v2129
      %v2213 = vpack.c.bf16 %v2132, %v2131
      %v2214 = vpack.c.bf16 %v2134, %v2133
      %v2215 = vpack.c.bf16 %v2136, %v2135
      %v2216 = vpack.c.bf16 %v2138, %v2137
      %v2217 = vpack.c.bf16 %v2140, %v2139
      %v2218 = vpack.c.bf16 %v2142, %v2141
      %v2219 = vpack.c.bf16 %v2144, %v2143
      %v2220 = vpack.c.bf16 %v2146, %v2145
      %v2221 = vpack.c.bf16 %v2148, %v2147
      %v2222 = vpack.c.bf16 %v2150, %v2149
      %v2223 = vpack.c.bf16 %v2152, %v2151
      %v2224 = vpack.c.bf16 %v2154, %v2153
      %v2225 = vpack.c.bf16 %v2156, %v2155
      %v2226 = vpack.c.bf16 %v2158, %v2157
      %v2227 = vpack.c.bf16 %v2194, %v2192
      %v2228 = vpack.c.bf16 %v2199, %v2197
      %v2229 = vpack.c.bf16 %v2204, %v2202
      %v2230 = vpack.c.bf16 %v2209, %v2207
      %v2232 = vsel %vm1172, %v2211, 0
      %v2235 = vsel %vm1172, %v2212, 0
      %v2238 = vsel %vm1172, %v2213, 0
      %v2241 = vsel %vm1172, %v2214, 0
      %v2244 = vsel %vm1172, %v2215, 0
      %v2247 = vsel %vm1172, %v2216, 0
      %v2250 = vsel %vm1172, %v2217, 0
      %v2253 = vsel %vm1172, %v2218, 0
      %v2256 = vsel %vm1172, %v2219, 0
      %v2259 = vsel %vm1172, %v2220, 0
      %v2262 = vsel %vm1172, %v2221, 0
      %v2265 = vsel %vm1172, %v2222, 0
      %v2268 = vsel %vm1172, %v2223, 0
      %v2271 = vsel %vm1172, %v2224, 0
      %v2274 = vsel %vm1172, %v2225, 0
      %v2277 = vsel %vm1172, %v2226, 0
      %2279 = vmatpush.bf16.msra.mxu0 0
      %2280 = vmatpush.bf16.msra.mxu0 0
      %2281 = vmatpush.bf16.msra.mxu0 0
      %2282 = vmatpush.bf16.msra.mxu0 0
      %2283 = vmatpush.bf16.msra.mxu0 %v2230
      %2284 = vmatpush.bf16.msra.mxu0 %v2229
      %2285 = vmatpush.bf16.msra.mxu0 %v2228
      %2286 = vmatpush.bf16.msra.mxu0 %v2227
      %2287 = vmatmul.bf16.gmra.mxu0 %v2232
      %v2288 = vpop.f32.mrf.mxu0
      %v2289 = vadd.f32 0.0, %v2288
      %v2290 = vpop.f32.mrf.mxu0
      %v2291 = vadd.f32 0.0, %v2290
      %2292 = vmatmul.bf16.gmra.mxu0 %v2235
      %v2293 = vpop.f32.mrf.mxu0
      %v2294 = vadd.f32 0.0, %v2293
      %v2295 = vpop.f32.mrf.mxu0
      %v2296 = vadd.f32 0.0, %v2295
      %2297 = vmatmul.bf16.gmra.mxu0 %v2238
      %v2298 = vpop.f32.mrf.mxu0
      %v2299 = vadd.f32 0.0, %v2298
      %v2300 = vpop.f32.mrf.mxu0
      %v2301 = vadd.f32 0.0, %v2300
      %2302 = vmatmul.bf16.gmra.mxu0 %v2241
      %v2303 = vpop.f32.mrf.mxu0
      %v2304 = vadd.f32 0.0, %v2303
      %v2305 = vpop.f32.mrf.mxu0
      %v2306 = vadd.f32 0.0, %v2305
      %2307 = vmatmul.bf16.gmra.mxu0 %v2244
      %v2308 = vpop.f32.mrf.mxu0
      %v2309 = vadd.f32 0.0, %v2308
      %v2310 = vpop.f32.mrf.mxu0
      %v2311 = vadd.f32 0.0, %v2310
      %2312 = vmatmul.bf16.gmra.mxu0 %v2247
      %v2313 = vpop.f32.mrf.mxu0
      %v2314 = vadd.f32 0.0, %v2313
      %v2315 = vpop.f32.mrf.mxu0
      %v2316 = vadd.f32 0.0, %v2315
      %2317 = vmatmul.bf16.gmra.mxu0 %v2250
      %v2318 = vpop.f32.mrf.mxu0
      %v2319 = vadd.f32 0.0, %v2318
      %v2320 = vpop.f32.mrf.mxu0
      %v2321 = vadd.f32 0.0, %v2320
      %2322 = vmatmul.bf16.gmra.mxu0 %v2253
      %v2323 = vpop.f32.mrf.mxu0
      %v2324 = vadd.f32 0.0, %v2323
      %v2325 = vpop.f32.mrf.mxu0
      %v2326 = vadd.f32 0.0, %v2325
      %2327 = vmatmul.bf16.gmra.mxu0 %v2256
      %v2328 = vpop.f32.mrf.mxu0
      %v2329 = vadd.f32 0.0, %v2328
      %v2330 = vpop.f32.mrf.mxu0
      %v2331 = vadd.f32 0.0, %v2330
      %2332 = vmatmul.bf16.gmra.mxu0 %v2259
      %v2333 = vpop.f32.mrf.mxu0
      %v2334 = vadd.f32 0.0, %v2333
      %v2335 = vpop.f32.mrf.mxu0
      %v2336 = vadd.f32 0.0, %v2335
      %2337 = vmatmul.bf16.gmra.mxu0 %v2262
      %v2338 = vpop.f32.mrf.mxu0
      %v2339 = vadd.f32 0.0, %v2338
      %v2340 = vpop.f32.mrf.mxu0
      %v2341 = vadd.f32 0.0, %v2340
      %2342 = vmatmul.bf16.gmra.mxu0 %v2265
      %v2343 = vpop.f32.mrf.mxu0
      %v2344 = vadd.f32 0.0, %v2343
      %v2345 = vpop.f32.mrf.mxu0
      %v2346 = vadd.f32 0.0, %v2345
      %2347 = vmatmul.bf16.gmra.mxu0 %v2268
      %v2348 = vpop.f32.mrf.mxu0
      %v2349 = vadd.f32 0.0, %v2348
      %v2350 = vpop.f32.mrf.mxu0
      %v2351 = vadd.f32 0.0, %v2350
      %2352 = vmatmul.bf16.gmra.mxu0 %v2271
      %v2353 = vpop.f32.mrf.mxu0
      %v2354 = vadd.f32 0.0, %v2353
      %v2355 = vpop.f32.mrf.mxu0
      %v2356 = vadd.f32 0.0, %v2355
      %2357 = vmatmul.bf16.gmra.mxu0 %v2274
      %v2358 = vpop.f32.mrf.mxu0
      %v2359 = vadd.f32 0.0, %v2358
      %v2360 = vpop.f32.mrf.mxu0
      %v2361 = vadd.f32 0.0, %v2360
      %2362 = vmatmul.bf16.gmra.mxu0 %v2277
      %v2363 = vpop.f32.mrf.mxu0
      %v2364 = vadd.f32 0.0, %v2363
      %v2365 = vpop.f32.mrf.mxu0
      %v2366 = vadd.f32 0.0, %v2365
      %2367 = vdwg.mxu0
      %v2369 = vsel %vm1172, %v1582, 0
      %v2372 = vsel %vm1172, %v1583, 0
      %v2375 = vsel %vm1172, %v1584, 0
      %v2378 = vsel %vm1172, %v1585, 0
      %v2381 = vsel %vm1172, %v1586, 0
      %v2384 = vsel %vm1172, %v1587, 0
      %v2387 = vsel %vm1172, %v1588, 0
      %v2390 = vsel %vm1172, %v1589, 0
      %v2393 = vsel %vm1172, %v1590, 0
      %v2396 = vsel %vm1172, %v1591, 0
      %v2399 = vsel %vm1172, %v1592, 0
      %v2402 = vsel %vm1172, %v1593, 0
      %v2405 = vsel %vm1172, %v1594, 0
      %v2408 = vsel %vm1172, %v1595, 0
      %v2411 = vsel %vm1172, %v1596, 0
      %v2414 = vsel %vm1172, %v1597, 0
      %2416 = vmatpush.bf16.msra.mxu0 0
      %2417 = vmatpush.bf16.msra.mxu0 0
      %2418 = vmatpush.bf16.msra.mxu0 0
      %2419 = vmatpush.bf16.msra.mxu0 0
      %2420 = vmatpush.bf16.msra.mxu0 %v1601
      %2421 = vmatpush.bf16.msra.mxu0 %v1600
      %2422 = vmatpush.bf16.msra.mxu0 %v1599
      %2423 = vmatpush.bf16.msra.mxu0 %v1598
      %2424 = vmatmul.bf16.gmra.mxu0 %v2369
      %v2425 = vpop.f32.mrf.mxu0
      %v2426 = vadd.f32 %v2289, %v2425
      %v2427 = vpop.f32.mrf.mxu0
      %v2428 = vadd.f32 %v2291, %v2427
      %2429 = vmatmul.bf16.gmra.mxu0 %v2372
      %v2430 = vpop.f32.mrf.mxu0
      %v2431 = vadd.f32 %v2294, %v2430
      %v2432 = vpop.f32.mrf.mxu0
      %v2433 = vadd.f32 %v2296, %v2432
      %2434 = vmatmul.bf16.gmra.mxu0 %v2375
      %v2435 = vpop.f32.mrf.mxu0
      %v2436 = vadd.f32 %v2299, %v2435
      %v2437 = vpop.f32.mrf.mxu0
      %v2438 = vadd.f32 %v2301, %v2437
      %2439 = vmatmul.bf16.gmra.mxu0 %v2378
      %v2440 = vpop.f32.mrf.mxu0
      %v2441 = vadd.f32 %v2304, %v2440
      %v2442 = vpop.f32.mrf.mxu0
      %v2443 = vadd.f32 %v2306, %v2442
      %2444 = vmatmul.bf16.gmra.mxu0 %v2381
      %v2445 = vpop.f32.mrf.mxu0
      %v2446 = vadd.f32 %v2309, %v2445
      %v2447 = vpop.f32.mrf.mxu0
      %v2448 = vadd.f32 %v2311, %v2447
      %2449 = vmatmul.bf16.gmra.mxu0 %v2384
      %v2450 = vpop.f32.mrf.mxu0
      %v2451 = vadd.f32 %v2314, %v2450
      %v2452 = vpop.f32.mrf.mxu0
      %v2453 = vadd.f32 %v2316, %v2452
      %2454 = vmatmul.bf16.gmra.mxu0 %v2387
      %v2455 = vpop.f32.mrf.mxu0
      %v2456 = vadd.f32 %v2319, %v2455
      %v2457 = vpop.f32.mrf.mxu0
      %v2458 = vadd.f32 %v2321, %v2457
      %2459 = vmatmul.bf16.gmra.mxu0 %v2390
      %v2460 = vpop.f32.mrf.mxu0
      %v2461 = vadd.f32 %v2324, %v2460
      %v2462 = vpop.f32.mrf.mxu0
      %v2463 = vadd.f32 %v2326, %v2462
      %2464 = vmatmul.bf16.gmra.mxu0 %v2393
      %v2465 = vpop.f32.mrf.mxu0
      %v2466 = vadd.f32 %v2329, %v2465
      %v2467 = vpop.f32.mrf.mxu0
      %v2468 = vadd.f32 %v2331, %v2467
      %2469 = vmatmul.bf16.gmra.mxu0 %v2396
      %v2470 = vpop.f32.mrf.mxu0
      %v2471 = vadd.f32 %v2334, %v2470
      %v2472 = vpop.f32.mrf.mxu0
      %v2473 = vadd.f32 %v2336, %v2472
      %2474 = vmatmul.bf16.gmra.mxu0 %v2399
      %v2475 = vpop.f32.mrf.mxu0
      %v2476 = vadd.f32 %v2339, %v2475
      %v2477 = vpop.f32.mrf.mxu0
      %v2478 = vadd.f32 %v2341, %v2477
      %2479 = vmatmul.bf16.gmra.mxu0 %v2402
      %v2480 = vpop.f32.mrf.mxu0
      %v2481 = vadd.f32 %v2344, %v2480
      %v2482 = vpop.f32.mrf.mxu0
      %v2483 = vadd.f32 %v2346, %v2482
      %2484 = vmatmul.bf16.gmra.mxu0 %v2405
      %v2485 = vpop.f32.mrf.mxu0
      %v2486 = vadd.f32 %v2349, %v2485
      %v2487 = vpop.f32.mrf.mxu0
      %v2488 = vadd.f32 %v2351, %v2487
      %2489 = vmatmul.bf16.gmra.mxu0 %v2408
      %v2490 = vpop.f32.mrf.mxu0
      %v2491 = vadd.f32 %v2354, %v2490
      %v2492 = vpop.f32.mrf.mxu0
      %v2493 = vadd.f32 %v2356, %v2492
      %2494 = vmatmul.bf16.gmra.mxu0 %v2411
      %v2495 = vpop.f32.mrf.mxu0
      %v2496 = vadd.f32 %v2359, %v2495
      %v2497 = vpop.f32.mrf.mxu0
      %v2498 = vadd.f32 %v2361, %v2497
      %2499 = vmatmul.bf16.gmra.mxu0 %v2414
      %v2500 = vpop.f32.mrf.mxu0
      %v2501 = vadd.f32 %v2364, %v2500
      %v2502 = vpop.f32.mrf.mxu0
      %v2503 = vadd.f32 %v2366, %v2502
      %2504 = vdwg.mxu0
      %2505 = vrot.lane.b32.xlu0 %v1002, 112
      %v2506 = vpop.permute.xlu0 %2505
      %2507 = vrot.lane.b32.xlu0 %v1003, 112
      %v2508 = vpop.permute.xlu0 %2507
      %2509 = vrot.lane.b32.xlu0 %v1004, 112
      %v2510 = vpop.permute.xlu0 %2509
      %2511 = vrot.lane.b32.xlu0 %v1005, 112
      %v2512 = vpop.permute.xlu0 %2511
      %2513 = vrot.lane.b32.xlu0 %v1006, 112
      %v2514 = vpop.permute.xlu0 %2513
      %2515 = vrot.lane.b32.xlu0 %v1007, 112
      %v2516 = vpop.permute.xlu0 %2515
      %2517 = vrot.lane.b32.xlu0 %v1008, 112
      %v2518 = vpop.permute.xlu0 %2517
      %2519 = vrot.lane.b32.xlu0 %v1009, 112
      %v2520 = vpop.permute.xlu0 %2519
      %2521 = vrot.lane.b32.xlu0 %v1010, 112
      %v2522 = vpop.permute.xlu0 %2521
      %2523 = vrot.lane.b32.xlu0 %v1011, 112
      %v2524 = vpop.permute.xlu0 %2523
      %2525 = vrot.lane.b32.xlu0 %v1012, 112
      %v2526 = vpop.permute.xlu0 %2525
      %2527 = vrot.lane.b32.xlu0 %v1013, 112
      %v2528 = vpop.permute.xlu0 %2527
      %2529 = vrot.lane.b32.xlu0 %v1014, 112
      %v2530 = vpop.permute.xlu0 %2529
      %2531 = vrot.lane.b32.xlu0 %v1015, 112
      %v2532 = vpop.permute.xlu0 %2531
      %2533 = vrot.lane.b32.xlu0 %v1016, 112
      %v2534 = vpop.permute.xlu0 %2533
      %2535 = vrot.lane.b32.xlu0 %v1017, 112
      %v2536 = vpop.permute.xlu0 %2535
      %2537 = vrot.lane.b32.xlu0 %v1018, 112
      %v2538 = vpop.permute.xlu0 %2537
      %2539 = vrot.lane.b32.xlu0 %v1019, 112
      %v2540 = vpop.permute.xlu0 %2539
      %2541 = vrot.lane.b32.xlu0 %v1020, 112
      %v2542 = vpop.permute.xlu0 %2541
      %2543 = vrot.lane.b32.xlu0 %v1021, 112
      %v2544 = vpop.permute.xlu0 %2543
      %v2546 = vsel %vm1022, %v2506, 0
      %v2549 = vsel %vm1022, %v2508, 0
      %v2552 = vsel %vm1022, %v2510, 0
      %v2555 = vsel %vm1022, %v2512, 0
      %v2558 = vsel %vm1022, %v2514, 0
      %v2561 = vsel %vm1022, %v2516, 0
      %v2564 = vsel %vm1022, %v2518, 0
      %v2567 = vsel %vm1022, %v2520, 0
      %v2570 = vsel %vm1022, %v2522, 0
      %v2573 = vsel %vm1022, %v2524, 0
      %v2576 = vsel %vm1022, %v2526, 0
      %v2579 = vsel %vm1022, %v2528, 0
      %v2582 = vsel %vm1022, %v2530, 0
      %v2585 = vsel %vm1022, %v2532, 0
      %v2588 = vsel %vm1022, %v2534, 0
      %v2591 = vsel %vm1022, %v2536, 0
      %v2594 = vsel %vm1022, %v2538, 0
      %v2597 = vsel %vm1022, %v2540, 0
      %v2600 = vsel %vm1022, %v2542, 0
      %v2603 = vsel %vm1022, %v2544, 0
      %2605 = vmatpush.bf16.xpose.msra.mxu0 0
      %2606 = vmatpush.bf16.xpose.msra.mxu0 0
      %2607 = vmatpush.bf16.xpose.msra.mxu0 0
      %2608 = vmatpush.bf16.xpose.msra.mxu0 0
      %2609 = vmatpush.bf16.xpose.msra.mxu0 %v2603
      %2610 = vmatpush.bf16.xpose.msra.mxu0 %v2600
      %2611 = vmatpush.bf16.xpose.msra.mxu0 %v2597
      %2612 = vmatpush.bf16.xpose.msra.mxu0 %v2594
      %2613 = vmatmul.bf16.gmra.mxu0 %v2546
      %v2614 = vpop.f32.mrf.mxu0
      %v2615 = vadd.f32 0.0, %v2614
      %v2616 = vpop.f32.mrf.mxu0
      %v2617 = vadd.f32 0.0, %v2616
      %2618 = vmatmul.bf16.gmra.mxu0 %v2549
      %v2619 = vpop.f32.mrf.mxu0
      %v2620 = vadd.f32 0.0, %v2619
      %v2621 = vpop.f32.mrf.mxu0
      %v2622 = vadd.f32 0.0, %v2621
      %2623 = vmatmul.bf16.gmra.mxu0 %v2552
      %v2624 = vpop.f32.mrf.mxu0
      %v2625 = vadd.f32 0.0, %v2624
      %v2626 = vpop.f32.mrf.mxu0
      %v2627 = vadd.f32 0.0, %v2626
      %2628 = vmatmul.bf16.gmra.mxu0 %v2555
      %v2629 = vpop.f32.mrf.mxu0
      %v2630 = vadd.f32 0.0, %v2629
      %v2631 = vpop.f32.mrf.mxu0
      %v2632 = vadd.f32 0.0, %v2631
      %2633 = vmatmul.bf16.gmra.mxu0 %v2558
      %v2634 = vpop.f32.mrf.mxu0
      %v2635 = vadd.f32 0.0, %v2634
      %v2636 = vpop.f32.mrf.mxu0
      %v2637 = vadd.f32 0.0, %v2636
      %2638 = vmatmul.bf16.gmra.mxu0 %v2561
      %v2639 = vpop.f32.mrf.mxu0
      %v2640 = vadd.f32 0.0, %v2639
      %v2641 = vpop.f32.mrf.mxu0
      %v2642 = vadd.f32 0.0, %v2641
      %2643 = vmatmul.bf16.gmra.mxu0 %v2564
      %v2644 = vpop.f32.mrf.mxu0
      %v2645 = vadd.f32 0.0, %v2644
      %v2646 = vpop.f32.mrf.mxu0
      %v2647 = vadd.f32 0.0, %v2646
      %2648 = vmatmul.bf16.gmra.mxu0 %v2567
      %v2649 = vpop.f32.mrf.mxu0
      %v2650 = vadd.f32 0.0, %v2649
      %v2651 = vpop.f32.mrf.mxu0
      %v2652 = vadd.f32 0.0, %v2651
      %2653 = vmatmul.bf16.gmra.mxu0 %v2570
      %v2654 = vpop.f32.mrf.mxu0
      %v2655 = vadd.f32 0.0, %v2654
      %v2656 = vpop.f32.mrf.mxu0
      %v2657 = vadd.f32 0.0, %v2656
      %2658 = vmatmul.bf16.gmra.mxu0 %v2573
      %v2659 = vpop.f32.mrf.mxu0
      %v2660 = vadd.f32 0.0, %v2659
      %v2661 = vpop.f32.mrf.mxu0
      %v2662 = vadd.f32 0.0, %v2661
      %2663 = vmatmul.bf16.gmra.mxu0 %v2576
      %v2664 = vpop.f32.mrf.mxu0
      %v2665 = vadd.f32 0.0, %v2664
      %v2666 = vpop.f32.mrf.mxu0
      %v2667 = vadd.f32 0.0, %v2666
      %2668 = vmatmul.bf16.gmra.mxu0 %v2579
      %v2669 = vpop.f32.mrf.mxu0
      %v2670 = vadd.f32 0.0, %v2669
      %v2671 = vpop.f32.mrf.mxu0
      %v2672 = vadd.f32 0.0, %v2671
      %2673 = vmatmul.bf16.gmra.mxu0 %v2582
      %v2674 = vpop.f32.mrf.mxu0
      %v2675 = vadd.f32 0.0, %v2674
      %v2676 = vpop.f32.mrf.mxu0
      %v2677 = vadd.f32 0.0, %v2676
      %2678 = vmatmul.bf16.gmra.mxu0 %v2585
      %v2679 = vpop.f32.mrf.mxu0
      %v2680 = vadd.f32 0.0, %v2679
      %v2681 = vpop.f32.mrf.mxu0
      %v2682 = vadd.f32 0.0, %v2681
      %2683 = vmatmul.bf16.gmra.mxu0 %v2588
      %v2684 = vpop.f32.mrf.mxu0
      %v2685 = vadd.f32 0.0, %v2684
      %v2686 = vpop.f32.mrf.mxu0
      %v2687 = vadd.f32 0.0, %v2686
      %2688 = vmatmul.bf16.gmra.mxu0 %v2591
      %v2689 = vpop.f32.mrf.mxu0
      %v2690 = vadd.f32 0.0, %v2689
      %v2691 = vpop.f32.mrf.mxu0
      %v2692 = vadd.f32 0.0, %v2691
      %2693 = vdwg.mxu0
      %v2694 = vsel %vm1172, %v2615, -inf
      %2695 = vmax.xlane.f32.xlu0 %v2694
      %v2696 = vpop.xlane.xlu0 %2695
      %v2697 = vsel %vm1172, %v2617, -inf
      %2698 = vmax.xlane.f32.xlu0 %v2697
      %v2699 = vpop.xlane.xlu0 %2698
      %v2700 = vsel %vm1172, %v2620, -inf
      %2701 = vmax.xlane.f32.xlu0 %v2700
      %v2702 = vpop.xlane.xlu0 %2701
      %v2703 = vsel %vm1172, %v2622, -inf
      %2704 = vmax.xlane.f32.xlu0 %v2703
      %v2705 = vpop.xlane.xlu0 %2704
      %v2706 = vsel %vm1172, %v2625, -inf
      %2707 = vmax.xlane.f32.xlu0 %v2706
      %v2708 = vpop.xlane.xlu0 %2707
      %v2709 = vsel %vm1172, %v2627, -inf
      %2710 = vmax.xlane.f32.xlu0 %v2709
      %v2711 = vpop.xlane.xlu0 %2710
      %v2712 = vsel %vm1172, %v2630, -inf
      %2713 = vmax.xlane.f32.xlu0 %v2712
      %v2714 = vpop.xlane.xlu0 %2713
      %v2715 = vsel %vm1172, %v2632, -inf
      %2716 = vmax.xlane.f32.xlu0 %v2715
      %v2717 = vpop.xlane.xlu0 %2716
      %v2718 = vsel %vm1172, %v2635, -inf
      %2719 = vmax.xlane.f32.xlu0 %v2718
      %v2720 = vpop.xlane.xlu0 %2719
      %v2721 = vsel %vm1172, %v2637, -inf
      %2722 = vmax.xlane.f32.xlu0 %v2721
      %v2723 = vpop.xlane.xlu0 %2722
      %v2724 = vsel %vm1172, %v2640, -inf
      %2725 = vmax.xlane.f32.xlu0 %v2724
      %v2726 = vpop.xlane.xlu0 %2725
      %v2727 = vsel %vm1172, %v2642, -inf
      %2728 = vmax.xlane.f32.xlu0 %v2727
      %v2729 = vpop.xlane.xlu0 %2728
      %v2730 = vsel %vm1172, %v2645, -inf
      %2731 = vmax.xlane.f32.xlu0 %v2730
      %v2732 = vpop.xlane.xlu0 %2731
      %v2733 = vsel %vm1172, %v2647, -inf
      %2734 = vmax.xlane.f32.xlu0 %v2733
      %v2735 = vpop.xlane.xlu0 %2734
      %v2736 = vsel %vm1172, %v2650, -inf
      %2737 = vmax.xlane.f32.xlu0 %v2736
      %v2738 = vpop.xlane.xlu0 %2737
      %v2739 = vsel %vm1172, %v2652, -inf
      %2740 = vmax.xlane.f32.xlu0 %v2739
      %v2741 = vpop.xlane.xlu0 %2740
      %v2742 = vsel %vm1172, %v2655, -inf
      %2743 = vmax.xlane.f32.xlu0 %v2742
      %v2744 = vpop.xlane.xlu0 %2743
      %v2745 = vsel %vm1172, %v2657, -inf
      %2746 = vmax.xlane.f32.xlu0 %v2745
      %v2747 = vpop.xlane.xlu0 %2746
      %v2748 = vsel %vm1172, %v2660, -inf
      %2749 = vmax.xlane.f32.xlu0 %v2748
      %v2750 = vpop.xlane.xlu0 %2749
      %v2751 = vsel %vm1172, %v2662, -inf
      %2752 = vmax.xlane.f32.xlu0 %v2751
      %v2753 = vpop.xlane.xlu0 %2752
      %v2754 = vsel %vm1172, %v2665, -inf
      %2755 = vmax.xlane.f32.xlu0 %v2754
      %v2756 = vpop.xlane.xlu0 %2755
      %v2757 = vsel %vm1172, %v2667, -inf
      %2758 = vmax.xlane.f32.xlu0 %v2757
      %v2759 = vpop.xlane.xlu0 %2758
      %v2760 = vsel %vm1172, %v2670, -inf
      %2761 = vmax.xlane.f32.xlu0 %v2760
      %v2762 = vpop.xlane.xlu0 %2761
      %v2763 = vsel %vm1172, %v2672, -inf
      %2764 = vmax.xlane.f32.xlu0 %v2763
      %v2765 = vpop.xlane.xlu0 %2764
      %v2766 = vsel %vm1172, %v2675, -inf
      %2767 = vmax.xlane.f32.xlu0 %v2766
      %v2768 = vpop.xlane.xlu0 %2767
      %v2769 = vsel %vm1172, %v2677, -inf
      %2770 = vmax.xlane.f32.xlu0 %v2769
      %v2771 = vpop.xlane.xlu0 %2770
      %v2772 = vsel %vm1172, %v2680, -inf
      %2773 = vmax.xlane.f32.xlu0 %v2772
      %v2774 = vpop.xlane.xlu0 %2773
      %v2775 = vsel %vm1172, %v2682, -inf
      %2776 = vmax.xlane.f32.xlu0 %v2775
      %v2777 = vpop.xlane.xlu0 %2776
      %v2778 = vsel %vm1172, %v2685, -inf
      %2779 = vmax.xlane.f32.xlu0 %v2778
      %v2780 = vpop.xlane.xlu0 %2779
      %v2781 = vsel %vm1172, %v2687, -inf
      %2782 = vmax.xlane.f32.xlu0 %v2781
      %v2783 = vpop.xlane.xlu0 %2782
      %v2784 = vsel %vm1172, %v2690, -inf
      %2785 = vmax.xlane.f32.xlu0 %v2784
      %v2786 = vpop.xlane.xlu0 %2785
      %v2787 = vsel %vm1172, %v2692, -inf
      %2788 = vmax.xlane.f32.xlu0 %v2787
      %v2789 = vpop.xlane.xlu0 %2788
      %v2790 = vsub.f32 %v2615, %v2696
      %v2791 = vsub.f32 %v2617, %v2699
      %v2792 = vsub.f32 %v2620, %v2702
      %v2793 = vsub.f32 %v2622, %v2705
      %v2794 = vsub.f32 %v2625, %v2708
      %v2795 = vsub.f32 %v2627, %v2711
      %v2796 = vsub.f32 %v2630, %v2714
      %v2797 = vsub.f32 %v2632, %v2717
      %v2798 = vsub.f32 %v2635, %v2720
      %v2799 = vsub.f32 %v2637, %v2723
      %v2800 = vsub.f32 %v2640, %v2726
      %v2801 = vsub.f32 %v2642, %v2729
      %v2802 = vsub.f32 %v2645, %v2732
      %v2803 = vsub.f32 %v2647, %v2735
      %v2804 = vsub.f32 %v2650, %v2738
      %v2805 = vsub.f32 %v2652, %v2741
      %v2806 = vsub.f32 %v2655, %v2744
      %v2807 = vsub.f32 %v2657, %v2747
      %v2808 = vsub.f32 %v2660, %v2750
      %v2809 = vsub.f32 %v2662, %v2753
      %v2810 = vsub.f32 %v2665, %v2756
      %v2811 = vsub.f32 %v2667, %v2759
      %v2812 = vsub.f32 %v2670, %v2762
      %v2813 = vsub.f32 %v2672, %v2765
      %v2814 = vsub.f32 %v2675, %v2768
      %v2815 = vsub.f32 %v2677, %v2771
      %v2816 = vsub.f32 %v2680, %v2774
      %v2817 = vsub.f32 %v2682, %v2777
      %v2818 = vsub.f32 %v2685, %v2780
      %v2819 = vsub.f32 %v2687, %v2783
      %v2820 = vsub.f32 %v2690, %v2786
      %v2821 = vsub.f32 %v2692, %v2789
      %v2822 = vmul.f32 %v2790, 1.442695
      %v2823 = vpow.pop %v2822
      %v2824 = vmul.f32 %v2791, 1.442695
      %v2825 = vpow.pop %v2824
      %v2826 = vmul.f32 %v2792, 1.442695
      %v2827 = vpow.pop %v2826
      %v2828 = vmul.f32 %v2793, 1.442695
      %v2829 = vpow.pop %v2828
      %v2830 = vmul.f32 %v2794, 1.442695
      %v2831 = vpow.pop %v2830
      %v2832 = vmul.f32 %v2795, 1.442695
      %v2833 = vpow.pop %v2832
      %v2834 = vmul.f32 %v2796, 1.442695
      %v2835 = vpow.pop %v2834
      %v2836 = vmul.f32 %v2797, 1.442695
      %v2837 = vpow.pop %v2836
      %v2838 = vmul.f32 %v2798, 1.442695
      %v2839 = vpow.pop %v2838
      %v2840 = vmul.f32 %v2799, 1.442695
      %v2841 = vpow.pop %v2840
      %v2842 = vmul.f32 %v2800, 1.442695
      %v2843 = vpow.pop %v2842
      %v2844 = vmul.f32 %v2801, 1.442695
      %v2845 = vpow.pop %v2844
      %v2846 = vmul.f32 %v2802, 1.442695
      %v2847 = vpow.pop %v2846
      %v2848 = vmul.f32 %v2803, 1.442695
      %v2849 = vpow.pop %v2848
      %v2850 = vmul.f32 %v2804, 1.442695
      %v2851 = vpow.pop %v2850
      %v2852 = vmul.f32 %v2805, 1.442695
      %v2853 = vpow.pop %v2852
      %v2854 = vmul.f32 %v2806, 1.442695
      %v2855 = vpow.pop %v2854
      %v2856 = vmul.f32 %v2807, 1.442695
      %v2857 = vpow.pop %v2856
      %v2858 = vmul.f32 %v2808, 1.442695
      %v2859 = vpow.pop %v2858
      %v2860 = vmul.f32 %v2809, 1.442695
      %v2861 = vpow.pop %v2860
      %v2862 = vmul.f32 %v2810, 1.442695
      %v2863 = vpow.pop %v2862
      %v2864 = vmul.f32 %v2811, 1.442695
      %v2865 = vpow.pop %v2864
      %v2866 = vmul.f32 %v2812, 1.442695
      %v2867 = vpow.pop %v2866
      %v2868 = vmul.f32 %v2813, 1.442695
      %v2869 = vpow.pop %v2868
      %v2870 = vmul.f32 %v2814, 1.442695
      %v2871 = vpow.pop %v2870
      %v2872 = vmul.f32 %v2815, 1.442695
      %v2873 = vpow.pop %v2872
      %v2874 = vmul.f32 %v2816, 1.442695
      %v2875 = vpow.pop %v2874
      %v2876 = vmul.f32 %v2817, 1.442695
      %v2877 = vpow.pop %v2876
      %v2878 = vmul.f32 %v2818, 1.442695
      %v2879 = vpow.pop %v2878
      %v2880 = vmul.f32 %v2819, 1.442695
      %v2881 = vpow.pop %v2880
      %v2882 = vmul.f32 %v2820, 1.442695
      %v2883 = vpow.pop %v2882
      %v2884 = vmul.f32 %v2821, 1.442695
      %v2885 = vpow.pop %v2884
      %v2886 = vsel %vm1172, %v2823, 0.0
      %2887 = vadd.xlane.f32.xlu0 %v2886
      %v2888 = vpop.xlane.xlu0 %2887
      %v2889 = vsel %vm1172, %v2825, 0.0
      %2890 = vadd.xlane.f32.xlu0 %v2889
      %v2891 = vpop.xlane.xlu0 %2890
      %v2892 = vsel %vm1172, %v2827, 0.0
      %2893 = vadd.xlane.f32.xlu0 %v2892
      %v2894 = vpop.xlane.xlu0 %2893
      %v2895 = vsel %vm1172, %v2829, 0.0
      %2896 = vadd.xlane.f32.xlu0 %v2895
      %v2897 = vpop.xlane.xlu0 %2896
      %v2898 = vsel %vm1172, %v2831, 0.0
      %2899 = vadd.xlane.f32.xlu0 %v2898
      %v2900 = vpop.xlane.xlu0 %2899
      %v2901 = vsel %vm1172, %v2833, 0.0
      %2902 = vadd.xlane.f32.xlu0 %v2901
      %v2903 = vpop.xlane.xlu0 %2902
      %v2904 = vsel %vm1172, %v2835, 0.0
      %2905 = vadd.xlane.f32.xlu0 %v2904
      %v2906 = vpop.xlane.xlu0 %2905
      %v2907 = vsel %vm1172, %v2837, 0.0
      %2908 = vadd.xlane.f32.xlu0 %v2907
      %v2909 = vpop.xlane.xlu0 %2908
      %v2910 = vsel %vm1172, %v2839, 0.0
      %2911 = vadd.xlane.f32.xlu0 %v2910
      %v2912 = vpop.xlane.xlu0 %2911
      %v2913 = vsel %vm1172, %v2841, 0.0
      %2914 = vadd.xlane.f32.xlu0 %v2913
      %v2915 = vpop.xlane.xlu0 %2914
      %v2916 = vsel %vm1172, %v2843, 0.0
      %2917 = vadd.xlane.f32.xlu0 %v2916
      %v2918 = vpop.xlane.xlu0 %2917
      %v2919 = vsel %vm1172, %v2845, 0.0
      %2920 = vadd.xlane.f32.xlu0 %v2919
      %v2921 = vpop.xlane.xlu0 %2920
      %v2922 = vsel %vm1172, %v2847, 0.0
      %2923 = vadd.xlane.f32.xlu0 %v2922
      %v2924 = vpop.xlane.xlu0 %2923
      %v2925 = vsel %vm1172, %v2849, 0.0
      %2926 = vadd.xlane.f32.xlu0 %v2925
      %v2927 = vpop.xlane.xlu0 %2926
      %v2928 = vsel %vm1172, %v2851, 0.0
      %2929 = vadd.xlane.f32.xlu0 %v2928
      %v2930 = vpop.xlane.xlu0 %2929
      %v2931 = vsel %vm1172, %v2853, 0.0
      %2932 = vadd.xlane.f32.xlu0 %v2931
      %v2933 = vpop.xlane.xlu0 %2932
      %v2934 = vsel %vm1172, %v2855, 0.0
      %2935 = vadd.xlane.f32.xlu0 %v2934
      %v2936 = vpop.xlane.xlu0 %2935
      %v2937 = vsel %vm1172, %v2857, 0.0
      %2938 = vadd.xlane.f32.xlu0 %v2937
      %v2939 = vpop.xlane.xlu0 %2938
      %v2940 = vsel %vm1172, %v2859, 0.0
      %2941 = vadd.xlane.f32.xlu0 %v2940
      %v2942 = vpop.xlane.xlu0 %2941
      %v2943 = vsel %vm1172, %v2861, 0.0
      %2944 = vadd.xlane.f32.xlu0 %v2943
      %v2945 = vpop.xlane.xlu0 %2944
      %v2946 = vsel %vm1172, %v2863, 0.0
      %2947 = vadd.xlane.f32.xlu0 %v2946
      %v2948 = vpop.xlane.xlu0 %2947
      %v2949 = vsel %vm1172, %v2865, 0.0
      %2950 = vadd.xlane.f32.xlu0 %v2949
      %v2951 = vpop.xlane.xlu0 %2950
      %v2952 = vsel %vm1172, %v2867, 0.0
      %2953 = vadd.xlane.f32.xlu0 %v2952
      %v2954 = vpop.xlane.xlu0 %2953
      %v2955 = vsel %vm1172, %v2869, 0.0
      %2956 = vadd.xlane.f32.xlu0 %v2955
      %v2957 = vpop.xlane.xlu0 %2956
      %v2958 = vsel %vm1172, %v2871, 0.0
      %2959 = vadd.xlane.f32.xlu0 %v2958
      %v2960 = vpop.xlane.xlu0 %2959
      %v2961 = vsel %vm1172, %v2873, 0.0
      %2962 = vadd.xlane.f32.xlu0 %v2961
      %v2963 = vpop.xlane.xlu0 %2962
      %v2964 = vsel %vm1172, %v2875, 0.0
      %2965 = vadd.xlane.f32.xlu0 %v2964
      %v2966 = vpop.xlane.xlu0 %2965
      %v2967 = vsel %vm1172, %v2877, 0.0
      %2968 = vadd.xlane.f32.xlu0 %v2967
      %v2969 = vpop.xlane.xlu0 %2968
      %v2970 = vsel %vm1172, %v2879, 0.0
      %2971 = vadd.xlane.f32.xlu0 %v2970
      %v2972 = vpop.xlane.xlu0 %2971
      %v2973 = vsel %vm1172, %v2881, 0.0
      %2974 = vadd.xlane.f32.xlu0 %v2973
      %v2975 = vpop.xlane.xlu0 %2974
      %v2976 = vsel %vm1172, %v2883, 0.0
      %2977 = vadd.xlane.f32.xlu0 %v2976
      %v2978 = vpop.xlane.xlu0 %2977
      %v2979 = vsel %vm1172, %v2885, 0.0
      %2980 = vadd.xlane.f32.xlu0 %v2979
      %v2981 = vpop.xlane.xlu0 %2980
      %v2982 = vrcp.pop %v2888
      %v2983 = vrcp.pop %v2891
      %v2984 = vrcp.pop %v2894
      %v2985 = vrcp.pop %v2897
      %v2986 = vrcp.pop %v2900
      %v2987 = vrcp.pop %v2903
      %v2988 = vrcp.pop %v2906
      %v2989 = vrcp.pop %v2909
      %v2990 = vrcp.pop %v2912
      %v2991 = vrcp.pop %v2915
      %v2992 = vrcp.pop %v2918
      %v2993 = vrcp.pop %v2921
      %v2994 = vrcp.pop %v2924
      %v2995 = vrcp.pop %v2927
      %v2996 = vrcp.pop %v2930
      %v2997 = vrcp.pop %v2933
      %v2998 = vrcp.pop %v2936
      %v2999 = vrcp.pop %v2939
      %v3000 = vrcp.pop %v2942
      %v3001 = vrcp.pop %v2945
      %v3002 = vrcp.pop %v2948
      %v3003 = vrcp.pop %v2951
      %v3004 = vrcp.pop %v2954
      %v3005 = vrcp.pop %v2957
      %v3006 = vrcp.pop %v2960
      %v3007 = vrcp.pop %v2963
      %v3008 = vrcp.pop %v2966
      %v3009 = vrcp.pop %v2969
      %v3010 = vrcp.pop %v2972
      %v3011 = vrcp.pop %v2975
      %v3012 = vrcp.pop %v2978
      %v3013 = vrcp.pop %v2981
      %v3014 = vmul.f32 %v2823, %v2982
      %v3015 = vmul.f32 %v2825, %v2983
      %v3016 = vmul.f32 %v2827, %v2984
      %v3017 = vmul.f32 %v2829, %v2985
      %v3018 = vmul.f32 %v2831, %v2986
      %v3019 = vmul.f32 %v2833, %v2987
      %v3020 = vmul.f32 %v2835, %v2988
      %v3021 = vmul.f32 %v2837, %v2989
      %v3022 = vmul.f32 %v2839, %v2990
      %v3023 = vmul.f32 %v2841, %v2991
      %v3024 = vmul.f32 %v2843, %v2992
      %v3025 = vmul.f32 %v2845, %v2993
      %v3026 = vmul.f32 %v2847, %v2994
      %v3027 = vmul.f32 %v2849, %v2995
      %v3028 = vmul.f32 %v2851, %v2996
      %v3029 = vmul.f32 %v2853, %v2997
      %v3030 = vmul.f32 %v2855, %v2998
      %v3031 = vmul.f32 %v2857, %v2999
      %v3032 = vmul.f32 %v2859, %v3000
      %v3033 = vmul.f32 %v2861, %v3001
      %v3034 = vmul.f32 %v2863, %v3002
      %v3035 = vmul.f32 %v2865, %v3003
      %v3036 = vmul.f32 %v2867, %v3004
      %v3037 = vmul.f32 %v2869, %v3005
      %v3038 = vmul.f32 %v2871, %v3006
      %v3039 = vmul.f32 %v2873, %v3007
      %v3040 = vmul.f32 %v2875, %v3008
      %v3041 = vmul.f32 %v2877, %v3009
      %v3042 = vmul.f32 %v2879, %v3010
      %v3043 = vmul.f32 %v2881, %v3011
      %v3044 = vmul.f32 %v2883, %v3012
      %v3045 = vmul.f32 %v2885, %v3013
      %3046 = vrot.lane.b32.xlu0 %v1018, 80
      %v3047 = vpop.permute.xlu0 %3046
      %3048 = vrot.lane.b32.xlu0 %v1019, 80
      %v3049 = vpop.permute.xlu0 %3048
      %3050 = vrot.lane.b32.xlu0 %v1020, 80
      %v3051 = vpop.permute.xlu0 %3050
      %3052 = vrot.lane.b32.xlu0 %v1021, 80
      %v3053 = vpop.permute.xlu0 %3052
      %v3055 = vsel %vm1022, %v3047, 0
      %v3058 = vsel %vm1022, %v3049, 0
      %v3061 = vsel %vm1022, %v3051, 0
      %v3064 = vsel %vm1022, %v3053, 0
      %v3067 = vsel %vm1549, %v1000, 0
      %3069 = vmatpush.bf16.msra.mxu0 0
      %3070 = vmatpush.bf16.msra.mxu0 0
      %3071 = vmatpush.bf16.msra.mxu0 0
      %3072 = vmatpush.bf16.msra.mxu0 0
      %3073 = vmatpush.bf16.msra.mxu0 0
      %3074 = vmatpush.bf16.msra.mxu0 0
      %3075 = vmatpush.bf16.msra.mxu0 0
      %3076 = vmatpush.bf16.msra.mxu0 %v3067
      %3077 = vmatmul.bf16.gmra.mxu0 %v3055
      %v3078 = vpop.f32.mrf.mxu0
      %v3079 = vadd.f32 0.0, %v3078
      %v3080 = vpop.f32.mrf.mxu0
      %v3081 = vadd.f32 0.0, %v3080
      %3082 = vmatmul.bf16.gmra.mxu0 %v3058
      %v3083 = vpop.f32.mrf.mxu0
      %v3084 = vadd.f32 0.0, %v3083
      %v3085 = vpop.f32.mrf.mxu0
      %v3086 = vadd.f32 0.0, %v3085
      %3087 = vmatmul.bf16.gmra.mxu0 %v3061
      %v3088 = vpop.f32.mrf.mxu0
      %v3089 = vadd.f32 0.0, %v3088
      %v3090 = vpop.f32.mrf.mxu0
      %v3091 = vadd.f32 0.0, %v3090
      %3092 = vmatmul.bf16.gmra.mxu0 %v3064
      %v3093 = vpop.f32.mrf.mxu0
      %v3094 = vadd.f32 0.0, %v3093
      %v3095 = vpop.f32.mrf.mxu0
      %v3096 = vadd.f32 0.0, %v3095
      %3097 = vdwg.mxu0
      %v3098 = vpack.c.bf16 %v3015, %v3014
      %v3099 = vpack.c.bf16 %v3017, %v3016
      %v3100 = vpack.c.bf16 %v3019, %v3018
      %v3101 = vpack.c.bf16 %v3021, %v3020
      %v3102 = vpack.c.bf16 %v3023, %v3022
      %v3103 = vpack.c.bf16 %v3025, %v3024
      %v3104 = vpack.c.bf16 %v3027, %v3026
      %v3105 = vpack.c.bf16 %v3029, %v3028
      %v3106 = vpack.c.bf16 %v3031, %v3030
      %v3107 = vpack.c.bf16 %v3033, %v3032
      %v3108 = vpack.c.bf16 %v3035, %v3034
      %v3109 = vpack.c.bf16 %v3037, %v3036
      %v3110 = vpack.c.bf16 %v3039, %v3038
      %v3111 = vpack.c.bf16 %v3041, %v3040
      %v3112 = vpack.c.bf16 %v3043, %v3042
      %v3113 = vpack.c.bf16 %v3045, %v3044
      %v3114 = vpack.c.bf16 %v3081, %v3079
      %v3115 = vpack.c.bf16 %v3086, %v3084
      %v3116 = vpack.c.bf16 %v3091, %v3089
      %v3117 = vpack.c.bf16 %v3096, %v3094
      %v3119 = vsel %vm1172, %v3098, 0
      %v3122 = vsel %vm1172, %v3099, 0
      %v3125 = vsel %vm1172, %v3100, 0
      %v3128 = vsel %vm1172, %v3101, 0
      %v3131 = vsel %vm1172, %v3102, 0
      %v3134 = vsel %vm1172, %v3103, 0
      %v3137 = vsel %vm1172, %v3104, 0
      %v3140 = vsel %vm1172, %v3105, 0
      %v3143 = vsel %vm1172, %v3106, 0
      %v3146 = vsel %vm1172, %v3107, 0
      %v3149 = vsel %vm1172, %v3108, 0
      %v3152 = vsel %vm1172, %v3109, 0
      %v3155 = vsel %vm1172, %v3110, 0
      %v3158 = vsel %vm1172, %v3111, 0
      %v3161 = vsel %vm1172, %v3112, 0
      %v3164 = vsel %vm1172, %v3113, 0
      %3166 = vmatpush.bf16.msra.mxu0 0
      %3167 = vmatpush.bf16.msra.mxu0 0
      %3168 = vmatpush.bf16.msra.mxu0 0
      %3169 = vmatpush.bf16.msra.mxu0 0
      %3170 = vmatpush.bf16.msra.mxu0 %v3117
      %3171 = vmatpush.bf16.msra.mxu0 %v3116
      %3172 = vmatpush.bf16.msra.mxu0 %v3115
      %3173 = vmatpush.bf16.msra.mxu0 %v3114
      %3174 = vmatmul.bf16.gmra.mxu0 %v3119
      %v3175 = vpop.f32.mrf.mxu0
      %v3176 = vadd.f32 0.0, %v3175
      %v3177 = vpop.f32.mrf.mxu0
      %v3178 = vadd.f32 0.0, %v3177
      %3179 = vmatmul.bf16.gmra.mxu0 %v3122
      %v3180 = vpop.f32.mrf.mxu0
      %v3181 = vadd.f32 0.0, %v3180
      %v3182 = vpop.f32.mrf.mxu0
      %v3183 = vadd.f32 0.0, %v3182
      %3184 = vmatmul.bf16.gmra.mxu0 %v3125
      %v3185 = vpop.f32.mrf.mxu0
      %v3186 = vadd.f32 0.0, %v3185
      %v3187 = vpop.f32.mrf.mxu0
      %v3188 = vadd.f32 0.0, %v3187
      %3189 = vmatmul.bf16.gmra.mxu0 %v3128
      %v3190 = vpop.f32.mrf.mxu0
      %v3191 = vadd.f32 0.0, %v3190
      %v3192 = vpop.f32.mrf.mxu0
      %v3193 = vadd.f32 0.0, %v3192
      %3194 = vmatmul.bf16.gmra.mxu0 %v3131
      %v3195 = vpop.f32.mrf.mxu0
      %v3196 = vadd.f32 0.0, %v3195
      %v3197 = vpop.f32.mrf.mxu0
      %v3198 = vadd.f32 0.0, %v3197
      %3199 = vmatmul.bf16.gmra.mxu0 %v3134
      %v3200 = vpop.f32.mrf.mxu0
      %v3201 = vadd.f32 0.0, %v3200
      %v3202 = vpop.f32.mrf.mxu0
      %v3203 = vadd.f32 0.0, %v3202
      %3204 = vmatmul.bf16.gmra.mxu0 %v3137
      %v3205 = vpop.f32.mrf.mxu0
      %v3206 = vadd.f32 0.0, %v3205
      %v3207 = vpop.f32.mrf.mxu0
      %v3208 = vadd.f32 0.0, %v3207
      %3209 = vmatmul.bf16.gmra.mxu0 %v3140
      %v3210 = vpop.f32.mrf.mxu0
      %v3211 = vadd.f32 0.0, %v3210
      %v3212 = vpop.f32.mrf.mxu0
      %v3213 = vadd.f32 0.0, %v3212
      %3214 = vmatmul.bf16.gmra.mxu0 %v3143
      %v3215 = vpop.f32.mrf.mxu0
      %v3216 = vadd.f32 0.0, %v3215
      %v3217 = vpop.f32.mrf.mxu0
      %v3218 = vadd.f32 0.0, %v3217
      %3219 = vmatmul.bf16.gmra.mxu0 %v3146
      %v3220 = vpop.f32.mrf.mxu0
      %v3221 = vadd.f32 0.0, %v3220
      %v3222 = vpop.f32.mrf.mxu0
      %v3223 = vadd.f32 0.0, %v3222
      %3224 = vmatmul.bf16.gmra.mxu0 %v3149
      %v3225 = vpop.f32.mrf.mxu0
      %v3226 = vadd.f32 0.0, %v3225
      %v3227 = vpop.f32.mrf.mxu0
      %v3228 = vadd.f32 0.0, %v3227
      %3229 = vmatmul.bf16.gmra.mxu0 %v3152
      %v3230 = vpop.f32.mrf.mxu0
      %v3231 = vadd.f32 0.0, %v3230
      %v3232 = vpop.f32.mrf.mxu0
      %v3233 = vadd.f32 0.0, %v3232
      %3234 = vmatmul.bf16.gmra.mxu0 %v3155
      %v3235 = vpop.f32.mrf.mxu0
      %v3236 = vadd.f32 0.0, %v3235
      %v3237 = vpop.f32.mrf.mxu0
      %v3238 = vadd.f32 0.0, %v3237
      %3239 = vmatmul.bf16.gmra.mxu0 %v3158
      %v3240 = vpop.f32.mrf.mxu0
      %v3241 = vadd.f32 0.0, %v3240
      %v3242 = vpop.f32.mrf.mxu0
      %v3243 = vadd.f32 0.0, %v3242
      %3244 = vmatmul.bf16.gmra.mxu0 %v3161
      %v3245 = vpop.f32.mrf.mxu0
      %v3246 = vadd.f32 0.0, %v3245
      %v3247 = vpop.f32.mrf.mxu0
      %v3248 = vadd.f32 0.0, %v3247
      %3249 = vmatmul.bf16.gmra.mxu0 %v3164
      %v3250 = vpop.f32.mrf.mxu0
      %v3251 = vadd.f32 0.0, %v3250
      %v3252 = vpop.f32.mrf.mxu0
      %v3253 = vadd.f32 0.0, %v3252
      %3254 = vdwg.mxu0
      %v3255 = vadd.f32 %v2426, %v3176
      %v3256 = vadd.f32 %v2428, %v3178
      %v3257 = vadd.f32 %v2431, %v3181
      %v3258 = vadd.f32 %v2433, %v3183
      %v3259 = vadd.f32 %v2436, %v3186
      %v3260 = vadd.f32 %v2438, %v3188
      %v3261 = vadd.f32 %v2441, %v3191
      %v3262 = vadd.f32 %v2443, %v3193
      %v3263 = vadd.f32 %v2446, %v3196
      %v3264 = vadd.f32 %v2448, %v3198
      %v3265 = vadd.f32 %v2451, %v3201
      %v3266 = vadd.f32 %v2453, %v3203
      %v3267 = vadd.f32 %v2456, %v3206
      %v3268 = vadd.f32 %v2458, %v3208
      %v3269 = vadd.f32 %v2461, %v3211
      %v3270 = vadd.f32 %v2463, %v3213
      %v3271 = vadd.f32 %v2466, %v3216
      %v3272 = vadd.f32 %v2468, %v3218
      %v3273 = vadd.f32 %v2471, %v3221
      %v3274 = vadd.f32 %v2473, %v3223
      %v3275 = vadd.f32 %v2476, %v3226
      %v3276 = vadd.f32 %v2478, %v3228
      %v3277 = vadd.f32 %v2481, %v3231
      %v3278 = vadd.f32 %v2483, %v3233
      %v3279 = vadd.f32 %v2486, %v3236
      %v3280 = vadd.f32 %v2488, %v3238
      %v3281 = vadd.f32 %v2491, %v3241
      %v3282 = vadd.f32 %v2493, %v3243
      %v3283 = vadd.f32 %v2496, %v3246
      %v3284 = vadd.f32 %v2498, %v3248
      %v3285 = vadd.f32 %v2501, %v3251
      %v3286 = vadd.f32 %v2503, %v3253
      %3287 = vrot.lane.b32.xlu0 %v1002, 104
      %v3288 = vpop.permute.xlu0 %3287
      %3289 = vrot.lane.b32.xlu0 %v1003, 104
      %v3290 = vpop.permute.xlu0 %3289
      %3291 = vrot.lane.b32.xlu0 %v1004, 104
      %v3292 = vpop.permute.xlu0 %3291
      %3293 = vrot.lane.b32.xlu0 %v1005, 104
      %v3294 = vpop.permute.xlu0 %3293
      %3295 = vrot.lane.b32.xlu0 %v1006, 104
      %v3296 = vpop.permute.xlu0 %3295
      %3297 = vrot.lane.b32.xlu0 %v1007, 104
      %v3298 = vpop.permute.xlu0 %3297
      %3299 = vrot.lane.b32.xlu0 %v1008, 104
      %v3300 = vpop.permute.xlu0 %3299
      %3301 = vrot.lane.b32.xlu0 %v1009, 104
      %v3302 = vpop.permute.xlu0 %3301
      %3303 = vrot.lane.b32.xlu0 %v1010, 104
      %v3304 = vpop.permute.xlu0 %3303
      %3305 = vrot.lane.b32.xlu0 %v1011, 104
      %v3306 = vpop.permute.xlu0 %3305
      %3307 = vrot.lane.b32.xlu0 %v1012, 104
      %v3308 = vpop.permute.xlu0 %3307
      %3309 = vrot.lane.b32.xlu0 %v1013, 104
      %v3310 = vpop.permute.xlu0 %3309
      %3311 = vrot.lane.b32.xlu0 %v1014, 104
      %v3312 = vpop.permute.xlu0 %3311
      %3313 = vrot.lane.b32.xlu0 %v1015, 104
      %v3314 = vpop.permute.xlu0 %3313
      %3315 = vrot.lane.b32.xlu0 %v1016, 104
      %v3316 = vpop.permute.xlu0 %3315
      %3317 = vrot.lane.b32.xlu0 %v1017, 104
      %v3318 = vpop.permute.xlu0 %3317
      %3319 = vrot.lane.b32.xlu0 %v1018, 104
      %v3320 = vpop.permute.xlu0 %3319
      %3321 = vrot.lane.b32.xlu0 %v1019, 104
      %v3322 = vpop.permute.xlu0 %3321
      %3323 = vrot.lane.b32.xlu0 %v1020, 104
      %v3324 = vpop.permute.xlu0 %3323
      %3325 = vrot.lane.b32.xlu0 %v1021, 104
      %v3326 = vpop.permute.xlu0 %3325
      %v3328 = vsel %vm1022, %v3288, 0
      %v3331 = vsel %vm1022, %v3290, 0
      %v3334 = vsel %vm1022, %v3292, 0
      %v3337 = vsel %vm1022, %v3294, 0
      %v3340 = vsel %vm1022, %v3296, 0
      %v3343 = vsel %vm1022, %v3298, 0
      %v3346 = vsel %vm1022, %v3300, 0
      %v3349 = vsel %vm1022, %v3302, 0
      %v3352 = vsel %vm1022, %v3304, 0
      %v3355 = vsel %vm1022, %v3306, 0
      %v3358 = vsel %vm1022, %v3308, 0
      %v3361 = vsel %vm1022, %v3310, 0
      %v3364 = vsel %vm1022, %v3312, 0
      %v3367 = vsel %vm1022, %v3314, 0
      %v3370 = vsel %vm1022, %v3316, 0
      %v3373 = vsel %vm1022, %v3318, 0
      %v3376 = vsel %vm1022, %v3320, 0
      %v3379 = vsel %vm1022, %v3322, 0
      %v3382 = vsel %vm1022, %v3324, 0
      %v3385 = vsel %vm1022, %v3326, 0
      %3387 = vmatpush.bf16.xpose.msra.mxu0 0
      %3388 = vmatpush.bf16.xpose.msra.mxu0 0
      %3389 = vmatpush.bf16.xpose.msra.mxu0 0
      %3390 = vmatpush.bf16.xpose.msra.mxu0 0
      %3391 = vmatpush.bf16.xpose.msra.mxu0 %v3385
      %3392 = vmatpush.bf16.xpose.msra.mxu0 %v3382
      %3393 = vmatpush.bf16.xpose.msra.mxu0 %v3379
      %3394 = vmatpush.bf16.xpose.msra.mxu0 %v3376
      %3395 = vmatmul.bf16.gmra.mxu0 %v3328
      %v3396 = vpop.f32.mrf.mxu0
      %v3397 = vadd.f32 0.0, %v3396
      %v3398 = vpop.f32.mrf.mxu0
      %v3399 = vadd.f32 0.0, %v3398
      %3400 = vmatmul.bf16.gmra.mxu0 %v3331
      %v3401 = vpop.f32.mrf.mxu0
      %v3402 = vadd.f32 0.0, %v3401
      %v3403 = vpop.f32.mrf.mxu0
      %v3404 = vadd.f32 0.0, %v3403
      %3405 = vmatmul.bf16.gmra.mxu0 %v3334
      %v3406 = vpop.f32.mrf.mxu0
      %v3407 = vadd.f32 0.0, %v3406
      %v3408 = vpop.f32.mrf.mxu0
      %v3409 = vadd.f32 0.0, %v3408
      %3410 = vmatmul.bf16.gmra.mxu0 %v3337
      %v3411 = vpop.f32.mrf.mxu0
      %v3412 = vadd.f32 0.0, %v3411
      %v3413 = vpop.f32.mrf.mxu0
      %v3414 = vadd.f32 0.0, %v3413
      %3415 = vmatmul.bf16.gmra.mxu0 %v3340
      %v3416 = vpop.f32.mrf.mxu0
      %v3417 = vadd.f32 0.0, %v3416
      %v3418 = vpop.f32.mrf.mxu0
      %v3419 = vadd.f32 0.0, %v3418
      %3420 = vmatmul.bf16.gmra.mxu0 %v3343
      %v3421 = vpop.f32.mrf.mxu0
      %v3422 = vadd.f32 0.0, %v3421
      %v3423 = vpop.f32.mrf.mxu0
      %v3424 = vadd.f32 0.0, %v3423
      %3425 = vmatmul.bf16.gmra.mxu0 %v3346
      %v3426 = vpop.f32.mrf.mxu0
      %v3427 = vadd.f32 0.0, %v3426
      %v3428 = vpop.f32.mrf.mxu0
      %v3429 = vadd.f32 0.0, %v3428
      %3430 = vmatmul.bf16.gmra.mxu0 %v3349
      %v3431 = vpop.f32.mrf.mxu0
      %v3432 = vadd.f32 0.0, %v3431
      %v3433 = vpop.f32.mrf.mxu0
      %v3434 = vadd.f32 0.0, %v3433
      %3435 = vmatmul.bf16.gmra.mxu0 %v3352
      %v3436 = vpop.f32.mrf.mxu0
      %v3437 = vadd.f32 0.0, %v3436
      %v3438 = vpop.f32.mrf.mxu0
      %v3439 = vadd.f32 0.0, %v3438
      %3440 = vmatmul.bf16.gmra.mxu0 %v3355
      %v3441 = vpop.f32.mrf.mxu0
      %v3442 = vadd.f32 0.0, %v3441
      %v3443 = vpop.f32.mrf.mxu0
      %v3444 = vadd.f32 0.0, %v3443
      %3445 = vmatmul.bf16.gmra.mxu0 %v3358
      %v3446 = vpop.f32.mrf.mxu0
      %v3447 = vadd.f32 0.0, %v3446
      %v3448 = vpop.f32.mrf.mxu0
      %v3449 = vadd.f32 0.0, %v3448
      %3450 = vmatmul.bf16.gmra.mxu0 %v3361
      %v3451 = vpop.f32.mrf.mxu0
      %v3452 = vadd.f32 0.0, %v3451
      %v3453 = vpop.f32.mrf.mxu0
      %v3454 = vadd.f32 0.0, %v3453
      %3455 = vmatmul.bf16.gmra.mxu0 %v3364
      %v3456 = vpop.f32.mrf.mxu0
      %v3457 = vadd.f32 0.0, %v3456
      %v3458 = vpop.f32.mrf.mxu0
      %v3459 = vadd.f32 0.0, %v3458
      %3460 = vmatmul.bf16.gmra.mxu0 %v3367
      %v3461 = vpop.f32.mrf.mxu0
      %v3462 = vadd.f32 0.0, %v3461
      %v3463 = vpop.f32.mrf.mxu0
      %v3464 = vadd.f32 0.0, %v3463
      %3465 = vmatmul.bf16.gmra.mxu0 %v3370
      %v3466 = vpop.f32.mrf.mxu0
      %v3467 = vadd.f32 0.0, %v3466
      %v3468 = vpop.f32.mrf.mxu0
      %v3469 = vadd.f32 0.0, %v3468
      %3470 = vmatmul.bf16.gmra.mxu0 %v3373
      %v3471 = vpop.f32.mrf.mxu0
      %v3472 = vadd.f32 0.0, %v3471
      %v3473 = vpop.f32.mrf.mxu0
      %v3474 = vadd.f32 0.0, %v3473
      %3475 = vdwg.mxu0
      %v3476 = vsel %vm1172, %v3397, -inf
      %3477 = vmax.xlane.f32.xlu0 %v3476
      %v3478 = vpop.xlane.xlu0 %3477
      %v3479 = vsel %vm1172, %v3399, -inf
      %3480 = vmax.xlane.f32.xlu0 %v3479
      %v3481 = vpop.xlane.xlu0 %3480
      %v3482 = vsel %vm1172, %v3402, -inf
      %3483 = vmax.xlane.f32.xlu0 %v3482
      %v3484 = vpop.xlane.xlu0 %3483
      %v3485 = vsel %vm1172, %v3404, -inf
      %3486 = vmax.xlane.f32.xlu0 %v3485
      %v3487 = vpop.xlane.xlu0 %3486
      %v3488 = vsel %vm1172, %v3407, -inf
      %3489 = vmax.xlane.f32.xlu0 %v3488
      %v3490 = vpop.xlane.xlu0 %3489
      %v3491 = vsel %vm1172, %v3409, -inf
      %3492 = vmax.xlane.f32.xlu0 %v3491
      %v3493 = vpop.xlane.xlu0 %3492
      %v3494 = vsel %vm1172, %v3412, -inf
      %3495 = vmax.xlane.f32.xlu0 %v3494
      %v3496 = vpop.xlane.xlu0 %3495
      %v3497 = vsel %vm1172, %v3414, -inf
      %3498 = vmax.xlane.f32.xlu0 %v3497
      %v3499 = vpop.xlane.xlu0 %3498
      %v3500 = vsel %vm1172, %v3417, -inf
      %3501 = vmax.xlane.f32.xlu0 %v3500
      %v3502 = vpop.xlane.xlu0 %3501
      %v3503 = vsel %vm1172, %v3419, -inf
      %3504 = vmax.xlane.f32.xlu0 %v3503
      %v3505 = vpop.xlane.xlu0 %3504
      %v3506 = vsel %vm1172, %v3422, -inf
      %3507 = vmax.xlane.f32.xlu0 %v3506
      %v3508 = vpop.xlane.xlu0 %3507
      %v3509 = vsel %vm1172, %v3424, -inf
      %3510 = vmax.xlane.f32.xlu0 %v3509
      %v3511 = vpop.xlane.xlu0 %3510
      %v3512 = vsel %vm1172, %v3427, -inf
      %3513 = vmax.xlane.f32.xlu0 %v3512
      %v3514 = vpop.xlane.xlu0 %3513
      %v3515 = vsel %vm1172, %v3429, -inf
      %3516 = vmax.xlane.f32.xlu0 %v3515
      %v3517 = vpop.xlane.xlu0 %3516
      %v3518 = vsel %vm1172, %v3432, -inf
      %3519 = vmax.xlane.f32.xlu0 %v3518
      %v3520 = vpop.xlane.xlu0 %3519
      %v3521 = vsel %vm1172, %v3434, -inf
      %3522 = vmax.xlane.f32.xlu0 %v3521
      %v3523 = vpop.xlane.xlu0 %3522
      %v3524 = vsel %vm1172, %v3437, -inf
      %3525 = vmax.xlane.f32.xlu0 %v3524
      %v3526 = vpop.xlane.xlu0 %3525
      %v3527 = vsel %vm1172, %v3439, -inf
      %3528 = vmax.xlane.f32.xlu0 %v3527
      %v3529 = vpop.xlane.xlu0 %3528
      %v3530 = vsel %vm1172, %v3442, -inf
      %3531 = vmax.xlane.f32.xlu0 %v3530
      %v3532 = vpop.xlane.xlu0 %3531
      %v3533 = vsel %vm1172, %v3444, -inf
      %3534 = vmax.xlane.f32.xlu0 %v3533
      %v3535 = vpop.xlane.xlu0 %3534
      %v3536 = vsel %vm1172, %v3447, -inf
      %3537 = vmax.xlane.f32.xlu0 %v3536
      %v3538 = vpop.xlane.xlu0 %3537
      %v3539 = vsel %vm1172, %v3449, -inf
      %3540 = vmax.xlane.f32.xlu0 %v3539
      %v3541 = vpop.xlane.xlu0 %3540
      %v3542 = vsel %vm1172, %v3452, -inf
      %3543 = vmax.xlane.f32.xlu0 %v3542
      %v3544 = vpop.xlane.xlu0 %3543
      %v3545 = vsel %vm1172, %v3454, -inf
      %3546 = vmax.xlane.f32.xlu0 %v3545
      %v3547 = vpop.xlane.xlu0 %3546
      %v3548 = vsel %vm1172, %v3457, -inf
      %3549 = vmax.xlane.f32.xlu0 %v3548
      %v3550 = vpop.xlane.xlu0 %3549
      %v3551 = vsel %vm1172, %v3459, -inf
      %3552 = vmax.xlane.f32.xlu0 %v3551
      %v3553 = vpop.xlane.xlu0 %3552
      %v3554 = vsel %vm1172, %v3462, -inf
      %3555 = vmax.xlane.f32.xlu0 %v3554
      %v3556 = vpop.xlane.xlu0 %3555
      %v3557 = vsel %vm1172, %v3464, -inf
      %3558 = vmax.xlane.f32.xlu0 %v3557
      %v3559 = vpop.xlane.xlu0 %3558
      %v3560 = vsel %vm1172, %v3467, -inf
      %3561 = vmax.xlane.f32.xlu0 %v3560
      %v3562 = vpop.xlane.xlu0 %3561
      %v3563 = vsel %vm1172, %v3469, -inf
      %3564 = vmax.xlane.f32.xlu0 %v3563
      %v3565 = vpop.xlane.xlu0 %3564
      %v3566 = vsel %vm1172, %v3472, -inf
      %3567 = vmax.xlane.f32.xlu0 %v3566
      %v3568 = vpop.xlane.xlu0 %3567
      %v3569 = vsel %vm1172, %v3474, -inf
      %3570 = vmax.xlane.f32.xlu0 %v3569
      %v3571 = vpop.xlane.xlu0 %3570
      %v3572 = vsub.f32 %v3397, %v3478
      %v3573 = vsub.f32 %v3399, %v3481
      %v3574 = vsub.f32 %v3402, %v3484
      %v3575 = vsub.f32 %v3404, %v3487
      %v3576 = vsub.f32 %v3407, %v3490
      %v3577 = vsub.f32 %v3409, %v3493
      %v3578 = vsub.f32 %v3412, %v3496
      %v3579 = vsub.f32 %v3414, %v3499
      %v3580 = vsub.f32 %v3417, %v3502
      %v3581 = vsub.f32 %v3419, %v3505
      %v3582 = vsub.f32 %v3422, %v3508
      %v3583 = vsub.f32 %v3424, %v3511
      %v3584 = vsub.f32 %v3427, %v3514
      %v3585 = vsub.f32 %v3429, %v3517
      %v3586 = vsub.f32 %v3432, %v3520
      %v3587 = vsub.f32 %v3434, %v3523
      %v3588 = vsub.f32 %v3437, %v3526
      %v3589 = vsub.f32 %v3439, %v3529
      %v3590 = vsub.f32 %v3442, %v3532
      %v3591 = vsub.f32 %v3444, %v3535
      %v3592 = vsub.f32 %v3447, %v3538
      %v3593 = vsub.f32 %v3449, %v3541
      %v3594 = vsub.f32 %v3452, %v3544
      %v3595 = vsub.f32 %v3454, %v3547
      %v3596 = vsub.f32 %v3457, %v3550
      %v3597 = vsub.f32 %v3459, %v3553
      %v3598 = vsub.f32 %v3462, %v3556
      %v3599 = vsub.f32 %v3464, %v3559
      %v3600 = vsub.f32 %v3467, %v3562
      %v3601 = vsub.f32 %v3469, %v3565
      %v3602 = vsub.f32 %v3472, %v3568
      %v3603 = vsub.f32 %v3474, %v3571
      %v3604 = vmul.f32 %v3572, 1.442695
      %v3605 = vpow.pop %v3604
      %v3606 = vmul.f32 %v3573, 1.442695
      %v3607 = vpow.pop %v3606
      %v3608 = vmul.f32 %v3574, 1.442695
      %v3609 = vpow.pop %v3608
      %v3610 = vmul.f32 %v3575, 1.442695
      %v3611 = vpow.pop %v3610
      %v3612 = vmul.f32 %v3576, 1.442695
      %v3613 = vpow.pop %v3612
      %v3614 = vmul.f32 %v3577, 1.442695
      %v3615 = vpow.pop %v3614
      %v3616 = vmul.f32 %v3578, 1.442695
      %v3617 = vpow.pop %v3616
      %v3618 = vmul.f32 %v3579, 1.442695
      %v3619 = vpow.pop %v3618
      %v3620 = vmul.f32 %v3580, 1.442695
      %v3621 = vpow.pop %v3620
      %v3622 = vmul.f32 %v3581, 1.442695
      %v3623 = vpow.pop %v3622
      %v3624 = vmul.f32 %v3582, 1.442695
      %v3625 = vpow.pop %v3624
      %v3626 = vmul.f32 %v3583, 1.442695
      %v3627 = vpow.pop %v3626
      %v3628 = vmul.f32 %v3584, 1.442695
      %v3629 = vpow.pop %v3628
      %v3630 = vmul.f32 %v3585, 1.442695
      %v3631 = vpow.pop %v3630
      %v3632 = vmul.f32 %v3586, 1.442695
      %v3633 = vpow.pop %v3632
      %v3634 = vmul.f32 %v3587, 1.442695
      %v3635 = vpow.pop %v3634
      %v3636 = vmul.f32 %v3588, 1.442695
      %v3637 = vpow.pop %v3636
      %v3638 = vmul.f32 %v3589, 1.442695
      %v3639 = vpow.pop %v3638
      %v3640 = vmul.f32 %v3590, 1.442695
      %v3641 = vpow.pop %v3640
      %v3642 = vmul.f32 %v3591, 1.442695
      %v3643 = vpow.pop %v3642
      %v3644 = vmul.f32 %v3592, 1.442695
      %v3645 = vpow.pop %v3644
      %v3646 = vmul.f32 %v3593, 1.442695
      %v3647 = vpow.pop %v3646
      %v3648 = vmul.f32 %v3594, 1.442695
      %v3649 = vpow.pop %v3648
      %v3650 = vmul.f32 %v3595, 1.442695
      %v3651 = vpow.pop %v3650
      %v3652 = vmul.f32 %v3596, 1.442695
      %v3653 = vpow.pop %v3652
      %v3654 = vmul.f32 %v3597, 1.442695
      %v3655 = vpow.pop %v3654
      %v3656 = vmul.f32 %v3598, 1.442695
      %v3657 = vpow.pop %v3656
      %v3658 = vmul.f32 %v3599, 1.442695
      %v3659 = vpow.pop %v3658
      %v3660 = vmul.f32 %v3600, 1.442695
      %v3661 = vpow.pop %v3660
      %v3662 = vmul.f32 %v3601, 1.442695
      %v3663 = vpow.pop %v3662
      %v3664 = vmul.f32 %v3602, 1.442695
      %v3665 = vpow.pop %v3664
      %v3666 = vmul.f32 %v3603, 1.442695
      %v3667 = vpow.pop %v3666
      %v3668 = vsel %vm1172, %v3605, 0.0
      %3669 = vadd.xlane.f32.xlu0 %v3668
      %v3670 = vpop.xlane.xlu0 %3669
      %v3671 = vsel %vm1172, %v3607, 0.0
      %3672 = vadd.xlane.f32.xlu0 %v3671
      %v3673 = vpop.xlane.xlu0 %3672
      %v3674 = vsel %vm1172, %v3609, 0.0
      %3675 = vadd.xlane.f32.xlu0 %v3674
      %v3676 = vpop.xlane.xlu0 %3675
      %v3677 = vsel %vm1172, %v3611, 0.0
      %3678 = vadd.xlane.f32.xlu0 %v3677
      %v3679 = vpop.xlane.xlu0 %3678
      %v3680 = vsel %vm1172, %v3613, 0.0
      %3681 = vadd.xlane.f32.xlu0 %v3680
      %v3682 = vpop.xlane.xlu0 %3681
      %v3683 = vsel %vm1172, %v3615, 0.0
      %3684 = vadd.xlane.f32.xlu0 %v3683
      %v3685 = vpop.xlane.xlu0 %3684
      %v3686 = vsel %vm1172, %v3617, 0.0
      %3687 = vadd.xlane.f32.xlu0 %v3686
      %v3688 = vpop.xlane.xlu0 %3687
      %v3689 = vsel %vm1172, %v3619, 0.0
      %3690 = vadd.xlane.f32.xlu0 %v3689
      %v3691 = vpop.xlane.xlu0 %3690
      %v3692 = vsel %vm1172, %v3621, 0.0
      %3693 = vadd.xlane.f32.xlu0 %v3692
      %v3694 = vpop.xlane.xlu0 %3693
      %v3695 = vsel %vm1172, %v3623, 0.0
      %3696 = vadd.xlane.f32.xlu0 %v3695
      %v3697 = vpop.xlane.xlu0 %3696
      %v3698 = vsel %vm1172, %v3625, 0.0
      %3699 = vadd.xlane.f32.xlu0 %v3698
      %v3700 = vpop.xlane.xlu0 %3699
      %v3701 = vsel %vm1172, %v3627, 0.0
      %3702 = vadd.xlane.f32.xlu0 %v3701
      %v3703 = vpop.xlane.xlu0 %3702
      %v3704 = vsel %vm1172, %v3629, 0.0
      %3705 = vadd.xlane.f32.xlu0 %v3704
      %v3706 = vpop.xlane.xlu0 %3705
      %v3707 = vsel %vm1172, %v3631, 0.0
      %3708 = vadd.xlane.f32.xlu0 %v3707
      %v3709 = vpop.xlane.xlu0 %3708
      %v3710 = vsel %vm1172, %v3633, 0.0
      %3711 = vadd.xlane.f32.xlu0 %v3710
      %v3712 = vpop.xlane.xlu0 %3711
      %v3713 = vsel %vm1172, %v3635, 0.0
      %3714 = vadd.xlane.f32.xlu0 %v3713
      %v3715 = vpop.xlane.xlu0 %3714
      %v3716 = vsel %vm1172, %v3637, 0.0
      %3717 = vadd.xlane.f32.xlu0 %v3716
      %v3718 = vpop.xlane.xlu0 %3717
      %v3719 = vsel %vm1172, %v3639, 0.0
      %3720 = vadd.xlane.f32.xlu0 %v3719
      %v3721 = vpop.xlane.xlu0 %3720
      %v3722 = vsel %vm1172, %v3641, 0.0
      %3723 = vadd.xlane.f32.xlu0 %v3722
      %v3724 = vpop.xlane.xlu0 %3723
      %v3725 = vsel %vm1172, %v3643, 0.0
      %3726 = vadd.xlane.f32.xlu0 %v3725
      %v3727 = vpop.xlane.xlu0 %3726
      %v3728 = vsel %vm1172, %v3645, 0.0
      %3729 = vadd.xlane.f32.xlu0 %v3728
      %v3730 = vpop.xlane.xlu0 %3729
      %v3731 = vsel %vm1172, %v3647, 0.0
      %3732 = vadd.xlane.f32.xlu0 %v3731
      %v3733 = vpop.xlane.xlu0 %3732
      %v3734 = vsel %vm1172, %v3649, 0.0
      %3735 = vadd.xlane.f32.xlu0 %v3734
      %v3736 = vpop.xlane.xlu0 %3735
      %v3737 = vsel %vm1172, %v3651, 0.0
      %3738 = vadd.xlane.f32.xlu0 %v3737
      %v3739 = vpop.xlane.xlu0 %3738
      %v3740 = vsel %vm1172, %v3653, 0.0
      %3741 = vadd.xlane.f32.xlu0 %v3740
      %v3742 = vpop.xlane.xlu0 %3741
      %v3743 = vsel %vm1172, %v3655, 0.0
      %3744 = vadd.xlane.f32.xlu0 %v3743
      %v3745 = vpop.xlane.xlu0 %3744
      %v3746 = vsel %vm1172, %v3657, 0.0
      %3747 = vadd.xlane.f32.xlu0 %v3746
      %v3748 = vpop.xlane.xlu0 %3747
      %v3749 = vsel %vm1172, %v3659, 0.0
      %3750 = vadd.xlane.f32.xlu0 %v3749
      %v3751 = vpop.xlane.xlu0 %3750
      %v3752 = vsel %vm1172, %v3661, 0.0
      %3753 = vadd.xlane.f32.xlu0 %v3752
      %v3754 = vpop.xlane.xlu0 %3753
      %v3755 = vsel %vm1172, %v3663, 0.0
      %3756 = vadd.xlane.f32.xlu0 %v3755
      %v3757 = vpop.xlane.xlu0 %3756
      %v3758 = vsel %vm1172, %v3665, 0.0
      %3759 = vadd.xlane.f32.xlu0 %v3758
      %v3760 = vpop.xlane.xlu0 %3759
      %v3761 = vsel %vm1172, %v3667, 0.0
      %3762 = vadd.xlane.f32.xlu0 %v3761
      %v3763 = vpop.xlane.xlu0 %3762
      %v3764 = vrcp.pop %v3670
      %v3765 = vrcp.pop %v3673
      %v3766 = vrcp.pop %v3676
      %v3767 = vrcp.pop %v3679
      %v3768 = vrcp.pop %v3682
      %v3769 = vrcp.pop %v3685
      %v3770 = vrcp.pop %v3688
      %v3771 = vrcp.pop %v3691
      %v3772 = vrcp.pop %v3694
      %v3773 = vrcp.pop %v3697
      %v3774 = vrcp.pop %v3700
      %v3775 = vrcp.pop %v3703
      %v3776 = vrcp.pop %v3706
      %v3777 = vrcp.pop %v3709
      %v3778 = vrcp.pop %v3712
      %v3779 = vrcp.pop %v3715
      %v3780 = vrcp.pop %v3718
      %v3781 = vrcp.pop %v3721
      %v3782 = vrcp.pop %v3724
      %v3783 = vrcp.pop %v3727
      %v3784 = vrcp.pop %v3730
      %v3785 = vrcp.pop %v3733
      %v3786 = vrcp.pop %v3736
      %v3787 = vrcp.pop %v3739
      %v3788 = vrcp.pop %v3742
      %v3789 = vrcp.pop %v3745
      %v3790 = vrcp.pop %v3748
      %v3791 = vrcp.pop %v3751
      %v3792 = vrcp.pop %v3754
      %v3793 = vrcp.pop %v3757
      %v3794 = vrcp.pop %v3760
      %v3795 = vrcp.pop %v3763
      %v3796 = vmul.f32 %v3605, %v3764
      %v3797 = vmul.f32 %v3607, %v3765
      %v3798 = vmul.f32 %v3609, %v3766
      %v3799 = vmul.f32 %v3611, %v3767
      %v3800 = vmul.f32 %v3613, %v3768
      %v3801 = vmul.f32 %v3615, %v3769
      %v3802 = vmul.f32 %v3617, %v3770
      %v3803 = vmul.f32 %v3619, %v3771
      %v3804 = vmul.f32 %v3621, %v3772
      %v3805 = vmul.f32 %v3623, %v3773
      %v3806 = vmul.f32 %v3625, %v3774
      %v3807 = vmul.f32 %v3627, %v3775
      %v3808 = vmul.f32 %v3629, %v3776
      %v3809 = vmul.f32 %v3631, %v3777
      %v3810 = vmul.f32 %v3633, %v3778
      %v3811 = vmul.f32 %v3635, %v3779
      %v3812 = vmul.f32 %v3637, %v3780
      %v3813 = vmul.f32 %v3639, %v3781
      %v3814 = vmul.f32 %v3641, %v3782
      %v3815 = vmul.f32 %v3643, %v3783
      %v3816 = vmul.f32 %v3645, %v3784
      %v3817 = vmul.f32 %v3647, %v3785
      %v3818 = vmul.f32 %v3649, %v3786
      %v3819 = vmul.f32 %v3651, %v3787
      %v3820 = vmul.f32 %v3653, %v3788
      %v3821 = vmul.f32 %v3655, %v3789
      %v3822 = vmul.f32 %v3657, %v3790
      %v3823 = vmul.f32 %v3659, %v3791
      %v3824 = vmul.f32 %v3661, %v3792
      %v3825 = vmul.f32 %v3663, %v3793
      %v3826 = vmul.f32 %v3665, %v3794
      %v3827 = vmul.f32 %v3667, %v3795
      %3828 = vrot.lane.b32.xlu0 %v1018, 72
      %v3829 = vpop.permute.xlu0 %3828
      %3830 = vrot.lane.b32.xlu0 %v1019, 72
      %v3831 = vpop.permute.xlu0 %3830
      %3832 = vrot.lane.b32.xlu0 %v1020, 72
      %v3833 = vpop.permute.xlu0 %3832
      %3834 = vrot.lane.b32.xlu0 %v1021, 72
      %v3835 = vpop.permute.xlu0 %3834
      %v3837 = vsel %vm1022, %v3829, 0
      %v3840 = vsel %vm1022, %v3831, 0
      %v3843 = vsel %vm1022, %v3833, 0
      %v3846 = vsel %vm1022, %v3835, 0
      %v3849 = vsel %vm1549, %v1001, 0
      %3851 = vmatpush.bf16.msra.mxu0 0
      %3852 = vmatpush.bf16.msra.mxu0 0
      %3853 = vmatpush.bf16.msra.mxu0 0
      %3854 = vmatpush.bf16.msra.mxu0 0
      %3855 = vmatpush.bf16.msra.mxu0 0
      %3856 = vmatpush.bf16.msra.mxu0 0
      %3857 = vmatpush.bf16.msra.mxu0 0
      %3858 = vmatpush.bf16.msra.mxu0 %v3849
      %3859 = vmatmul.bf16.gmra.mxu0 %v3837
      %v3860 = vpop.f32.mrf.mxu0
      %v3861 = vadd.f32 0.0, %v3860
      %v3862 = vpop.f32.mrf.mxu0
      %v3863 = vadd.f32 0.0, %v3862
      %3864 = vmatmul.bf16.gmra.mxu0 %v3840
      %v3865 = vpop.f32.mrf.mxu0
      %v3866 = vadd.f32 0.0, %v3865
      %v3867 = vpop.f32.mrf.mxu0
      %v3868 = vadd.f32 0.0, %v3867
      %3869 = vmatmul.bf16.gmra.mxu0 %v3843
      %v3870 = vpop.f32.mrf.mxu0
      %v3871 = vadd.f32 0.0, %v3870
      %v3872 = vpop.f32.mrf.mxu0
      %v3873 = vadd.f32 0.0, %v3872
      %3874 = vmatmul.bf16.gmra.mxu0 %v3846
      %v3875 = vpop.f32.mrf.mxu0
      %v3876 = vadd.f32 0.0, %v3875
      %v3877 = vpop.f32.mrf.mxu0
      %v3878 = vadd.f32 0.0, %v3877
      %3879 = vdwg.mxu0
      %v3880 = vpack.c.bf16 %v3797, %v3796
      %v3881 = vpack.c.bf16 %v3799, %v3798
      %v3882 = vpack.c.bf16 %v3801, %v3800
      %v3883 = vpack.c.bf16 %v3803, %v3802
      %v3884 = vpack.c.bf16 %v3805, %v3804
      %v3885 = vpack.c.bf16 %v3807, %v3806
      %v3886 = vpack.c.bf16 %v3809, %v3808
      %v3887 = vpack.c.bf16 %v3811, %v3810
      %v3888 = vpack.c.bf16 %v3813, %v3812
      %v3889 = vpack.c.bf16 %v3815, %v3814
      %v3890 = vpack.c.bf16 %v3817, %v3816
      %v3891 = vpack.c.bf16 %v3819, %v3818
      %v3892 = vpack.c.bf16 %v3821, %v3820
      %v3893 = vpack.c.bf16 %v3823, %v3822
      %v3894 = vpack.c.bf16 %v3825, %v3824
      %v3895 = vpack.c.bf16 %v3827, %v3826
      %v3896 = vpack.c.bf16 %v3863, %v3861
      %v3897 = vpack.c.bf16 %v3868, %v3866
      %v3898 = vpack.c.bf16 %v3873, %v3871
      %v3899 = vpack.c.bf16 %v3878, %v3876
      %v3901 = vsel %vm1172, %v3880, 0
      %v3904 = vsel %vm1172, %v3881, 0
      %v3907 = vsel %vm1172, %v3882, 0
      %v3910 = vsel %vm1172, %v3883, 0
      %v3913 = vsel %vm1172, %v3884, 0
      %v3916 = vsel %vm1172, %v3885, 0
      %v3919 = vsel %vm1172, %v3886, 0
      %v3922 = vsel %vm1172, %v3887, 0
      %v3925 = vsel %vm1172, %v3888, 0
      %v3928 = vsel %vm1172, %v3889, 0
      %v3931 = vsel %vm1172, %v3890, 0
      %v3934 = vsel %vm1172, %v3891, 0
      %v3937 = vsel %vm1172, %v3892, 0
      %v3940 = vsel %vm1172, %v3893, 0
      %v3943 = vsel %vm1172, %v3894, 0
      %v3946 = vsel %vm1172, %v3895, 0
      %3948 = vmatpush.bf16.msra.mxu0 0
      %3949 = vmatpush.bf16.msra.mxu0 0
      %3950 = vmatpush.bf16.msra.mxu0 0
      %3951 = vmatpush.bf16.msra.mxu0 0
      %3952 = vmatpush.bf16.msra.mxu0 %v3899
      %3953 = vmatpush.bf16.msra.mxu0 %v3898
      %3954 = vmatpush.bf16.msra.mxu0 %v3897
      %3955 = vmatpush.bf16.msra.mxu0 %v3896
      %3956 = vmatmul.bf16.gmra.mxu0 %v3901
      %v3957 = vpop.f32.mrf.mxu0
      %v3958 = vadd.f32 0.0, %v3957
      %v3959 = vpop.f32.mrf.mxu0
      %v3960 = vadd.f32 0.0, %v3959
      %3961 = vmatmul.bf16.gmra.mxu0 %v3904
      %v3962 = vpop.f32.mrf.mxu0
      %v3963 = vadd.f32 0.0, %v3962
      %v3964 = vpop.f32.mrf.mxu0
      %v3965 = vadd.f32 0.0, %v3964
      %3966 = vmatmul.bf16.gmra.mxu0 %v3907
      %v3967 = vpop.f32.mrf.mxu0
      %v3968 = vadd.f32 0.0, %v3967
      %v3969 = vpop.f32.mrf.mxu0
      %v3970 = vadd.f32 0.0, %v3969
      %3971 = vmatmul.bf16.gmra.mxu0 %v3910
      %v3972 = vpop.f32.mrf.mxu0
      %v3973 = vadd.f32 0.0, %v3972
      %v3974 = vpop.f32.mrf.mxu0
      %v3975 = vadd.f32 0.0, %v3974
      %3976 = vmatmul.bf16.gmra.mxu0 %v3913
      %v3977 = vpop.f32.mrf.mxu0
      %v3978 = vadd.f32 0.0, %v3977
      %v3979 = vpop.f32.mrf.mxu0
      %v3980 = vadd.f32 0.0, %v3979
      %3981 = vmatmul.bf16.gmra.mxu0 %v3916
      %v3982 = vpop.f32.mrf.mxu0
      %v3983 = vadd.f32 0.0, %v3982
      %v3984 = vpop.f32.mrf.mxu0
      %v3985 = vadd.f32 0.0, %v3984
      %3986 = vmatmul.bf16.gmra.mxu0 %v3919
      %v3987 = vpop.f32.mrf.mxu0
      %v3988 = vadd.f32 0.0, %v3987
      %v3989 = vpop.f32.mrf.mxu0
      %v3990 = vadd.f32 0.0, %v3989
      %3991 = vmatmul.bf16.gmra.mxu0 %v3922
      %v3992 = vpop.f32.mrf.mxu0
      %v3993 = vadd.f32 0.0, %v3992
      %v3994 = vpop.f32.mrf.mxu0
      %v3995 = vadd.f32 0.0, %v3994
      %3996 = vmatmul.bf16.gmra.mxu0 %v3925
      %v3997 = vpop.f32.mrf.mxu0
      %v3998 = vadd.f32 0.0, %v3997
      %v3999 = vpop.f32.mrf.mxu0
      %v4000 = vadd.f32 0.0, %v3999
      %4001 = vmatmul.bf16.gmra.mxu0 %v3928
      %v4002 = vpop.f32.mrf.mxu0
      %v4003 = vadd.f32 0.0, %v4002
      %v4004 = vpop.f32.mrf.mxu0
      %v4005 = vadd.f32 0.0, %v4004
      %4006 = vmatmul.bf16.gmra.mxu0 %v3931
      %v4007 = vpop.f32.mrf.mxu0
      %v4008 = vadd.f32 0.0, %v4007
      %v4009 = vpop.f32.mrf.mxu0
      %v4010 = vadd.f32 0.0, %v4009
      %4011 = vmatmul.bf16.gmra.mxu0 %v3934
      %v4012 = vpop.f32.mrf.mxu0
      %v4013 = vadd.f32 0.0, %v4012
      %v4014 = vpop.f32.mrf.mxu0
      %v4015 = vadd.f32 0.0, %v4014
      %4016 = vmatmul.bf16.gmra.mxu0 %v3937
      %v4017 = vpop.f32.mrf.mxu0
      %v4018 = vadd.f32 0.0, %v4017
      %v4019 = vpop.f32.mrf.mxu0
      %v4020 = vadd.f32 0.0, %v4019
      %4021 = vmatmul.bf16.gmra.mxu0 %v3940
      %v4022 = vpop.f32.mrf.mxu0
      %v4023 = vadd.f32 0.0, %v4022
      %v4024 = vpop.f32.mrf.mxu0
      %v4025 = vadd.f32 0.0, %v4024
      %4026 = vmatmul.bf16.gmra.mxu0 %v3943
      %v4027 = vpop.f32.mrf.mxu0
      %v4028 = vadd.f32 0.0, %v4027
      %v4029 = vpop.f32.mrf.mxu0
      %v4030 = vadd.f32 0.0, %v4029
      %4031 = vmatmul.bf16.gmra.mxu0 %v3946
      %v4032 = vpop.f32.mrf.mxu0
      %v4033 = vadd.f32 0.0, %v4032
      %v4034 = vpop.f32.mrf.mxu0
      %v4035 = vadd.f32 0.0, %v4034
      %4036 = vdwg.mxu0
      %v4037 = vadd.f32 %v3255, %v3958
      %v4038 = vadd.f32 %v3256, %v3960
      %v4039 = vadd.f32 %v3257, %v3963
      %v4040 = vadd.f32 %v3258, %v3965
      %v4041 = vadd.f32 %v3259, %v3968
      %v4042 = vadd.f32 %v3260, %v3970
      %v4043 = vadd.f32 %v3261, %v3973
      %v4044 = vadd.f32 %v3262, %v3975
      %v4045 = vadd.f32 %v3263, %v3978
      %v4046 = vadd.f32 %v3264, %v3980
      %v4047 = vadd.f32 %v3265, %v3983
      %v4048 = vadd.f32 %v3266, %v3985
      %v4049 = vadd.f32 %v3267, %v3988
      %v4050 = vadd.f32 %v3268, %v3990
      %v4051 = vadd.f32 %v3269, %v3993
      %v4052 = vadd.f32 %v3270, %v3995
      %v4053 = vadd.f32 %v3271, %v3998
      %v4054 = vadd.f32 %v3272, %v4000
      %v4055 = vadd.f32 %v3273, %v4003
      %v4056 = vadd.f32 %v3274, %v4005
      %v4057 = vadd.f32 %v3275, %v4008
      %v4058 = vadd.f32 %v3276, %v4010
      %v4059 = vadd.f32 %v3277, %v4013
      %v4060 = vadd.f32 %v3278, %v4015
      %v4061 = vadd.f32 %v3279, %v4018
      %v4062 = vadd.f32 %v3280, %v4020
      %v4063 = vadd.f32 %v3281, %v4023
      %v4064 = vadd.f32 %v3282, %v4025
      %v4065 = vadd.f32 %v3283, %v4028
      %v4066 = vadd.f32 %v3284, %v4030
      %v4067 = vadd.f32 %v3285, %v4033
      %v4068 = vadd.f32 %v3286, %v4035
      %v4069 = vld [vmem:[%s11] sm:$0x1]
      %v4071 = vperm.slane %v4069, 0
      %v4073 = vadd.f32 %v4037, %v4071
      %v4074 = vadd.f32 %v4038, %v4071
      %v4075 = vadd.f32 %v4039, %v4071
      %v4076 = vadd.f32 %v4040, %v4071
      %v4077 = vadd.f32 %v4041, %v4071
      %v4078 = vadd.f32 %v4042, %v4071
      %v4079 = vadd.f32 %v4043, %v4071
      %v4080 = vadd.f32 %v4044, %v4071
      %v4081 = vadd.f32 %v4045, %v4071
      %v4082 = vadd.f32 %v4046, %v4071
      %v4083 = vadd.f32 %v4047, %v4071
      %v4084 = vadd.f32 %v4048, %v4071
      %v4085 = vadd.f32 %v4049, %v4071
      %v4086 = vadd.f32 %v4050, %v4071
      %v4087 = vadd.f32 %v4051, %v4071
      %v4088 = vadd.f32 %v4052, %v4071
      %v4089 = vadd.f32 %v4053, %v4071
      %v4090 = vadd.f32 %v4054, %v4071
      %v4091 = vadd.f32 %v4055, %v4071
      %v4092 = vadd.f32 %v4056, %v4071
      %v4093 = vadd.f32 %v4057, %v4071
      %v4094 = vadd.f32 %v4058, %v4071
      %v4095 = vadd.f32 %v4059, %v4071
      %v4096 = vadd.f32 %v4060, %v4071
      %v4097 = vadd.f32 %v4061, %v4071
      %v4098 = vadd.f32 %v4062, %v4071
      %v4099 = vadd.f32 %v4063, %v4071
      %v4100 = vadd.f32 %v4064, %v4071
      %v4101 = vadd.f32 %v4065, %v4071
      %v4102 = vadd.f32 %v4066, %v4071
      %v4103 = vadd.f32 %v4067, %v4071
      %v4104 = vadd.f32 %v4068, %v4071
      %4105 = vst.msk [vmem:[%s433] sm:$0xff] %vm501, %v4073
      %4106 = vst.msk [vmem:[%s433 + $0x8] sm:$0xff] %vm501, %v4074
      %4107 = vst.msk [vmem:[%s433 + $0x10] sm:$0xff] %vm501, %v4075
      %4108 = vst.msk [vmem:[%s433 + $0x18] sm:$0xff] %vm501, %v4076
      %4109 = vst.msk [vmem:[%s433 + $0x20] sm:$0xff] %vm501, %v4077
      %4110 = vst.msk [vmem:[%s433 + $0x28] sm:$0xff] %vm501, %v4078
      %4111 = vst.msk [vmem:[%s433 + $0x30] sm:$0xff] %vm501, %v4079
      %4112 = vst.msk [vmem:[%s433 + $0x38] sm:$0xff] %vm501, %v4080
      %4113 = vst.msk [vmem:[%s433 + $0x40] sm:$0xff] %vm501, %v4081
      %4114 = vst.msk [vmem:[%s433 + $0x48] sm:$0xff] %vm501, %v4082
      %4115 = vst.msk [vmem:[%s433 + $0x50] sm:$0xff] %vm501, %v4083
      %4116 = vst.msk [vmem:[%s433 + $0x58] sm:$0xff] %vm501, %v4084
      %4117 = vst.msk [vmem:[%s433 + $0x60] sm:$0xff] %vm501, %v4085
      %4118 = vst.msk [vmem:[%s433 + $0x68] sm:$0xff] %vm501, %v4086
      %4119 = vst.msk [vmem:[%s433 + $0x70] sm:$0xff] %vm501, %v4087
      %4120 = vst.msk [vmem:[%s433 + $0x78] sm:$0xff] %vm501, %v4088
      %4121 = vst.msk [vmem:[%s433 + $0x80] sm:$0xff] %vm501, %v4089
      %4122 = vst.msk [vmem:[%s433 + $0x88] sm:$0xff] %vm501, %v4090
      %4123 = vst.msk [vmem:[%s433 + $0x90] sm:$0xff] %vm501, %v4091
      %4124 = vst.msk [vmem:[%s433 + $0x98] sm:$0xff] %vm501, %v4092
      %4125 = vst.msk [vmem:[%s433 + $0xa0] sm:$0xff] %vm501, %v4093
      %4126 = vst.msk [vmem:[%s433 + $0xa8] sm:$0xff] %vm501, %v4094
      %4127 = vst.msk [vmem:[%s433 + $0xb0] sm:$0xff] %vm501, %v4095
      %4128 = vst.msk [vmem:[%s433 + $0xb8] sm:$0xff] %vm501, %v4096
      %4129 = vst.msk [vmem:[%s433 + $0xc0] sm:$0xff] %vm501, %v4097
      %4130 = vst.msk [vmem:[%s433 + $0xc8] sm:$0xff] %vm501, %v4098
      %4131 = vst.msk [vmem:[%s433 + $0xd0] sm:$0xff] %vm501, %v4099
      %4132 = vst.msk [vmem:[%s433 + $0xd8] sm:$0xff] %vm501, %v4100
      %4133 = vst.msk [vmem:[%s433 + $0xe0] sm:$0xff] %vm501, %v4101
      %4134 = vst.msk [vmem:[%s433 + $0xe8] sm:$0xff] %vm501, %v4102
      %4135 = vst.msk [vmem:[%s433 + $0xf0] sm:$0xff] %vm501, %v4103
      %4136 = vst.msk [vmem:[%s433 + $0xf8] sm:$0xff] %vm501, %v4104
      %p4137 = scmp.lt.s32.totalorder %s23, 1
      %s4138 = scalar_select %p4137, %s23, 1
      %s4139 = smul.addr %s4138, 32
      %s4140 = smul.addr %s4139, 8
      %s4141 = scalar_lea.vmem %s12, %s4140
      // Predicated region
      $region69: #{tpu_custom_call.1} parent=67 // pred_check
        %p4142 = pneg %p303
      $region70: #{tpu_custom_call.1} parent=67 // pred_check_branch
        %4144 = sbr.rel (%p4142) target = $region72
      $region71: #{tpu_custom_call.1} parent=67 // pred_region
        _
      $region72: #{tpu_custom_call.1} parent=67 // pred_fallthru
        _
    $region68: #{tpu_custom_call.1} parent=5 // pred_fallthru
      _
    %p4145 = scmp.le.s32.totalorder 2, %s18
    // Predicated region
    $region73: #{tpu_custom_call.1} parent=5 // pred_check
      %p4146 = pneg %p4145
    $region74: #{tpu_custom_call.1} parent=5 // pred_check_branch
      %4148 = sbr.rel (%p4146) target = $region76
    $region75: #{tpu_custom_call.1} parent=5 // pred_region
      %s4149 = ssub.s32 %s18, 2
      // Predicated region
      $region77: #{tpu_custom_call.1} parent=75 // pred_check
        %p4150 = pneg %p309
      $region78: #{tpu_custom_call.1} parent=75 // pred_check_branch
        %4152 = sbr.rel (%p4150) target = $region80
      $region79: #{tpu_custom_call.1} parent=75 // pred_region
        %p4153 = scmp.lt.s32.totalorder %s24, 1
        %s4154 = scalar_select %p4153, %s24, 1
        %s4155 = smul.addr %s4154, 32
        %s4156 = smul.addr %s4155, 8
        %s4157 = scalar_lea.vmem %s12, %s4156
      $region80: #{tpu_custom_call.1} parent=75 // pred_fallthru
        _
    $region76: #{tpu_custom_call.1} parent=5 // pred_fallthru
      _
  $region6: #{tpu_custom_call.1} parent=0 // loop_footer
    %s22 = sadd.s32 1, %s18
  $region7: #{tpu_custom_call.1} parent=0 // loop_footer_branch
    %17 = sbr.rel target = $region3
  $region8: #{tpu_custom_call.1} parent=0 // loop_exit
    _

</llo_original>
